<compile_context>
chip_gen: v7x
topology: tpu7x:2x2x1
jax: 0.10.0
libtpu: 0.0.40
codegen_flags: <defaults>
</compile_context>

<pallas_src>
import functools
import math

import jax
import jax.numpy as jnp
from jax import lax
from jax.experimental import pallas as pl
from jax.experimental.pallas import tpu as pltpu


# MXU-native operand dtype; all accumulation / normalization math stays f32.
COMPUTE_DTYPE = jnp.bfloat16
_LN_EPS = 1e-5
_ROW_TILE = 256          # rows per grid step (bump to 512 on v5e for small weights)
_COL_TILE = 512          # max output-column tile for linears / FFN / classifier
_VMEM_LIMIT = 48 * 1024 * 1024   # > 16/32 MiB scoped defaults, < physical everywhere


def _row_tiles(n):
    if n <= _ROW_TILE:
        return n, 1
    return _ROW_TILE, pl.cdiv(n, _ROW_TILE)


def _col_tiles(dout, max_tile=_COL_TILE):
    """Column tile for output-column grid axes (multiple of 128 when tiled)."""
    if dout <= max_tile:
        return dout, 1
    for t in (512, 256, 128):
        if dout % t == 0:
            return t, dout // t
    return dout, 1


def _cparams(sem):
    return pltpu.CompilerParams(dimension_semantics=sem,
                                vmem_limit_bytes=_VMEM_LIMIT)


def _round_up(x, m):
    return ((x + m - 1) // m) * m


# ----------------------------------------------------------------------------
# Pallas kernels
# ----------------------------------------------------------------------------
def _linear_kernel(x_ref, w_ref, b_ref, o_ref):
    # o = x @ w + b ; bf16 operands, f32 accumulation. Column-tiled output.
    acc = jnp.dot(x_ref[...], w_ref[...], preferred_element_type=jnp.float32)
    o_ref[...] = (acc + b_ref[...]).astype(o_ref.dtype)


def _proj_add_ln_kernel(x_ref, r_ref, w_ref, b_ref, g_ref, be_ref, o_ref):
    # o = LayerNorm(residual + (x @ w + b)) * gamma + beta
    y = jnp.dot(x_ref[...], w_ref[...], preferred_element_type=jnp.float32) + b_ref[...]
    z = y + r_ref[...].astype(jnp.float32)
    mu = jnp.mean(z, axis=-1, keepdims=True)
    var = jnp.mean((z - mu) * (z - mu), axis=-1, keepdims=True)
    zn = (z - mu) * lax.rsqrt(var + _LN_EPS)
    o_ref[...] = (zn * g_ref[...] + be_ref[...]).astype(o_ref.dtype)


def _ffn_add_ln_kernel(x_ref, w1_ref, b1_ref, w2_ref, b2_ref, g_ref, be_ref,
                       o_ref, acc_ref):
    # o = LayerNorm(x + relu(x @ w1 + b1) @ w2 + b2) * gamma + beta
    # F axis is a grid axis ("arbitrary"): only a (tm, tf) slab of the ReLU
    # intermediate is ever live; second matmul accumulates into VMEM f32.
    f = pl.program_id(1)

    @pl.when(f == 0)
    def _():
        acc_ref[...] = jnp.zeros_like(acc_ref)

    x = x_ref[...]
    h = jnp.dot(x, w1_ref[...], preferred_element_type=jnp.float32) + b1_ref[...]
    h = jnp.maximum(h, 0.0)
    acc_ref[...] += jnp.dot(h.astype(w2_ref.dtype), w2_ref[...],
                            preferred_element_type=jnp.float32)

    @pl.when(f == pl.num_programs(1) - 1)
    def _():
        z = acc_ref[...] + b2_ref[...] + x.astype(jnp.float32)
        mu = jnp.mean(z, axis=-1, keepdims=True)
        var = jnp.mean((z - mu) * (z - mu), axis=-1, keepdims=True)
        zn = (z - mu) * lax.rsqrt(var + _LN_EPS)
        o_ref[...] = (zn * g_ref[...] + be_ref[...]).astype(o_ref.dtype)


def _attend(q, k, v, bias):
    """q:(H,Sq,dh) k,v:(H,Sk,dh) bias:(Sq,Sk) f32 additive or None -> (H,Sq,dh) f32."""
    scale = jnp.float32(1.0 / math.sqrt(q.shape[-1]))
    s = jnp.einsum('hqd,hkd->hqk', q, k,
                   preferred_element_type=jnp.float32) * scale
    if bias is not None:
        s = s + bias                                   # broadcast over heads
    m = jnp.max(s, axis=-1, keepdims=True)
    e = jnp.exp(s - m)
    l = jnp.sum(e, axis=-1, keepdims=True)
    # Normalize AFTER the PV matmul: Sq*dh multiplies instead of Sq*Sk, and one
    # fewer (Sq,Sk) f32 temporary live across the MXU feed.
    o = jnp.einsum('hqk,hkd->hqd', e.astype(v.dtype), v,
                   preferred_element_type=jnp.float32)
    return o * pl.reciprocal(l, approx=True)           # EUP slot, ~free


# TODO(synk): for long sequences (Sq*Sk f32 scores > a few MiB per head-group)
#             switch to an online-softmax (flash) formulation with a KV-block
#             grid axis + in-kernel iota-based causal mask to cap VMEM.
def _self_attn_bias_kernel(n_head, qkv_ref, bias_ref, o_ref):
    h = n_head
    qkv = jnp.swapaxes(qkv_ref[...], 0, 1)             # (3H, S, dh), in-VMEM
    o = _attend(qkv[:h], qkv[h:2 * h], qkv[2 * h:], bias_ref[...])
    o_ref[...] = jnp.swapaxes(o, 0, 1).astype(o_ref.dtype)   # (S, H, dh)


def _self_attn_nobias_kernel(n_head, qkv_ref, o_ref):
    h = n_head
    qkv = jnp.swapaxes(qkv_ref[...], 0, 1)
    o = _attend(qkv[:h], qkv[h:2 * h], qkv[2 * h:], None)
    o_ref[...] = jnp.swapaxes(o, 0, 1).astype(o_ref.dtype)


def _cross_attn_kernel(n_head, q_ref, kv_ref, o_ref):
    h = n_head
    q = jnp.swapaxes(q_ref[...], 0, 1)                 # (H, Sq, dh)
    kv = jnp.swapaxes(kv_ref[...], 0, 1)               # (2H, Sk, dh)
    o = _attend(q, kv[:h], kv[h:], None)
    o_ref[...] = jnp.swapaxes(o, 0, 1).astype(o_ref.dtype)


# ----------------------------------------------------------------------------
# Pallas wrappers
# ----------------------------------------------------------------------------
def linear_pallas(x, w, b, out_dtype=None):
    N, Din = x.shape
    Dout = w.shape[1]
    out_dtype = out_dtype or x.dtype
    tm, gm = _row_tiles(N)
    tn, gn = _col_tiles(Dout)
    return pl.pallas_call(
        _linear_kernel,
        out_shape=jax.ShapeDtypeStruct((N, Dout), out_dtype),
        grid=(gm, gn),
        in_specs=[
            pl.BlockSpec((tm, Din), lambda i, j: (i, 0)),
            pl.BlockSpec((Din, tn), lambda i, j: (0, j)),
            pl.BlockSpec((1, tn), lambda i, j: (0, j)),
        ],
        out_specs=pl.BlockSpec((tm, tn), lambda i, j: (i, j)),
        compiler_params=_cparams(("parallel", "parallel")),
    )(x, w, b.reshape(1, Dout))


def proj_add_ln_pallas(x, res, w, b, gamma, beta):
    N, Din = x.shape
    Dout = w.shape[1]
    tm, gm = _row_tiles(N)
    return pl.pallas_call(
        _proj_add_ln_kernel,
        out_shape=jax.ShapeDtypeStruct((N, Dout), res.dtype),
        grid=(gm,),
        in_specs=[
            pl.BlockSpec((tm, Din), lambda i: (i, 0)),
            pl.BlockSpec((tm, Dout), lambda i: (i, 0)),
            pl.BlockSpec((Din, Dout), lambda i: (0, 0)),   # resident weight
            pl.BlockSpec((1, Dout), lambda i: (0, 0)),
            pl.BlockSpec((1, Dout), lambda i: (0, 0)),
            pl.BlockSpec((1, Dout), lambda i: (0, 0)),
        ],
        out_specs=pl.BlockSpec((tm, Dout), lambda i: (i, 0)),
        compiler_params=_cparams(("parallel",)),
    )(x, res, w, b.reshape(1, Dout), gamma.reshape(1, Dout), beta.reshape(1, Dout))


def ffn_add_ln_pallas(x, w1, b1, w2, b2, gamma, beta):
    N, D = x.shape
    F = w1.shape[1]
    tm, gm = _row_tiles(N)
    tf, gf = _col_tiles(F)
    return pl.pallas_call(
        _ffn_add_ln_kernel,
        out_shape=jax.ShapeDtypeStruct((N, D), x.dtype),
        grid=(gm, gf),
        in_specs=[
            pl.BlockSpec((tm, D), lambda i, f: (i, 0)),     # resident across F
            pl.BlockSpec((D, tf), lambda i, f: (0, f)),
            pl.BlockSpec((1, tf), lambda i, f: (0, f)),
            pl.BlockSpec((tf, D), lambda i, f: (f, 0)),
            pl.BlockSpec((1, D), lambda i, f: (0, 0)),
            pl.BlockSpec((1, D), lambda i, f: (0, 0)),
            pl.BlockSpec((1, D), lambda i, f: (0, 0)),
        ],
        out_specs=pl.BlockSpec((tm, D), lambda i, f: (i, 0)),
        scratch_shapes=[pltpu.VMEM((tm, D), jnp.float32)],
        compiler_params=_cparams(("parallel", "arbitrary")),
    )(x, w1, b1.reshape(1, F), w2, b2.reshape(1, D),
      gamma.reshape(1, D), beta.reshape(1, D))


def self_attention_pallas(qkv, n_head, bias=None):
    # qkv: (B, S, 3H, dh) -> context (B, S, H, dh); all heads per grid step.
    B, S, threeH, dh = qkv.shape
    H = n_head
    in_specs = [pl.BlockSpec((None, S, threeH, dh), lambda b: (b, 0, 0, 0))]
    args = [qkv]
    if bias is not None:
        in_specs.append(pl.BlockSpec((S, S), lambda b: (0, 0)))  # DMA'd once
        args.append(bias)
        kern = functools.partial(_self_attn_bias_kernel, H)
    else:
        kern = functools.partial(_self_attn_nobias_kernel, H)
    return pl.pallas_call(
        kern,
        out_shape=jax.ShapeDtypeStruct((B, S, H, dh), qkv.dtype),
        grid=(B,),
        in_specs=in_specs,
        out_specs=pl.BlockSpec((None, S, H, dh), lambda b: (b, 0, 0, 0)),
        compiler_params=_cparams(("parallel",)),
    )(*args)


def cross_attention_pallas(q, kv, n_head):
    # q: (B, Sq, H, dh)   kv: (B, Sk, 2H, dh)   -> (B, Sq, H, dh)
    B, Sq, H, dh = q.shape
    Sk = kv.shape[1]
    return pl.pallas_call(
        functools.partial(_cross_attn_kernel, n_head),
        out_shape=jax.ShapeDtypeStruct((B, Sq, H, dh), q.dtype),
        grid=(B,),
        in_specs=[
            pl.BlockSpec((None, Sq, H, dh), lambda b: (b, 0, 0, 0)),
            pl.BlockSpec((None, Sk, 2 * H, dh), lambda b: (b, 0, 0, 0)),
        ],
        out_specs=pl.BlockSpec((None, Sq, H, dh), lambda b: (b, 0, 0, 0)),
        compiler_params=_cparams(("parallel",)),
    )(q, kv)


# ----------------------------------------------------------------------------
# Model (JAX glue around the Pallas kernels — reshapes only, no transposes)
# ----------------------------------------------------------------------------
def self_mha(p, x, bias, n_head):
    """Heads-merged self-attention context (B*S, D); out-projection is fused
    into the downstream proj_add_ln_pallas kernel."""
    B, S, D = x.shape
    dh = D // n_head
    qkv = linear_pallas(x.reshape(B * S, D), p["wqkv"], p["bqkv"])   # fused QKV
    qkv = qkv.reshape(B, S, 3 * n_head, dh)                          # free view
    ctx = self_attention_pallas(qkv, n_head, bias)                   # (B,S,H,dh)
    return ctx.reshape(B * S, D)                                     # free view


def cross_mha(p, x, mem_kv, n_head):
    B, S, D = x.shape
    dh = D // n_head
    q = linear_pallas(x.reshape(B * S, D), p["wq"], p["bq"])
    q = q.reshape(B, S, n_head, dh)                                  # free view
    ctx = cross_attention_pallas(q, mem_kv, n_head)
    return ctx.reshape(B * S, D)


def encoder_layer(p, src, n_head):
    B, S, D = src.shape
    sa = p["self_attn"]
    heads = self_mha(sa, src, None, n_head)                 # no encoder mask
    x = proj_add_ln_pallas(heads, src.reshape(B * S, D),
                           sa["wo"], sa["bo"], p["ln1_g"], p["ln1_b"])
    x = ffn_add_ln_pallas(x, p["w1"], p["b1"], p["w2"], p["b2"],
                          p["ln2_g"], p["ln2_b"])
    return x.reshape(B, S, D)


def decoder_layer(p, trg, mem_kv, tgt_bias, n_head):
    B, St, D = trg.shape
    sa = p["self_attn"]
    heads = self_mha(sa, trg, tgt_bias, n_head)
    x = proj_add_ln_pallas(heads, trg.reshape(B * St, D),
                           sa["wo"], sa["bo"], p["ln1_g"], p["ln1_b"])
    ca = p["cross_attn"]
    heads = cross_mha(ca, x.reshape(B, St, D), mem_kv, n_head)   # memory_mask=None
    x = proj_add_ln_pallas(heads, x, ca["wo"], ca["bo"], p["ln2_g"], p["ln2_b"])
    x = ffn_add_ln_pallas(x, p["w1"], p["b1"], p["w2"], p["b2"],
                          p["ln3_g"], p["ln3_b"])
    return x.reshape(B, St, D)


def transformer_forward(params, src_ids, trg_ids, mask, *, n_head,
                        num_encoder_layers, num_decoder_layers, trg_vocab):
    # Embedding lookup is gather glue (not a hot matmul path).
    src = jnp.take(params["src_emb"], src_ids, axis=0)   # (B, Ss, D) bf16
    trg = jnp.take(params["trg_emb"], trg_ids, axis=0)   # (B, St, D) bf16
    # dropout1 / dropout2 / layer dropouts: identity (eval mode)

    B, Ss, D = src.shape
    St = trg.shape[1]
    dh = D // n_head

    # Additive target-mask bias precomputed once (0 = attend, -1e9 = masked).
    tgt_bias = None if mask is None else jnp.where(mask > 0, 0.0, -1e9).astype(jnp.float32)

    # Encoder stack (shared layer params, applied N times — same as PyTorch
    # list-multiplication semantics).
    for _ in range(num_encoder_layers):
        src = encoder_layer(params["enc"], src, n_head)

    # Cross-attention K/V of the encoder memory: computed ONCE (weights are
    # shared across decoder layers and memory is fixed), reused in every layer.
    ca = params["dec"]["cross_attn"]
    mem_kv = linear_pallas(src.reshape(B * Ss, D), ca["wkv"], ca["bkv"])
    mem_kv = mem_kv.reshape(B, Ss, 2 * n_head, dh)

    # Decoder stack: layer(trg, src, mask) -> target_mask=mask, memory_mask=None
    for _ in range(num_decoder_layers):
        trg = decoder_layer(params["dec"], trg, mem_kv, tgt_bias, n_head)

    # Classifier: columns padded to a multiple of 128 (lane-dense stores),
    # sliced back to the true vocab afterwards.
    logits = linear_pallas(trg.reshape(B * St, D), params["cls_w"],
                           params["cls_b"], out_dtype=jnp.float32)
    return logits[:, :trg_vocab].reshape(B, St, trg_vocab)


# ----------------------------------------------------------------------------
# Deterministic parameter init
# ----------------------------------------------------------------------------
def _init_linear(key, din, dout):
    kw, kb = jax.random.split(key)
    bound = 1.0 / math.sqrt(din)
    w = jax.random.uniform(kw, (din, dout), jnp.float32, -bound, bound)
    b = jax.random.uniform(kb, (dout,), jnp.float32, -bound, bound)
    return w, b


def _init_mha(key, d_model):
    ks = jax.random.split(key, 4)
    wq, bq = _init_linear(ks[0], d_model, d_model)
    wk, bk = _init_linear(ks[1], d_model, d_model)
    wv, bv = _init_linear(ks[2], d_model, d_model)
    wo, bo = _init_linear(ks[3], d_model, d_model)
    cd = COMPUTE_DTYPE
    return dict(
        # fused q/k/v for self-attention, fused k/v for cross-attention
        wqkv=jnp.concatenate([wq, wk, wv], axis=1).astype(cd),
        bqkv=jnp.concatenate([bq, bk, bv], axis=0),
        wq=wq.astype(cd), bq=bq,
        wkv=jnp.concatenate([wk, wv], axis=1).astype(cd),
        bkv=jnp.concatenate([bk, bv], axis=0),
        wo=wo.astype(cd), bo=bo,
    )


def _init_encoder_layer(key, d_model, d_filter):
    ks = jax.random.split(key, 3)
    w1, b1 = _init_linear(ks[1], d_model, d_filter)
    w2, b2 = _init_linear(ks[2], d_filter, d_model)
    cd = COMPUTE_DTYPE
    return dict(
        self_attn=_init_mha(ks[0], d_model),
        ln1_g=jnp.ones((d_model,), jnp.float32), ln1_b=jnp.zeros((d_model,), jnp.float32),
        w1=w1.astype(cd), b1=b1, w2=w2.astype(cd), b2=b2,
        ln2_g=jnp.ones((d_model,), jnp.float32), ln2_b=jnp.zeros((d_model,), jnp.float32),
    )


def _init_decoder_layer(key, d_model, d_filter):
    ks = jax.random.split(key, 4)
    w1, b1 = _init_linear(ks[2], d_model, d_filter)
    w2, b2 = _init_linear(ks[3], d_filter, d_model)
    cd = COMPUTE_DTYPE
    return dict(
        self_attn=_init_mha(ks[0], d_model),
        cross_attn=_init_mha(ks[1], d_model),
        ln1_g=jnp.ones((d_model,), jnp.float32), ln1_b=jnp.zeros((d_model,), jnp.float32),
        ln2_g=jnp.ones((d_model,), jnp.float32), ln2_b=jnp.zeros((d_model,), jnp.float32),
        w1=w1.astype(cd), b1=b1, w2=w2.astype(cd), b2=b2,
        ln3_g=jnp.ones((d_model,), jnp.float32), ln3_b=jnp.zeros((d_model,), jnp.float32),
    )


def init_transformer(key, src_vocab, trg_vocab, d_model, d_filter):
    ks = jax.random.split(key, 5)
    cls_w, cls_b = _init_linear(ks[4], d_model, trg_vocab)
    # Pad classifier columns to a multiple of 128 for lane-dense stores.
    v_pad = _round_up(trg_vocab, 128)
    cls_w_p = jnp.zeros((d_model, v_pad), jnp.float32).at[:, :trg_vocab].set(cls_w)
    cls_b_p = jnp.zeros((v_pad,), jnp.float32).at[:trg_vocab].set(cls_b)
    cd = COMPUTE_DTYPE
    return dict(
        src_emb=(jax.random.normal(ks[0], (src_vocab, d_model), jnp.float32) * 0.02).astype(cd),
        trg_emb=(jax.random.normal(ks[1], (trg_vocab, d_model), jnp.float32) * 0.02).astype(cd),
        enc=_init_encoder_layer(ks[2], d_model, d_filter),
        dec=_init_decoder_layer(ks[3], d_model, d_filter),
        cls_w=cls_w_p.astype(cd), cls_b=cls_b_p,
    )


# ----------------------------------------------------------------------------
if __name__ == "__main__":
    # Small config consistent with the module's __init__ signature.
    src_vocab_size = 17
    trg_vocab_size = 19
    d_model = 32
    d_filter = 64
    n_head = 4
    num_encoder_layers = 2
    num_decoder_layers = 2
    B, S_src, S_trg = 2, 8, 8

    key = jax.random.PRNGKey(0)
    kp, ks, kt = jax.random.split(key, 3)
    params = init_transformer(kp, src_vocab_size, trg_vocab_size, d_model, d_filter)

    src_ids = jax.random.randint(ks, (B, S_src), 0, src_vocab_size)
    trg_ids = jax.random.randint(kt, (B, S_trg), 0, trg_vocab_size)
    # Causal target mask: 1 = attend, 0 = masked (score -> -1e9).
    causal_mask = jnp.tril(jnp.ones((S_trg, S_trg), jnp.float32))

    fwd = jax.jit(functools.partial(
        transformer_forward,
        n_head=n_head,
        num_encoder_layers=num_encoder_layers,
        num_decoder_layers=num_decoder_layers,
        trg_vocab=trg_vocab_size,
    ))
    logits = fwd(params, src_ids, trg_ids, causal_mask)
    jax.block_until_ready(logits)
    assert logits.shape == (B, S_trg, trg_vocab_size)
    assert bool(jnp.all(jnp.isfinite(logits)))
    print("KERNEL_OK")
</pallas_src>

<mosaic_0001>
module attributes {stable_mosaic.version = 11 : i64} {
  func.func @_linear_kernel(%arg0: i32, %arg1: i32, %arg2: memref<16x32xbf16, #tpu.memory_space<vmem>>, %arg3: memref<32x96xbf16, #tpu.memory_space<vmem>>, %arg4: memref<1x96xf32, #tpu.memory_space<vmem>>, %arg5: memref<16x96xbf16, #tpu.memory_space<vmem>>) attributes {dimension_semantics = [#tpu.dimension_semantics<parallel>, #tpu.dimension_semantics<parallel>], iteration_bounds = array<i64: 1, 1>, scalar_prefetch = 0 : i64, scratch_operands = 0 : i64, tpu.core_type = #tpu.core_type<tc>, window_params = [{transform_indices = @transform_0, window_bounds = array<i64: 16, 32>}, {transform_indices = @transform_1, window_bounds = array<i64: 32, 96>}, {transform_indices = @transform_2, window_bounds = array<i64: 1, 96>}, {transform_indices = @transform_3, window_bounds = array<i64: 16, 96>}]} {
    %c0 = arith.constant 0 : index
    %c0_0 = arith.constant 0 : index
    %0 = vector.load %arg2[%c0, %c0_0] : memref<16x32xbf16, #tpu.memory_space<vmem>>, vector<16x32xbf16>
    %c0_1 = arith.constant 0 : index
    %c0_2 = arith.constant 0 : index
    %1 = vector.load %arg3[%c0_1, %c0_2] : memref<32x96xbf16, #tpu.memory_space<vmem>>, vector<32x96xbf16>
    %cst = arith.constant dense<0.000000e+00> : vector<16x96xf32>
    %2 = tpu.matmul %0, %1, %cst {dimension_numbers = #tpu.dot_dimension_numbers<[1], [0], [0], [1], [0, 0, 1, 1], [], []>} : vector<16x32xbf16>, vector<32x96xbf16>, vector<16x96xf32> -> vector<16x96xf32>
    %c0_3 = arith.constant 0 : index
    %c0_4 = arith.constant 0 : index
    %3 = vector.load %arg4[%c0_3, %c0_4] : memref<1x96xf32, #tpu.memory_space<vmem>>, vector<1x96xf32>
    %4 = vector.broadcast %3 : vector<1x96xf32> to vector<16x96xf32>
    %5 = arith.addf %2, %4 : vector<16x96xf32>
    %6 = arith.truncf %5 : vector<16x96xf32> to vector<16x96xbf16>
    %c0_5 = arith.constant 0 : index
    %c0_6 = arith.constant 0 : index
    %7 = vector.load %arg5[%c0_5, %c0_6] : memref<16x96xbf16, #tpu.memory_space<vmem>>, vector<16x96xbf16>
    tpu.vector_store %arg5[%c0_5, %c0_6], %6 {strides = array<i32>} : memref<16x96xbf16, #tpu.memory_space<vmem>>, vector<16x96xbf16>,
    return
  }
  func.func @transform_0(%arg0: i32, %arg1: i32) -> (i32, i32) {
    %c0_i32 = arith.constant 0 : i32
    %c0_i32_0 = arith.constant 0 : i32
    return %arg0, %c0_i32 : i32, i32
  }
  func.func @transform_1(%arg0: i32, %arg1: i32) -> (i32, i32) {
    %c0_i32 = arith.constant 0 : i32
    %c0_i32_0 = arith.constant 0 : i32
    return %c0_i32, %arg1 : i32, i32
  }
  func.func @transform_2(%arg0: i32, %arg1: i32) -> (i32, i32) {
    %c0_i32 = arith.constant 0 : i32
    %c0_i32_0 = arith.constant 0 : i32
    return %c0_i32, %arg1 : i32, i32
  }
  func.func @transform_3(%arg0: i32, %arg1: i32) -> (i32, i32) {
    %c0_i32 = arith.constant 0 : i32
    return %arg0, %arg1 : i32, i32
  }
}

module attributes {stable_mosaic.version = 11 : i64} {
  func.func @_self_attn_nobias_kernel(%arg0: i32, %arg1: memref<1x8x12x8xbf16, #tpu.memory_space<vmem>>, %arg2: memref<1x8x4x8xbf16, #tpu.memory_space<vmem>>) attributes {dimension_semantics = [#tpu.dimension_semantics<parallel>], iteration_bounds = array<i64: 2>, scalar_prefetch = 0 : i64, scratch_operands = 0 : i64, tpu.core_type = #tpu.core_type<tc>, window_params = [{transform_indices = @transform_0, window_bounds = array<i64: 1, 8, 12, 8>}, {transform_indices = @transform_1, window_bounds = array<i64: 1, 8, 4, 8>}]} {
    %c0 = arith.constant 0 : index
    %c0_0 = arith.constant 0 : index
    %c0_1 = arith.constant 0 : index
    %c0_2 = arith.constant 0 : index
    %0 = vector.load %arg1[%c0, %c0_0, %c0_1, %c0_2] : memref<1x8x12x8xbf16, #tpu.memory_space<vmem>>, vector<1x8x12x8xbf16>
    %1 = vector.shape_cast %0 : vector<1x8x12x8xbf16> to vector<8x12x8xbf16>
    %2 = tpu.transpose %1, [1, 0, 2] : vector<8x12x8xbf16> -> vector<12x8x8xbf16>
    %3 = vector.extract_strided_slice %2 {offsets = [0, 0, 0], sizes = [4, 8, 8], strides = [1, 1, 1]} : vector<12x8x8xbf16> to vector<4x8x8xbf16>
    %4 = vector.extract_strided_slice %2 {offsets = [4, 0, 0], sizes = [4, 8, 8], strides = [1, 1, 1]} : vector<12x8x8xbf16> to vector<4x8x8xbf16>
    %5 = vector.extract_strided_slice %2 {offsets = [8, 0, 0], sizes = [4, 8, 8], strides = [1, 1, 1]} : vector<12x8x8xbf16> to vector<4x8x8xbf16>
    "tpu.trace_start"() <{level = 10 : i32, message = "hqd,hkd->hqk"}> : () -> ()
    %cst = arith.constant dense<0.000000e+00> : vector<4x8x8xf32>
    %6 = tpu.matmul %3, %4, %cst {dimension_numbers = #tpu.dot_dimension_numbers<[2], [2], [1], [1], [0, 0, 0, 1, 1, 1], [0], [0]>} : vector<4x8x8xbf16>, vector<4x8x8xbf16>, vector<4x8x8xf32> -> vector<4x8x8xf32>
    "tpu.trace_stop"() : () -> ()
    %cst_3 = arith.constant 0.353553385 : f32
    %7 = vector.broadcast %cst_3 : f32 to vector<4x8x8xf32>
    %8 = arith.mulf %6, %7 : vector<4x8x8xf32>
    %cst_4 = arith.constant dense<0xFF800000> : vector<4x8xf32>
    %9 = vector.multi_reduction <maximumf>, %8, %cst_4 [2] : vector<4x8x8xf32> to vector<4x8xf32>
    %10 = vector.shape_cast %9 : vector<4x8xf32> to vector<4x8x1xf32>
    %11 = vector.broadcast %10 : vector<4x8x1xf32> to vector<4x8x8xf32>
    %12 = arith.subf %8, %11 : vector<4x8x8xf32>
    %13 = math.exp %12 : vector<4x8x8xf32>
    %cst_5 = arith.constant dense<0.000000e+00> : vector<4x8xf32>
    %14 = vector.multi_reduction <add>, %13, %cst_5 [2] : vector<4x8x8xf32> to vector<4x8xf32>
    %15 = vector.shape_cast %14 : vector<4x8xf32> to vector<4x8x1xf32>
    %16 = arith.truncf %13 : vector<4x8x8xf32> to vector<4x8x8xbf16>
    "tpu.trace_start"() <{level = 10 : i32, message = "hqk,hkd->hqd"}> : () -> ()
    %cst_6 = arith.constant dense<0.000000e+00> : vector<4x8x8xf32>
    %17 = tpu.matmul %16, %5, %cst_6 {dimension_numbers = #tpu.dot_dimension_numbers<[2], [1], [1], [2], [0, 0, 0, 1, 1, 2], [0], [0]>} : vector<4x8x8xbf16>, vector<4x8x8xbf16>, vector<4x8x8xf32> -> vector<4x8x8xf32>
    "tpu.trace_stop"() : () -> ()
    %18 = tpu.reciprocal %15 {approx = true} : vector<4x8x1xf32> -> vector<4x8x1xf32>
    %19 = vector.broadcast %18 : vector<4x8x1xf32> to vector<4x8x8xf32>
    %20 = arith.mulf %17, %19 : vector<4x8x8xf32>
    %21 = tpu.transpose %20, [1, 0, 2] : vector<4x8x8xf32> -> vector<8x4x8xf32>
    %22 = arith.truncf %21 : vector<8x4x8xf32> to vector<8x4x8xbf16>
    %c0_7 = arith.constant 0 : index
    %c0_8 = arith.constant 0 : index
    %c0_9 = arith.constant 0 : index
    %c0_10 = arith.constant 0 : index
    %23 = vector.load %arg2[%c0_7, %c0_8, %c0_9, %c0_10] : memref<1x8x4x8xbf16, #tpu.memory_space<vmem>>, vector<1x8x4x8xbf16>
    %24 = vector.shape_cast %23 : vector<1x8x4x8xbf16> to vector<8x4x8xbf16>
    %25 = vector.shape_cast %22 : vector<8x4x8xbf16> to vector<1x8x4x8xbf16>
    tpu.vector_store %arg2[%c0_7, %c0_8, %c0_9, %c0_10], %25 {strides = array<i32>} : memref<1x8x4x8xbf16, #tpu.memory_space<vmem>>, vector<1x8x4x8xbf16>,
    return
  }
  func.func @transform_0(%arg0: i32) -> (i32, i32, i32, i32) {
    %c0_i32 = arith.constant 0 : i32
    %c0_i32_0 = arith.constant 0 : i32
    %c0_i32_1 = arith.constant 0 : i32
    %c0_i32_2 = arith.constant 0 : i32
    return %arg0, %c0_i32, %c0_i32_0, %c0_i32_1 : i32, i32, i32, i32
  }
  func.func @transform_1(%arg0: i32) -> (i32, i32, i32, i32) {
    %c0_i32 = arith.constant 0 : i32
    %c0_i32_0 = arith.constant 0 : i32
    %c0_i32_1 = arith.constant 0 : i32
    %c0_i32_2 = arith.constant 0 : i32
    return %arg0, %c0_i32, %c0_i32_0, %c0_i32_1 : i32, i32, i32, i32
  }
}

module attributes {stable_mosaic.version = 11 : i64} {
  func.func @_proj_add_ln_kernel(%arg0: i32, %arg1: memref<16x32xbf16, #tpu.memory_space<vmem>>, %arg2: memref<16x32xbf16, #tpu.memory_space<vmem>>, %arg3: memref<32x32xbf16, #tpu.memory_space<vmem>>, %arg4: memref<1x32xf32, #tpu.memory_space<vmem>>, %arg5: memref<1x32xf32, #tpu.memory_space<vmem>>, %arg6: memref<1x32xf32, #tpu.memory_space<vmem>>, %arg7: memref<16x32xbf16, #tpu.memory_space<vmem>>) attributes {dimension_semantics = [#tpu.dimension_semantics<parallel>], iteration_bounds = array<i64: 1>, scalar_prefetch = 0 : i64, scratch_operands = 0 : i64, tpu.core_type = #tpu.core_type<tc>, window_params = [{transform_indices = @transform_0, window_bounds = array<i64: 16, 32>}, {transform_indices = @transform_1, window_bounds = array<i64: 16, 32>}, {pipeline_mode = #tpu.pipeline_mode<synchronous>, transform_indices = @transform_2, window_bounds = array<i64: 32, 32>}, {pipeline_mode = #tpu.pipeline_mode<synchronous>, transform_indices = @transform_3, window_bounds = array<i64: 1, 32>}, {pipeline_mode = #tpu.pipeline_mode<synchronous>, transform_indices = @transform_4, window_bounds = array<i64: 1, 32>}, {pipeline_mode = #tpu.pipeline_mode<synchronous>, transform_indices = @transform_5, window_bounds = array<i64: 1, 32>}, {transform_indices = @transform_6, window_bounds = array<i64: 16, 32>}]} {
    %c0 = arith.constant 0 : index
    %c0_0 = arith.constant 0 : index
    %0 = vector.load %arg1[%c0, %c0_0] : memref<16x32xbf16, #tpu.memory_space<vmem>>, vector<16x32xbf16>
    %c0_1 = arith.constant 0 : index
    %c0_2 = arith.constant 0 : index
    %1 = vector.load %arg3[%c0_1, %c0_2] : memref<32x32xbf16, #tpu.memory_space<vmem>>, vector<32x32xbf16>
    %cst = arith.constant dense<0.000000e+00> : vector<16x32xf32>
    %2 = tpu.matmul %0, %1, %cst {dimension_numbers = #tpu.dot_dimension_numbers<[1], [0], [0], [1], [0, 0, 1, 1], [], []>} : vector<16x32xbf16>, vector<32x32xbf16>, vector<16x32xf32> -> vector<16x32xf32>
    %c0_3 = arith.constant 0 : index
    %c0_4 = arith.constant 0 : index
    %3 = vector.load %arg4[%c0_3, %c0_4] : memref<1x32xf32, #tpu.memory_space<vmem>>, vector<1x32xf32>
    %4 = vector.broadcast %3 : vector<1x32xf32> to vector<16x32xf32>
    %5 = arith.addf %2, %4 : vector<16x32xf32>
    %c0_5 = arith.constant 0 : index
    %c0_6 = arith.constant 0 : index
    %6 = vector.load %arg2[%c0_5, %c0_6] : memref<16x32xbf16, #tpu.memory_space<vmem>>, vector<16x32xbf16>
    %7 = arith.extf %6 : vector<16x32xbf16> to vector<16x32xf32>
    %8 = arith.addf %5, %7 : vector<16x32xf32>
    %cst_7 = arith.constant dense<0.000000e+00> : vector<16xf32>
    %9 = vector.multi_reduction <add>, %8, %cst_7 [1] : vector<16x32xf32> to vector<16xf32>
    %10 = vector.shape_cast %9 : vector<16xf32> to vector<16x1xf32>
    %cst_8 = arith.constant 3.200000e+01 : f32
    %11 = vector.broadcast %cst_8 : f32 to vector<16x1xf32>
    %12 = arith.divf %10, %11 : vector<16x1xf32>
    %13 = vector.broadcast %12 : vector<16x1xf32> to vector<16x32xf32>
    %14 = arith.subf %8, %13 : vector<16x32xf32>
    %15 = vector.broadcast %12 : vector<16x1xf32> to vector<16x32xf32>
    %16 = arith.subf %8, %15 : vector<16x32xf32>
    %17 = arith.mulf %14, %16 : vector<16x32xf32>
    %cst_9 = arith.constant dense<0.000000e+00> : vector<16xf32>
    %18 = vector.multi_reduction <add>, %17, %cst_9 [1] : vector<16x32xf32> to vector<16xf32>
    %19 = vector.shape_cast %18 : vector<16xf32> to vector<16x1xf32>
    %cst_10 = arith.constant 3.200000e+01 : f32
    %20 = vector.broadcast %cst_10 : f32 to vector<16x1xf32>
    %21 = arith.divf %19, %20 : vector<16x1xf32>
    %22 = vector.broadcast %12 : vector<16x1xf32> to vector<16x32xf32>
    %23 = arith.subf %8, %22 : vector<16x32xf32>
    %cst_11 = arith.constant 9.99999974E-6 : f32
    %24 = vector.broadcast %cst_11 : f32 to vector<16x1xf32>
    %25 = arith.addf %21, %24 : vector<16x1xf32>
    %26 = math.rsqrt %25 : vector<16x1xf32>
    %27 = vector.broadcast %26 : vector<16x1xf32> to vector<16x32xf32>
    %28 = arith.mulf %23, %27 : vector<16x32xf32>
    %c0_12 = arith.constant 0 : index
    %c0_13 = arith.constant 0 : index
    %29 = vector.load %arg5[%c0_12, %c0_13] : memref<1x32xf32, #tpu.memory_space<vmem>>, vector<1x32xf32>
    %30 = vector.broadcast %29 : vector<1x32xf32> to vector<16x32xf32>
    %31 = arith.mulf %28, %30 : vector<16x32xf32>
    %c0_14 = arith.constant 0 : index
    %c0_15 = arith.constant 0 : index
    %32 = vector.load %arg6[%c0_14, %c0_15] : memref<1x32xf32, #tpu.memory_space<vmem>>, vector<1x32xf32>
    %33 = vector.broadcast %32 : vector<1x32xf32> to vector<16x32xf32>
    %34 = arith.addf %31, %33 : vector<16x32xf32>
    %35 = arith.truncf %34 : vector<16x32xf32> to vector<16x32xbf16>
    %c0_16 = arith.constant 0 : index
    %c0_17 = arith.constant 0 : index
    %36 = vector.load %arg7[%c0_16, %c0_17] : memref<16x32xbf16, #tpu.memory_space<vmem>>, vector<16x32xbf16>
    tpu.vector_store %arg7[%c0_16, %c0_17], %35 {strides = array<i32>} : memref<16x32xbf16, #tpu.memory_space<vmem>>, vector<16x32xbf16>,
    return
  }
  func.func @transform_0(%arg0: i32) -> (i32, i32) {
    %c0_i32 = arith.constant 0 : i32
    %c0_i32_0 = arith.constant 0 : i32
    return %arg0, %c0_i32 : i32, i32
  }
  func.func @transform_1(%arg0: i32) -> (i32, i32) {
    %c0_i32 = arith.constant 0 : i32
    %c0_i32_0 = arith.constant 0 : i32
    return %arg0, %c0_i32 : i32, i32
  }
  func.func @transform_2(%arg0: i32) -> (i32, i32) {
    %c0_i32 = arith.constant 0 : i32
    %c0_i32_0 = arith.constant 0 : i32
    %c0_i32_1 = arith.constant 0 : i32
    return %c0_i32, %c0_i32_0 : i32, i32
  }
  func.func @transform_3(%arg0: i32) -> (i32, i32) {
    %c0_i32 = arith.constant 0 : i32
    %c0_i32_0 = arith.constant 0 : i32
    %c0_i32_1 = arith.constant 0 : i32
    return %c0_i32, %c0_i32_0 : i32, i32
  }
  func.func @transform_4(%arg0: i32) -> (i32, i32) {
    %c0_i32 = arith.constant 0 : i32
    %c0_i32_0 = arith.constant 0 : i32
    %c0_i32_1 = arith.constant 0 : i32
    return %c0_i32, %c0_i32_0 : i32, i32
  }
  func.func @transform_5(%arg0: i32) -> (i32, i32) {
    %c0_i32 = arith.constant 0 : i32
    %c0_i32_0 = arith.constant 0 : i32
    %c0_i32_1 = arith.constant 0 : i32
    return %c0_i32, %c0_i32_0 : i32, i32
  }
  func.func @transform_6(%arg0: i32) -> (i32, i32) {
    %c0_i32 = arith.constant 0 : i32
    %c0_i32_0 = arith.constant 0 : i32
    return %arg0, %c0_i32 : i32, i32
  }
}

module attributes {stable_mosaic.version = 11 : i64} {
  func.func @_ffn_add_ln_kernel(%arg0: i32, %arg1: i32, %arg2: memref<16x32xbf16, #tpu.memory_space<vmem>>, %arg3: memref<32x64xbf16, #tpu.memory_space<vmem>>, %arg4: memref<1x64xf32, #tpu.memory_space<vmem>>, %arg5: memref<64x32xbf16, #tpu.memory_space<vmem>>, %arg6: memref<1x32xf32, #tpu.memory_space<vmem>>, %arg7: memref<1x32xf32, #tpu.memory_space<vmem>>, %arg8: memref<1x32xf32, #tpu.memory_space<vmem>>, %arg9: memref<16x32xbf16, #tpu.memory_space<vmem>>, %arg10: memref<16x32xf32, #tpu.memory_space<vmem>>) attributes {dimension_semantics = [#tpu.dimension_semantics<parallel>, #tpu.dimension_semantics<arbitrary>], iteration_bounds = array<i64: 1, 1>, scalar_prefetch = 0 : i64, scratch_operands = 1 : i64, tpu.core_type = #tpu.core_type<tc>, window_params = [{transform_indices = @transform_0, window_bounds = array<i64: 16, 32>}, {transform_indices = @transform_1, window_bounds = array<i64: 32, 64>}, {transform_indices = @transform_2, window_bounds = array<i64: 1, 64>}, {transform_indices = @transform_3, window_bounds = array<i64: 64, 32>}, {pipeline_mode = #tpu.pipeline_mode<synchronous>, transform_indices = @transform_4, window_bounds = array<i64: 1, 32>}, {pipeline_mode = #tpu.pipeline_mode<synchronous>, transform_indices = @transform_5, window_bounds = array<i64: 1, 32>}, {pipeline_mode = #tpu.pipeline_mode<synchronous>, transform_indices = @transform_6, window_bounds = array<i64: 1, 32>}, {transform_indices = @transform_7, window_bounds = array<i64: 16, 32>}]} {
    %c0_i32 = arith.constant 0 : i32
    %0 = arith.cmpi eq, %arg1, %c0_i32 : i32
    %1 = arith.extui %0 : i1 to i32
    %c0_i32_0 = arith.constant 0 : i32
    %2 = arith.cmpi ne, %1, %c0_i32_0 : i32
    scf.if %2 {
      %cst_16 = arith.constant 0.000000e+00 : f32
      %20 = vector.broadcast %cst_16 : f32 to vector<16x32xf32>
      %c0_17 = arith.constant 0 : index
      %c0_18 = arith.constant 0 : index
      %21 = vector.load %arg10[%c0_17, %c0_18] : memref<16x32xf32, #tpu.memory_space<vmem>>, vector<16x32xf32>
      tpu.vector_store %arg10[%c0_17, %c0_18], %20 {strides = array<i32>} : memref<16x32xf32, #tpu.memory_space<vmem>>, vector<16x32xf32>,
    } else {
    }
    %c0 = arith.constant 0 : index
    %c0_1 = arith.constant 0 : index
    %3 = vector.load %arg2[%c0, %c0_1] : memref<16x32xbf16, #tpu.memory_space<vmem>>, vector<16x32xbf16>
    %c0_2 = arith.constant 0 : index
    %c0_3 = arith.constant 0 : index
    %4 = vector.load %arg3[%c0_2, %c0_3] : memref<32x64xbf16, #tpu.memory_space<vmem>>, vector<32x64xbf16>
    %cst = arith.constant dense<0.000000e+00> : vector<16x64xf32>
    %5 = tpu.matmul %3, %4, %cst {dimension_numbers = #tpu.dot_dimension_numbers<[1], [0], [0], [1], [0, 0, 1, 1], [], []>} : vector<16x32xbf16>, vector<32x64xbf16>, vector<16x64xf32> -> vector<16x64xf32>
    %c0_4 = arith.constant 0 : index
    %c0_5 = arith.constant 0 : index
    %6 = vector.load %arg4[%c0_4, %c0_5] : memref<1x64xf32, #tpu.memory_space<vmem>>, vector<1x64xf32>
    %7 = vector.broadcast %6 : vector<1x64xf32> to vector<16x64xf32>
    %8 = arith.addf %5, %7 : vector<16x64xf32>
    %cst_6 = arith.constant 0.000000e+00 : f32
    %9 = vector.broadcast %cst_6 : f32 to vector<16x64xf32>
    %10 = arith.maximumf %8, %9 : vector<16x64xf32>
    %c0_7 = arith.constant 0 : index
    %c0_8 = arith.constant 0 : index
    %11 = vector.load %arg10[%c0_7, %c0_8] : memref<16x32xf32, #tpu.memory_space<vmem>>, vector<16x32xf32>
    %12 = arith.truncf %10 : vector<16x64xf32> to vector<16x64xbf16>
    %c0_9 = arith.constant 0 : index
    %c0_10 = arith.constant 0 : index
    %13 = vector.load %arg5[%c0_9, %c0_10] : memref<64x32xbf16, #tpu.memory_space<vmem>>, vector<64x32xbf16>
    %cst_11 = arith.constant dense<0.000000e+00> : vector<16x32xf32>
    %14 = tpu.matmul %12, %13, %cst_11 {dimension_numbers = #tpu.dot_dimension_numbers<[1], [0], [0], [1], [0, 0, 1, 1], [], []>} : vector<16x64xbf16>, vector<64x32xbf16>, vector<16x32xf32> -> vector<16x32xf32>
    %15 = arith.addf %11, %14 : vector<16x32xf32>
    %c0_12 = arith.constant 0 : index
    %c0_13 = arith.constant 0 : index
    %16 = vector.load %arg10[%c0_12, %c0_13] : memref<16x32xf32, #tpu.memory_space<vmem>>, vector<16x32xf32>
    tpu.vector_store %arg10[%c0_12, %c0_13], %15 {strides = array<i32>} : memref<16x32xf32, #tpu.memory_space<vmem>>, vector<16x32xf32>,
    %c0_i32_14 = arith.constant 0 : i32
    %17 = arith.cmpi eq, %arg1, %c0_i32_14 : i32
    %18 = arith.extui %17 : i1 to i32
    %c0_i32_15 = arith.constant 0 : i32
    %19 = arith.cmpi ne, %18, %c0_i32_15 : i32
    scf.if %19 {
      %c0_16 = arith.constant 0 : index
      %c0_17 = arith.constant 0 : index
      %20 = vector.load %arg10[%c0_16, %c0_17] : memref<16x32xf32, #tpu.memory_space<vmem>>, vector<16x32xf32>
      %c0_18 = arith.constant 0 : index
      %c0_19 = arith.constant 0 : index
      %21 = vector.load %arg6[%c0_18, %c0_19] : memref<1x32xf32, #tpu.memory_space<vmem>>, vector<1x32xf32>
      %22 = vector.broadcast %21 : vector<1x32xf32> to vector<16x32xf32>
      %23 = arith.addf %20, %22 : vector<16x32xf32>
      %24 = arith.extf %3 : vector<16x32xbf16> to vector<16x32xf32>
      %25 = arith.addf %23, %24 : vector<16x32xf32>
      %cst_20 = arith.constant dense<0.000000e+00> : vector<16xf32>
      %26 = vector.multi_reduction <add>, %25, %cst_20 [1] : vector<16x32xf32> to vector<16xf32>
      %27 = vector.shape_cast %26 : vector<16xf32> to vector<16x1xf32>
      %cst_21 = arith.constant 3.200000e+01 : f32
      %28 = vector.broadcast %cst_21 : f32 to vector<16x1xf32>
      %29 = arith.divf %27, %28 : vector<16x1xf32>
      %30 = vector.broadcast %29 : vector<16x1xf32> to vector<16x32xf32>
      %31 = arith.subf %25, %30 : vector<16x32xf32>
      %32 = vector.broadcast %29 : vector<16x1xf32> to vector<16x32xf32>
      %33 = arith.subf %25, %32 : vector<16x32xf32>
      %34 = arith.mulf %31, %33 : vector<16x32xf32>
      %cst_22 = arith.constant dense<0.000000e+00> : vector<16xf32>
      %35 = vector.multi_reduction <add>, %34, %cst_22 [1] : vector<16x32xf32> to vector<16xf32>
      %36 = vector.shape_cast %35 : vector<16xf32> to vector<16x1xf32>
      %cst_23 = arith.constant 3.200000e+01 : f32
      %37 = vector.broadcast %cst_23 : f32 to vector<16x1xf32>
      %38 = arith.divf %36, %37 : vector<16x1xf32>
      %39 = vector.broadcast %29 : vector<16x1xf32> to vector<16x32xf32>
      %40 = arith.subf %25, %39 : vector<16x32xf32>
      %cst_24 = arith.constant 9.99999974E-6 : f32
      %41 = vector.broadcast %cst_24 : f32 to vector<16x1xf32>
      %42 = arith.addf %38, %41 : vector<16x1xf32>
      %43 = math.rsqrt %42 : vector<16x1xf32>
      %44 = vector.broadcast %43 : vector<16x1xf32> to vector<16x32xf32>
      %45 = arith.mulf %40, %44 : vector<16x32xf32>
      %c0_25 = arith.constant 0 : index
      %c0_26 = arith.constant 0 : index
      %46 = vector.load %arg7[%c0_25, %c0_26] : memref<1x32xf32, #tpu.memory_space<vmem>>, vector<1x32xf32>
      %47 = vector.broadcast %46 : vector<1x32xf32> to vector<16x32xf32>
      %48 = arith.mulf %45, %47 : vector<16x32xf32>
      %c0_27 = arith.constant 0 : index
      %c0_28 = arith.constant 0 : index
      %49 = vector.load %arg8[%c0_27, %c0_28] : memref<1x32xf32, #tpu.memory_space<vmem>>, vector<1x32xf32>
      %50 = vector.broadcast %49 : vector<1x32xf32> to vector<16x32xf32>
      %51 = arith.addf %48, %50 : vector<16x32xf32>
      %52 = arith.truncf %51 : vector<16x32xf32> to vector<16x32xbf16>
      %c0_29 = arith.constant 0 : index
      %c0_30 = arith.constant 0 : index
      %53 = vector.load %arg9[%c0_29, %c0_30] : memref<16x32xbf16, #tpu.memory_space<vmem>>, vector<16x32xbf16>
      tpu.vector_store %arg9[%c0_29, %c0_30], %52 {strides = array<i32>} : memref<16x32xbf16, #tpu.memory_space<vmem>>, vector<16x32xbf16>,
    } else {
    }
    return
  }
  func.func @transform_0(%arg0: i32, %arg1: i32) -> (i32, i32) {
    %c0_i32 = arith.constant 0 : i32
    %c0_i32_0 = arith.constant 0 : i32
    return %arg0, %c0_i32 : i32, i32
  }
  func.func @transform_1(%arg0: i32, %arg1: i32) -> (i32, i32) {
    %c0_i32 = arith.constant 0 : i32
    %c0_i32_0 = arith.constant 0 : i32
    return %c0_i32, %arg1 : i32, i32
  }
  func.func @transform_2(%arg0: i32, %arg1: i32) -> (i32, i32) {
    %c0_i32 = arith.constant 0 : i32
    %c0_i32_0 = arith.constant 0 : i32
    return %c0_i32, %arg1 : i32, i32
  }
  func.func @transform_3(%arg0: i32, %arg1: i32) -> (i32, i32) {
    %c0_i32 = arith.constant 0 : i32
    %c0_i32_0 = arith.constant 0 : i32
    return %arg1, %c0_i32 : i32, i32
  }
  func.func @transform_4(%arg0: i32, %arg1: i32) -> (i32, i32) {
    %c0_i32 = arith.constant 0 : i32
    %c0_i32_0 = arith.constant 0 : i32
    %c0_i32_1 = arith.constant 0 : i32
    return %c0_i32, %c0_i32_0 : i32, i32
  }
  func.func @transform_5(%arg0: i32, %arg1: i32) -> (i32, i32) {
    %c0_i32 = arith.constant 0 : i32
    %c0_i32_0 = arith.constant 0 : i32
    %c0_i32_1 = arith.constant 0 : i32
    return %c0_i32, %c0_i32_0 : i32, i32
  }
  func.func @transform_6(%arg0: i32, %arg1: i32) -> (i32, i32) {
    %c0_i32 = arith.constant 0 : i32
    %c0_i32_0 = arith.constant 0 : i32
    %c0_i32_1 = arith.constant 0 : i32
    return %c0_i32, %c0_i32_0 : i32, i32
  }
  func.func @transform_7(%arg0: i32, %arg1: i32) -> (i32, i32) {
    %c0_i32 = arith.constant 0 : i32
    %c0_i32_0 = arith.constant 0 : i32
    return %arg0, %c0_i32 : i32, i32
  }
}

module attributes {stable_mosaic.version = 11 : i64} {
  func.func @_linear_kernel(%arg0: i32, %arg1: i32, %arg2: memref<16x32xbf16, #tpu.memory_space<vmem>>, %arg3: memref<32x64xbf16, #tpu.memory_space<vmem>>, %arg4: memref<1x64xf32, #tpu.memory_space<vmem>>, %arg5: memref<16x64xbf16, #tpu.memory_space<vmem>>) attributes {dimension_semantics = [#tpu.dimension_semantics<parallel>, #tpu.dimension_semantics<parallel>], iteration_bounds = array<i64: 1, 1>, scalar_prefetch = 0 : i64, scratch_operands = 0 : i64, tpu.core_type = #tpu.core_type<tc>, window_params = [{transform_indices = @transform_0, window_bounds = array<i64: 16, 32>}, {transform_indices = @transform_1, window_bounds = array<i64: 32, 64>}, {transform_indices = @transform_2, window_bounds = array<i64: 1, 64>}, {transform_indices = @transform_3, window_bounds = array<i64: 16, 64>}]} {
    %c0 = arith.constant 0 : index
    %c0_0 = arith.constant 0 : index
    %0 = vector.load %arg2[%c0, %c0_0] : memref<16x32xbf16, #tpu.memory_space<vmem>>, vector<16x32xbf16>
    %c0_1 = arith.constant 0 : index
    %c0_2 = arith.constant 0 : index
    %1 = vector.load %arg3[%c0_1, %c0_2] : memref<32x64xbf16, #tpu.memory_space<vmem>>, vector<32x64xbf16>
    %cst = arith.constant dense<0.000000e+00> : vector<16x64xf32>
    %2 = tpu.matmul %0, %1, %cst {dimension_numbers = #tpu.dot_dimension_numbers<[1], [0], [0], [1], [0, 0, 1, 1], [], []>} : vector<16x32xbf16>, vector<32x64xbf16>, vector<16x64xf32> -> vector<16x64xf32>
    %c0_3 = arith.constant 0 : index
    %c0_4 = arith.constant 0 : index
    %3 = vector.load %arg4[%c0_3, %c0_4] : memref<1x64xf32, #tpu.memory_space<vmem>>, vector<1x64xf32>
    %4 = vector.broadcast %3 : vector<1x64xf32> to vector<16x64xf32>
    %5 = arith.addf %2, %4 : vector<16x64xf32>
    %6 = arith.truncf %5 : vector<16x64xf32> to vector<16x64xbf16>
    %c0_5 = arith.constant 0 : index
    %c0_6 = arith.constant 0 : index
    %7 = vector.load %arg5[%c0_5, %c0_6] : memref<16x64xbf16, #tpu.memory_space<vmem>>, vector<16x64xbf16>
    tpu.vector_store %arg5[%c0_5, %c0_6], %6 {strides = array<i32>} : memref<16x64xbf16, #tpu.memory_space<vmem>>, vector<16x64xbf16>,
    return
  }
  func.func @transform_0(%arg0: i32, %arg1: i32) -> (i32, i32) {
    %c0_i32 = arith.constant 0 : i32
    %c0_i32_0 = arith.constant 0 : i32
    return %arg0, %c0_i32 : i32, i32
  }
  func.func @transform_1(%arg0: i32, %arg1: i32) -> (i32, i32) {
    %c0_i32 = arith.constant 0 : i32
    %c0_i32_0 = arith.constant 0 : i32
    return %c0_i32, %arg1 : i32, i32
  }
  func.func @transform_2(%arg0: i32, %arg1: i32) -> (i32, i32) {
    %c0_i32 = arith.constant 0 : i32
    %c0_i32_0 = arith.constant 0 : i32
    return %c0_i32, %arg1 : i32, i32
  }
  func.func @transform_3(%arg0: i32, %arg1: i32) -> (i32, i32) {
    %c0_i32 = arith.constant 0 : i32
    return %arg0, %arg1 : i32, i32
  }
}

module attributes {stable_mosaic.version = 11 : i64} {
  func.func @_linear_kernel(%arg0: i32, %arg1: i32, %arg2: memref<16x32xbf16, #tpu.memory_space<vmem>>, %arg3: memref<32x32xbf16, #tpu.memory_space<vmem>>, %arg4: memref<1x32xf32, #tpu.memory_space<vmem>>, %arg5: memref<16x32xbf16, #tpu.memory_space<vmem>>) attributes {dimension_semantics = [#tpu.dimension_semantics<parallel>, #tpu.dimension_semantics<parallel>], iteration_bounds = array<i64: 1, 1>, scalar_prefetch = 0 : i64, scratch_operands = 0 : i64, tpu.core_type = #tpu.core_type<tc>, window_params = [{transform_indices = @transform_0, window_bounds = array<i64: 16, 32>}, {transform_indices = @transform_1, window_bounds = array<i64: 32, 32>}, {transform_indices = @transform_2, window_bounds = array<i64: 1, 32>}, {transform_indices = @transform_3, window_bounds = array<i64: 16, 32>}]} {
    %c0 = arith.constant 0 : index
    %c0_0 = arith.constant 0 : index
    %0 = vector.load %arg2[%c0, %c0_0] : memref<16x32xbf16, #tpu.memory_space<vmem>>, vector<16x32xbf16>
    %c0_1 = arith.constant 0 : index
    %c0_2 = arith.constant 0 : index
    %1 = vector.load %arg3[%c0_1, %c0_2] : memref<32x32xbf16, #tpu.memory_space<vmem>>, vector<32x32xbf16>
    %cst = arith.constant dense<0.000000e+00> : vector<16x32xf32>
    %2 = tpu.matmul %0, %1, %cst {dimension_numbers = #tpu.dot_dimension_numbers<[1], [0], [0], [1], [0, 0, 1, 1], [], []>} : vector<16x32xbf16>, vector<32x32xbf16>, vector<16x32xf32> -> vector<16x32xf32>
    %c0_3 = arith.constant 0 : index
    %c0_4 = arith.constant 0 : index
    %3 = vector.load %arg4[%c0_3, %c0_4] : memref<1x32xf32, #tpu.memory_space<vmem>>, vector<1x32xf32>
    %4 = vector.broadcast %3 : vector<1x32xf32> to vector<16x32xf32>
    %5 = arith.addf %2, %4 : vector<16x32xf32>
    %6 = arith.truncf %5 : vector<16x32xf32> to vector<16x32xbf16>
    %c0_5 = arith.constant 0 : index
    %c0_6 = arith.constant 0 : index
    %7 = vector.load %arg5[%c0_5, %c0_6] : memref<16x32xbf16, #tpu.memory_space<vmem>>, vector<16x32xbf16>
    tpu.vector_store %arg5[%c0_5, %c0_6], %6 {strides = array<i32>} : memref<16x32xbf16, #tpu.memory_space<vmem>>, vector<16x32xbf16>,
    return
  }
  func.func @transform_0(%arg0: i32, %arg1: i32) -> (i32, i32) {
    %c0_i32 = arith.constant 0 : i32
    %c0_i32_0 = arith.constant 0 : i32
    return %arg0, %c0_i32 : i32, i32
  }
  func.func @transform_1(%arg0: i32, %arg1: i32) -> (i32, i32) {
    %c0_i32 = arith.constant 0 : i32
    %c0_i32_0 = arith.constant 0 : i32
    return %c0_i32, %arg1 : i32, i32
  }
  func.func @transform_2(%arg0: i32, %arg1: i32) -> (i32, i32) {
    %c0_i32 = arith.constant 0 : i32
    %c0_i32_0 = arith.constant 0 : i32
    return %c0_i32, %arg1 : i32, i32
  }
  func.func @transform_3(%arg0: i32, %arg1: i32) -> (i32, i32) {
    %c0_i32 = arith.constant 0 : i32
    return %arg0, %arg1 : i32, i32
  }
}

module attributes {stable_mosaic.version = 11 : i64} {
  func.func @_self_attn_bias_kernel(%arg0: i32, %arg1: memref<1x8x12x8xbf16, #tpu.memory_space<vmem>>, %arg2: memref<8x8xf32, #tpu.memory_space<vmem>>, %arg3: memref<1x8x4x8xbf16, #tpu.memory_space<vmem>>) attributes {dimension_semantics = [#tpu.dimension_semantics<parallel>], iteration_bounds = array<i64: 2>, scalar_prefetch = 0 : i64, scratch_operands = 0 : i64, tpu.core_type = #tpu.core_type<tc>, window_params = [{transform_indices = @transform_0, window_bounds = array<i64: 1, 8, 12, 8>}, {pipeline_mode = #tpu.pipeline_mode<synchronous>, transform_indices = @transform_1, window_bounds = array<i64: 8, 8>}, {transform_indices = @transform_2, window_bounds = array<i64: 1, 8, 4, 8>}]} {
    %c0 = arith.constant 0 : index
    %c0_0 = arith.constant 0 : index
    %c0_1 = arith.constant 0 : index
    %c0_2 = arith.constant 0 : index
    %0 = vector.load %arg1[%c0, %c0_0, %c0_1, %c0_2] : memref<1x8x12x8xbf16, #tpu.memory_space<vmem>>, vector<1x8x12x8xbf16>
    %1 = vector.shape_cast %0 : vector<1x8x12x8xbf16> to vector<8x12x8xbf16>
    %2 = tpu.transpose %1, [1, 0, 2] : vector<8x12x8xbf16> -> vector<12x8x8xbf16>
    %3 = vector.extract_strided_slice %2 {offsets = [0, 0, 0], sizes = [4, 8, 8], strides = [1, 1, 1]} : vector<12x8x8xbf16> to vector<4x8x8xbf16>
    %4 = vector.extract_strided_slice %2 {offsets = [4, 0, 0], sizes = [4, 8, 8], strides = [1, 1, 1]} : vector<12x8x8xbf16> to vector<4x8x8xbf16>
    %5 = vector.extract_strided_slice %2 {offsets = [8, 0, 0], sizes = [4, 8, 8], strides = [1, 1, 1]} : vector<12x8x8xbf16> to vector<4x8x8xbf16>
    %c0_3 = arith.constant 0 : index
    %c0_4 = arith.constant 0 : index
    %6 = vector.load %arg2[%c0_3, %c0_4] : memref<8x8xf32, #tpu.memory_space<vmem>>, vector<8x8xf32>
    "tpu.trace_start"() <{level = 10 : i32, message = "hqd,hkd->hqk"}> : () -> ()
    %cst = arith.constant dense<0.000000e+00> : vector<4x8x8xf32>
    %7 = tpu.matmul %3, %4, %cst {dimension_numbers = #tpu.dot_dimension_numbers<[2], [2], [1], [1], [0, 0, 0, 1, 1, 1], [0], [0]>} : vector<4x8x8xbf16>, vector<4x8x8xbf16>, vector<4x8x8xf32> -> vector<4x8x8xf32>
    "tpu.trace_stop"() : () -> ()
    %cst_5 = arith.constant 0.353553385 : f32
    %8 = vector.broadcast %cst_5 : f32 to vector<4x8x8xf32>
    %9 = arith.mulf %7, %8 : vector<4x8x8xf32>
    %10 = vector.shape_cast %6 : vector<8x8xf32> to vector<1x8x8xf32>
    %11 = vector.broadcast %10 : vector<1x8x8xf32> to vector<4x8x8xf32>
    %12 = arith.addf %9, %11 : vector<4x8x8xf32>
    %cst_6 = arith.constant dense<0xFF800000> : vector<4x8xf32>
    %13 = vector.multi_reduction <maximumf>, %12, %cst_6 [2] : vector<4x8x8xf32> to vector<4x8xf32>
    %14 = vector.shape_cast %13 : vector<4x8xf32> to vector<4x8x1xf32>
    %15 = vector.broadcast %14 : vector<4x8x1xf32> to vector<4x8x8xf32>
    %16 = arith.subf %12, %15 : vector<4x8x8xf32>
    %17 = math.exp %16 : vector<4x8x8xf32>
    %cst_7 = arith.constant dense<0.000000e+00> : vector<4x8xf32>
    %18 = vector.multi_reduction <add>, %17, %cst_7 [2] : vector<4x8x8xf32> to vector<4x8xf32>
    %19 = vector.shape_cast %18 : vector<4x8xf32> to vector<4x8x1xf32>
    %20 = arith.truncf %17 : vector<4x8x8xf32> to vector<4x8x8xbf16>
    "tpu.trace_start"() <{level = 10 : i32, message = "hqk,hkd->hqd"}> : () -> ()
    %cst_8 = arith.constant dense<0.000000e+00> : vector<4x8x8xf32>
    %21 = tpu.matmul %20, %5, %cst_8 {dimension_numbers = #tpu.dot_dimension_numbers<[2], [1], [1], [2], [0, 0, 0, 1, 1, 2], [0], [0]>} : vector<4x8x8xbf16>, vector<4x8x8xbf16>, vector<4x8x8xf32> -> vector<4x8x8xf32>
    "tpu.trace_stop"() : () -> ()
    %22 = tpu.reciprocal %19 {approx = true} : vector<4x8x1xf32> -> vector<4x8x1xf32>
    %23 = vector.broadcast %22 : vector<4x8x1xf32> to vector<4x8x8xf32>
    %24 = arith.mulf %21, %23 : vector<4x8x8xf32>
    %25 = tpu.transpose %24, [1, 0, 2] : vector<4x8x8xf32> -> vector<8x4x8xf32>
    %26 = arith.truncf %25 : vector<8x4x8xf32> to vector<8x4x8xbf16>
    %c0_9 = arith.constant 0 : index
    %c0_10 = arith.constant 0 : index
    %c0_11 = arith.constant 0 : index
    %c0_12 = arith.constant 0 : index
    %27 = vector.load %arg3[%c0_9, %c0_10, %c0_11, %c0_12] : memref<1x8x4x8xbf16, #tpu.memory_space<vmem>>, vector<1x8x4x8xbf16>
    %28 = vector.shape_cast %27 : vector<1x8x4x8xbf16> to vector<8x4x8xbf16>
    %29 = vector.shape_cast %26 : vector<8x4x8xbf16> to vector<1x8x4x8xbf16>
    tpu.vector_store %arg3[%c0_9, %c0_10, %c0_11, %c0_12], %29 {strides = array<i32>} : memref<1x8x4x8xbf16, #tpu.memory_space<vmem>>, vector<1x8x4x8xbf16>,
    return
  }
  func.func @transform_0(%arg0: i32) -> (i32, i32, i32, i32) {
    %c0_i32 = arith.constant 0 : i32
    %c0_i32_0 = arith.constant 0 : i32
    %c0_i32_1 = arith.constant 0 : i32
    %c0_i32_2 = arith.constant 0 : i32
    return %arg0, %c0_i32, %c0_i32_0, %c0_i32_1 : i32, i32, i32, i32
  }
  func.func @transform_1(%arg0: i32) -> (i32, i32) {
    %c0_i32 = arith.constant 0 : i32
    %c0_i32_0 = arith.constant 0 : i32
    %c0_i32_1 = arith.constant 0 : i32
    return %c0_i32, %c0_i32_0 : i32, i32
  }
  func.func @transform_2(%arg0: i32) -> (i32, i32, i32, i32) {
    %c0_i32 = arith.constant 0 : i32
    %c0_i32_0 = arith.constant 0 : i32
    %c0_i32_1 = arith.constant 0 : i32
    %c0_i32_2 = arith.constant 0 : i32
    return %arg0, %c0_i32, %c0_i32_0, %c0_i32_1 : i32, i32, i32, i32
  }
}

module attributes {stable_mosaic.version = 11 : i64} {
  func.func @_linear_kernel(%arg0: i32, %arg1: i32, %arg2: memref<16x32xbf16, #tpu.memory_space<vmem>>, %arg3: memref<32x128xbf16, #tpu.memory_space<vmem>>, %arg4: memref<1x128xf32, #tpu.memory_space<vmem>>, %arg5: memref<16x128xf32, #tpu.memory_space<vmem>>) attributes {dimension_semantics = [#tpu.dimension_semantics<parallel>, #tpu.dimension_semantics<parallel>], iteration_bounds = array<i64: 1, 1>, scalar_prefetch = 0 : i64, scratch_operands = 0 : i64, tpu.core_type = #tpu.core_type<tc>, window_params = [{transform_indices = @transform_0, window_bounds = array<i64: 16, 32>}, {transform_indices = @transform_1, window_bounds = array<i64: 32, 128>}, {transform_indices = @transform_2, window_bounds = array<i64: 1, 128>}, {transform_indices = @transform_3, window_bounds = array<i64: 16, 128>}]} {
    %c0 = arith.constant 0 : index
    %c0_0 = arith.constant 0 : index
    %0 = vector.load %arg2[%c0, %c0_0] : memref<16x32xbf16, #tpu.memory_space<vmem>>, vector<16x32xbf16>
    %c0_1 = arith.constant 0 : index
    %c0_2 = arith.constant 0 : index
    %1 = vector.load %arg3[%c0_1, %c0_2] : memref<32x128xbf16, #tpu.memory_space<vmem>>, vector<32x128xbf16>
    %cst = arith.constant dense<0.000000e+00> : vector<16x128xf32>
    %2 = tpu.matmul %0, %1, %cst {dimension_numbers = #tpu.dot_dimension_numbers<[1], [0], [0], [1], [0, 0, 1, 1], [], []>} : vector<16x32xbf16>, vector<32x128xbf16>, vector<16x128xf32> -> vector<16x128xf32>
    %c0_3 = arith.constant 0 : index
    %c0_4 = arith.constant 0 : index
    %3 = vector.load %arg4[%c0_3, %c0_4] : memref<1x128xf32, #tpu.memory_space<vmem>>, vector<1x128xf32>
    %4 = vector.broadcast %3 : vector<1x128xf32> to vector<16x128xf32>
    %5 = arith.addf %2, %4 : vector<16x128xf32>
    %c0_5 = arith.constant 0 : index
    %c0_6 = arith.constant 0 : index
    %6 = vector.load %arg5[%c0_5, %c0_6] : memref<16x128xf32, #tpu.memory_space<vmem>>, vector<16x128xf32>
    tpu.vector_store %arg5[%c0_5, %c0_6], %5 {strides = array<i32>} : memref<16x128xf32, #tpu.memory_space<vmem>>, vector<16x128xf32>,
    return
  }
  func.func @transform_0(%arg0: i32, %arg1: i32) -> (i32, i32) {
    %c0_i32 = arith.constant 0 : i32
    %c0_i32_0 = arith.constant 0 : i32
    return %arg0, %c0_i32 : i32, i32
  }
  func.func @transform_1(%arg0: i32, %arg1: i32) -> (i32, i32) {
    %c0_i32 = arith.constant 0 : i32
    %c0_i32_0 = arith.constant 0 : i32
    return %c0_i32, %arg1 : i32, i32
  }
  func.func @transform_2(%arg0: i32, %arg1: i32) -> (i32, i32) {
    %c0_i32 = arith.constant 0 : i32
    %c0_i32_0 = arith.constant 0 : i32
    return %c0_i32, %arg1 : i32, i32
  }
  func.func @transform_3(%arg0: i32, %arg1: i32) -> (i32, i32) {
    %c0_i32 = arith.constant 0 : i32
    return %arg0, %arg1 : i32, i32
  }
}

module attributes {stable_mosaic.version = 11 : i64} {
  func.func @_cross_attn_kernel(%arg0: i32, %arg1: memref<1x8x4x8xbf16, #tpu.memory_space<vmem>>, %arg2: memref<1x8x8x8xbf16, #tpu.memory_space<vmem>>, %arg3: memref<1x8x4x8xbf16, #tpu.memory_space<vmem>>) attributes {dimension_semantics = [#tpu.dimension_semantics<parallel>], iteration_bounds = array<i64: 2>, scalar_prefetch = 0 : i64, scratch_operands = 0 : i64, tpu.core_type = #tpu.core_type<tc>, window_params = [{transform_indices = @transform_0, window_bounds = array<i64: 1, 8, 4, 8>}, {transform_indices = @transform_1, window_bounds = array<i64: 1, 8, 8, 8>}, {transform_indices = @transform_2, window_bounds = array<i64: 1, 8, 4, 8>}]} {
    %c0 = arith.constant 0 : index
    %c0_0 = arith.constant 0 : index
    %c0_1 = arith.constant 0 : index
    %c0_2 = arith.constant 0 : index
    %0 = vector.load %arg1[%c0, %c0_0, %c0_1, %c0_2] : memref<1x8x4x8xbf16, #tpu.memory_space<vmem>>, vector<1x8x4x8xbf16>
    %1 = vector.shape_cast %0 : vector<1x8x4x8xbf16> to vector<8x4x8xbf16>
    %2 = tpu.transpose %1, [1, 0, 2] : vector<8x4x8xbf16> -> vector<4x8x8xbf16>
    %c0_3 = arith.constant 0 : index
    %c0_4 = arith.constant 0 : index
    %c0_5 = arith.constant 0 : index
    %c0_6 = arith.constant 0 : index
    %3 = vector.load %arg2[%c0_3, %c0_4, %c0_5, %c0_6] : memref<1x8x8x8xbf16, #tpu.memory_space<vmem>>, vector<1x8x8x8xbf16>
    %4 = vector.shape_cast %3 : vector<1x8x8x8xbf16> to vector<8x8x8xbf16>
    %5 = tpu.transpose %4, [1, 0, 2] : vector<8x8x8xbf16> -> vector<8x8x8xbf16>
    %6 = vector.extract_strided_slice %5 {offsets = [0, 0, 0], sizes = [4, 8, 8], strides = [1, 1, 1]} : vector<8x8x8xbf16> to vector<4x8x8xbf16>
    %7 = vector.extract_strided_slice %5 {offsets = [4, 0, 0], sizes = [4, 8, 8], strides = [1, 1, 1]} : vector<8x8x8xbf16> to vector<4x8x8xbf16>
    "tpu.trace_start"() <{level = 10 : i32, message = "hqd,hkd->hqk"}> : () -> ()
    %cst = arith.constant dense<0.000000e+00> : vector<4x8x8xf32>
    %8 = tpu.matmul %2, %6, %cst {dimension_numbers = #tpu.dot_dimension_numbers<[2], [2], [1], [1], [0, 0, 0, 1, 1, 1], [0], [0]>} : vector<4x8x8xbf16>, vector<4x8x8xbf16>, vector<4x8x8xf32> -> vector<4x8x8xf32>
    "tpu.trace_stop"() : () -> ()
    %cst_7 = arith.constant 0.353553385 : f32
    %9 = vector.broadcast %cst_7 : f32 to vector<4x8x8xf32>
    %10 = arith.mulf %8, %9 : vector<4x8x8xf32>
    %cst_8 = arith.constant dense<0xFF800000> : vector<4x8xf32>
    %11 = vector.multi_reduction <maximumf>, %10, %cst_8 [2] : vector<4x8x8xf32> to vector<4x8xf32>
    %12 = vector.shape_cast %11 : vector<4x8xf32> to vector<4x8x1xf32>
    %13 = vector.broadcast %12 : vector<4x8x1xf32> to vector<4x8x8xf32>
    %14 = arith.subf %10, %13 : vector<4x8x8xf32>
    %15 = math.exp %14 : vector<4x8x8xf32>
    %cst_9 = arith.constant dense<0.000000e+00> : vector<4x8xf32>
    %16 = vector.multi_reduction <add>, %15, %cst_9 [2] : vector<4x8x8xf32> to vector<4x8xf32>
    %17 = vector.shape_cast %16 : vector<4x8xf32> to vector<4x8x1xf32>
    %18 = arith.truncf %15 : vector<4x8x8xf32> to vector<4x8x8xbf16>
    "tpu.trace_start"() <{level = 10 : i32, message = "hqk,hkd->hqd"}> : () -> ()
    %cst_10 = arith.constant dense<0.000000e+00> : vector<4x8x8xf32>
    %19 = tpu.matmul %18, %7, %cst_10 {dimension_numbers = #tpu.dot_dimension_numbers<[2], [1], [1], [2], [0, 0, 0, 1, 1, 2], [0], [0]>} : vector<4x8x8xbf16>, vector<4x8x8xbf16>, vector<4x8x8xf32> -> vector<4x8x8xf32>
    "tpu.trace_stop"() : () -> ()
    %20 = tpu.reciprocal %17 {approx = true} : vector<4x8x1xf32> -> vector<4x8x1xf32>
    %21 = vector.broadcast %20 : vector<4x8x1xf32> to vector<4x8x8xf32>
    %22 = arith.mulf %19, %21 : vector<4x8x8xf32>
    %23 = tpu.transpose %22, [1, 0, 2] : vector<4x8x8xf32> -> vector<8x4x8xf32>
    %24 = arith.truncf %23 : vector<8x4x8xf32> to vector<8x4x8xbf16>
    %c0_11 = arith.constant 0 : index
    %c0_12 = arith.constant 0 : index
    %c0_13 = arith.constant 0 : index
    %c0_14 = arith.constant 0 : index
    %25 = vector.load %arg3[%c0_11, %c0_12, %c0_13, %c0_14] : memref<1x8x4x8xbf16, #tpu.memory_space<vmem>>, vector<1x8x4x8xbf16>
    %26 = vector.shape_cast %25 : vector<1x8x4x8xbf16> to vector<8x4x8xbf16>
    %27 = vector.shape_cast %24 : vector<8x4x8xbf16> to vector<1x8x4x8xbf16>
    tpu.vector_store %arg3[%c0_11, %c0_12, %c0_13, %c0_14], %27 {strides = array<i32>} : memref<1x8x4x8xbf16, #tpu.memory_space<vmem>>, vector<1x8x4x8xbf16>,
    return
  }
  func.func @transform_0(%arg0: i32) -> (i32, i32, i32, i32) {
    %c0_i32 = arith.constant 0 : i32
    %c0_i32_0 = arith.constant 0 : i32
    %c0_i32_1 = arith.constant 0 : i32
    %c0_i32_2 = arith.constant 0 : i32
    return %arg0, %c0_i32, %c0_i32_0, %c0_i32_1 : i32, i32, i32, i32
  }
  func.func @transform_1(%arg0: i32) -> (i32, i32, i32, i32) {
    %c0_i32 = arith.constant 0 : i32
    %c0_i32_0 = arith.constant 0 : i32
    %c0_i32_1 = arith.constant 0 : i32
    %c0_i32_2 = arith.constant 0 : i32
    return %arg0, %c0_i32, %c0_i32_0, %c0_i32_1 : i32, i32, i32, i32
  }
  func.func @transform_2(%arg0: i32) -> (i32, i32, i32, i32) {
    %c0_i32 = arith.constant 0 : i32
    %c0_i32_0 = arith.constant 0 : i32
    %c0_i32_1 = arith.constant 0 : i32
    %c0_i32_2 = arith.constant 0 : i32
    return %arg0, %c0_i32, %c0_i32_0, %c0_i32_1 : i32, i32, i32, i32
  }
}

</mosaic_0001>

<llo_original>
// kernel: transformer_forward.24
$region0: #{transformer_forward.24}
  #allocation0 [shape = 'u32[]', space=smem, size = 0x4, offset = 0x4, fixed_abs, tag = 'smem constant byte address 0x4 - core index']
  #allocation1 [shape = 'u32[144,128]{1,0:T(1,128)}', space=vmem, size = 0x12000, scoped, tag = 'internal scratch']
  %s0 = inlined_call_operand.vmem [shape: bf16[16,32], index: 0, kind: input, shape index: {}]
  %s1 = inlined_call_operand.vmem [shape: bf16[32,96], index: 1, kind: input, shape index: {}]
  %s2 = inlined_call_operand.vmem [shape: f32[1,96], index: 2, kind: input, shape index: {}]
  %s3 = inlined_call_operand.vmem [shape: bf16[16,96], index: 3, kind: output, shape index: {}]
  %s4 = sld [smem:[#allocation0]]
  $region22: #{transformer_forward.24} parent=0
    _
  %s6 = ssub.s32 1, %s4
  %s7 = scalar_select 0, %s6, %s4
  // Predicated region
  $region2: #{transformer_forward.24} parent=0 // pred_check
    _
  $region3: #{transformer_forward.24} parent=0 // pred_check_branch
    %9 = sbr.rel (0) target = $region5
  $region4: #{transformer_forward.24} parent=0 // pred_region
    _
  $region5: #{transformer_forward.24} parent=0 // pred_fallthru
    _
  // Predicated region
  $region6: #{transformer_forward.24} parent=0 // pred_check
    _
  $region7: #{transformer_forward.24} parent=0 // pred_check_branch
    %11 = sbr.rel (0) target = $region9
  $region8: #{transformer_forward.24} parent=0 // pred_region
    _
  $region9: #{transformer_forward.24} parent=0 // pred_fallthru
    _
  // Predicated region
  $region10: #{transformer_forward.24} parent=0 // pred_check
    _
  $region11: #{transformer_forward.24} parent=0 // pred_check_branch
    %13 = sbr.rel (0) target = $region13
  $region12: #{transformer_forward.24} parent=0 // pred_region
    _
  $region13: #{transformer_forward.24} parent=0 // pred_fallthru
    _
  %v15 = vld [vmem:[%s0] sm:$0xf]
  %v16 = vld [vmem:[%s0 + $0x4] sm:$0xf]
  %v17 = vld [vmem:[%s1] sm:$0xf]
  %v18 = vld [vmem:[%s1 + $0x4] sm:$0xf]
  %v19 = vld [vmem:[%s1 + $0x8] sm:$0xf]
  %v20 = vld [vmem:[%s1 + $0xc] sm:$0xf]
  %v21 = vld [vmem:[%s2] sm:$0x1]
  %v23 = vlaneseq
  %v24 = vshrl.u32 %v23, 7
  %v25 = vsub.s32 0, %v24
  %v26 = vrot.slane %v21, %v25
  %v30 = vunpack.c.l.b16 %v15
  %v31 = vunpack.c.l.b16 %v16
  %v32 = vpack.c.b16 %v31, %v30
  %v37 = vunpack.c.l.b16 %v17
  %v38 = vunpack.c.l.b16 %v18
  %v39 = vunpack.c.l.b16 %v19
  %v40 = vunpack.c.l.b16 %v20
  %v41 = vpack.c.b16 %v38, %v37
  %v42 = vpack.c.b16 %v40, %v39
  %vm45 = vcmask 261120
  %v47 = vsel %vm45, %v32, 0
  %49 = vmatprep.subr.bf16.mxu0 0
  %50 = vmatpush1.bf16.msra.mxu0 %v41
  %51 = vmatprep.subr.bf16.mxu0 0
  %52 = vmatpush1.bf16.msra.mxu0 %v42
  %53 = vmatprep.subr.bf16.mxu0 0
  %54 = vmatpush1.bf16.msra.mxu0 0
  %55 = vmatprep.subr.bf16.mxu0 0
  %56 = vmatpush1.bf16.msra.mxu0 0
  %57 = vmatprep.subr.bf16.mxu0 0
  %58 = vmatpush1.bf16.msra.mxu0 0
  %59 = vmatprep.subr.bf16.mxu0 0
  %60 = vmatpush1.bf16.msra.mxu0 0
  %61 = vmatprep.subr.bf16.mxu0 0
  %62 = vmatpush1.bf16.msra.mxu0 0
  %63 = vmatprep.subr.bf16.mxu0 0
  %64 = vmatpush1.bf16.msra.mxu0 0
  %65 = vmatprep.subr.bf16.mxu0 0
  %66 = vmatpush1.bf16.msra.mxu0 0
  %67 = vmatprep.subr.bf16.mxu0 0
  %68 = vmatpush1.bf16.msra.mxu0 0
  %69 = vmatprep.subr.bf16.mxu0 0
  %70 = vmatpush1.bf16.msra.mxu0 0
  %71 = vmatprep.subr.bf16.mxu0 0
  %72 = vmatpush1.bf16.msra.mxu0 0
  %73 = vmatprep.subr.bf16.mxu0 0
  %74 = vmatpush1.bf16.msra.mxu0 0
  %75 = vmatprep.subr.bf16.mxu0 0
  %76 = vmatpush1.bf16.msra.mxu0 0
  %77 = vmatprep.subr.bf16.mxu0 0
  %78 = vmatpush1.bf16.msra.mxu0 0
  %79 = vmatprep.subr.bf16.mxu0 0
  %80 = vmatpush1.bf16.msra.mxu0 0
  %81 = vmatprep.mubr.bf16.mxu0 0
  %82 = vmatmul.mubr.bf16.gmra.mrb[0].mxu0 %v47
  %v83 = vpop.f32.mrb[0].mxu0
  %v84 = vadd.f32 %v26, %v83
  %v85 = vpop.f32.mrb[0].mxu0
  %v86 = vpop.f32.mrb[0].mxu0
  %v87 = vadd.f32 %v26, %v86
  %v88 = vpop.f32.mrb[0].mxu0
  %89 = vdwg.mxu0
  %v90 = vpack.c.bf16 %v87, %v84
  %v92 = vunpack.c.l.b16 %v90
  %v93 = vunpack.c.h.b16 %v90
  %v94 = vpack.c.b16 %v92, %v92
  %v95 = vpack.c.b16 %v93, %v93
  %vm98 = vcmask 781312
  %99 = vst.msk [vmem:[%s3] sm:$0xf] %vm98, %v94
  %100 = vst.msk [vmem:[%s3 + $0x4] sm:$0xf] %vm98, %v95
  // Predicated region
  $region14: #{transformer_forward.24} parent=0 // pred_check
    _
  $region15: #{transformer_forward.24} parent=0 // pred_check_branch
    %102 = sbr.rel (0) target = $region17
  $region16: #{transformer_forward.24} parent=0 // pred_region
    _
  $region17: #{transformer_forward.24} parent=0 // pred_fallthru
    _
  // Predicated region
  $region18: #{transformer_forward.24} parent=0 // pred_check
    _
  $region19: #{transformer_forward.24} parent=0 // pred_check_branch
    %104 = sbr.rel (0) target = $region21
  $region20: #{transformer_forward.24} parent=0 // pred_region
    _
  $region21: #{transformer_forward.24} parent=0 // pred_fallthru
    _

// kernel: transformer_forward.26
$region0: #{transformer_forward.26}
  #allocation0 [shape = 'u32[]', space=smem, size = 0x4, offset = 0x4, fixed_abs, tag = 'smem constant byte address 0x4 - core index']
  #allocation1 [shape = 'u32[144,128]{1,0:T(1,128)}', space=vmem, size = 0x12000, scoped, tag = 'internal scratch']
  %s0 = inlined_call_operand.vmem [shape: bf16[16,32], index: 0, kind: input, shape index: {}]
  %s1 = inlined_call_operand.vmem [shape: bf16[16,32], index: 1, kind: input, shape index: {}]
  %s2 = inlined_call_operand.vmem [shape: bf16[32,32], index: 2, kind: input, shape index: {}]
  %s3 = inlined_call_operand.vmem [shape: f32[1,32], index: 3, kind: input, shape index: {}]
  %s4 = inlined_call_operand.vmem [shape: f32[1,32], index: 4, kind: input, shape index: {}]
  %s5 = inlined_call_operand.vmem [shape: f32[1,32], index: 5, kind: input, shape index: {}]
  %s6 = inlined_call_operand.vmem [shape: bf16[16,32], index: 6, kind: output, shape index: {}]
  %s7 = sld [smem:[#allocation0]]
  $region34: #{transformer_forward.26} parent=0
    _
  %s9 = ssub.s32 1, %s7
  %s10 = scalar_select 0, %s9, %s7
  // Predicated region
  $region2: #{transformer_forward.26} parent=0 // pred_check
    _
  $region3: #{transformer_forward.26} parent=0 // pred_check_branch
    %12 = sbr.rel (0) target = $region5
  $region4: #{transformer_forward.26} parent=0 // pred_region
    _
  $region5: #{transformer_forward.26} parent=0 // pred_fallthru
    _
  // Predicated region
  $region6: #{transformer_forward.26} parent=0 // pred_check
    _
  $region7: #{transformer_forward.26} parent=0 // pred_check_branch
    %14 = sbr.rel (0) target = $region9
  $region8: #{transformer_forward.26} parent=0 // pred_region
    _
  $region9: #{transformer_forward.26} parent=0 // pred_fallthru
    _
  // Predicated region
  $region10: #{transformer_forward.26} parent=0 // pred_check
    _
  $region11: #{transformer_forward.26} parent=0 // pred_check_branch
    %16 = sbr.rel (0) target = $region13
  $region12: #{transformer_forward.26} parent=0 // pred_region
    _
  $region13: #{transformer_forward.26} parent=0 // pred_fallthru
    _
  // Predicated region
  $region14: #{transformer_forward.26} parent=0 // pred_check
    _
  $region15: #{transformer_forward.26} parent=0 // pred_check_branch
    %18 = sbr.rel (0) target = $region17
  $region16: #{transformer_forward.26} parent=0 // pred_region
    _
  $region17: #{transformer_forward.26} parent=0 // pred_fallthru
    _
  // Predicated region
  $region18: #{transformer_forward.26} parent=0 // pred_check
    _
  $region19: #{transformer_forward.26} parent=0 // pred_check_branch
    %20 = sbr.rel (0) target = $region21
  $region20: #{transformer_forward.26} parent=0 // pred_region
    _
  $region21: #{transformer_forward.26} parent=0 // pred_fallthru
    _
  // Predicated region
  $region22: #{transformer_forward.26} parent=0 // pred_check
    _
  $region23: #{transformer_forward.26} parent=0 // pred_check_branch
    %22 = sbr.rel (0) target = $region25
  $region24: #{transformer_forward.26} parent=0 // pred_region
    _
  $region25: #{transformer_forward.26} parent=0 // pred_fallthru
    _
  %v24 = vld [vmem:[%s0] sm:$0xf]
  %v25 = vld [vmem:[%s0 + $0x4] sm:$0xf]
  %v26 = vld [vmem:[%s2] sm:$0xf]
  %v27 = vld [vmem:[%s2 + $0x4] sm:$0xf]
  %v28 = vld [vmem:[%s2 + $0x8] sm:$0xf]
  %v29 = vld [vmem:[%s2 + $0xc] sm:$0xf]
  %v30 = vld [vmem:[%s3] sm:$0x1]
  %v32 = vlaneseq
  %v33 = vshrl.u32 %v32, 7
  %v34 = vsub.s32 0, %v33
  %v35 = vrot.slane %v30, %v34
  %v39 = vunpack.c.l.b16 %v24
  %v40 = vunpack.c.l.b16 %v25
  %v41 = vpack.c.b16 %v40, %v39
  %v46 = vunpack.c.l.b16 %v26
  %v47 = vunpack.c.l.b16 %v27
  %v48 = vunpack.c.l.b16 %v28
  %v49 = vunpack.c.l.b16 %v29
  %v50 = vpack.c.b16 %v47, %v46
  %v51 = vpack.c.b16 %v49, %v48
  %vm54 = vcmask 261120
  %v56 = vsel %vm54, %v41, 0
  %58 = vmatprep.subr.bf16.mxu0 0
  %59 = vmatpush1.bf16.msra.mxu0 %v50
  %60 = vmatprep.subr.bf16.mxu0 0
  %61 = vmatpush1.bf16.msra.mxu0 %v51
  %62 = vmatprep.subr.bf16.mxu0 0
  %63 = vmatpush1.bf16.msra.mxu0 0
  %64 = vmatprep.subr.bf16.mxu0 0
  %65 = vmatpush1.bf16.msra.mxu0 0
  %66 = vmatprep.subr.bf16.mxu0 0
  %67 = vmatpush1.bf16.msra.mxu0 0
  %68 = vmatprep.subr.bf16.mxu0 0
  %69 = vmatpush1.bf16.msra.mxu0 0
  %70 = vmatprep.subr.bf16.mxu0 0
  %71 = vmatpush1.bf16.msra.mxu0 0
  %72 = vmatprep.subr.bf16.mxu0 0
  %73 = vmatpush1.bf16.msra.mxu0 0
  %74 = vmatprep.subr.bf16.mxu0 0
  %75 = vmatpush1.bf16.msra.mxu0 0
  %76 = vmatprep.subr.bf16.mxu0 0
  %77 = vmatpush1.bf16.msra.mxu0 0
  %78 = vmatprep.subr.bf16.mxu0 0
  %79 = vmatpush1.bf16.msra.mxu0 0
  %80 = vmatprep.subr.bf16.mxu0 0
  %81 = vmatpush1.bf16.msra.mxu0 0
  %82 = vmatprep.subr.bf16.mxu0 0
  %83 = vmatpush1.bf16.msra.mxu0 0
  %84 = vmatprep.subr.bf16.mxu0 0
  %85 = vmatpush1.bf16.msra.mxu0 0
  %86 = vmatprep.subr.bf16.mxu0 0
  %87 = vmatpush1.bf16.msra.mxu0 0
  %88 = vmatprep.subr.bf16.mxu0 0
  %89 = vmatpush1.bf16.msra.mxu0 0
  %90 = vmatprep.mubr.bf16.mxu0 0
  %91 = vmatmul.mubr.bf16.gmra.mrb[0].mxu0 %v56
  %v92 = vpop.f32.mrb[0].mxu0
  %v93 = vadd.f32 %v35, %v92
  %v94 = vpop.f32.mrb[0].mxu0
  %v95 = vpop.f32.mrb[0].mxu0
  %v96 = vadd.f32 %v35, %v95
  %v97 = vpop.f32.mrb[0].mxu0
  %98 = vdwg.mxu0
  %v99 = vld [vmem:[%s1] sm:$0xf]
  %v100 = vld [vmem:[%s1 + $0x4] sm:$0xf]
  %v101 = vunpack.c.l.bf16 %v99
  %v102 = vunpack.c.l.bf16 %v100
  %v103 = vadd.f32 %v93, %v101
  %v104 = vadd.f32 %v96, %v102
  %v105 = vsel %vm54, %v103, 0.0
  %106 = vadd.xlane.f32.xlu0 %v105
  %v107 = vpop.xlane.xlu0 %106
  %v108 = vsel %vm54, %v104, 0.0
  %109 = vadd.xlane.f32.xlu0 %v108
  %v110 = vpop.xlane.xlu0 %109
  %v111 = vrcp.pop 32.0
  %v112 = vmul.f32 %v107, %v111
  %v113 = vmul.f32 %v110, %v111
  %v114 = vsub.f32 %v103, %v112
  %v115 = vsub.f32 %v104, %v113
  %v116 = vmul.f32 %v114, %v114
  %v117 = vmul.f32 %v115, %v115
  %v118 = vsel %vm54, %v116, 0.0
  %119 = vadd.xlane.f32.xlu0 %v118
  %v120 = vpop.xlane.xlu0 %119
  %v121 = vsel %vm54, %v117, 0.0
  %122 = vadd.xlane.f32.xlu0 %v121
  %v123 = vpop.xlane.xlu0 %122
  %v124 = vmul.f32 %v120, %v111
  %v125 = vmul.f32 %v123, %v111
  %v126 = vadd.f32 %v124, 1e-05
  %v127 = vadd.f32 %v125, 1e-05
  %v128 = vrsqrt.pop %v126
  %v129 = vrsqrt.pop %v127
  %v130 = vmul.f32 %v114, %v128
  %v131 = vmul.f32 %v115, %v129
  %v132 = vld [vmem:[%s4] sm:$0x1]
  %v134 = vlaneseq
  %v135 = vshrl.u32 %v134, 7
  %v136 = vsub.s32 0, %v135
  %v137 = vrot.slane %v132, %v136
  %v139 = vmul.f32 %v130, %v137
  %v140 = vmul.f32 %v131, %v137
  %v141 = vld [vmem:[%s5] sm:$0x1]
  %v143 = vlaneseq
  %v144 = vshrl.u32 %v143, 7
  %v145 = vsub.s32 0, %v144
  %v146 = vrot.slane %v141, %v145
  %v148 = vadd.f32 %v139, %v146
  %v149 = vadd.f32 %v140, %v146
  %v150 = vpack.c.bf16 %v149, %v148
  %v152 = vunpack.c.l.b16 %v150
  %v153 = vunpack.c.h.b16 %v150
  %v154 = vpack.c.b16 %v152, %v152
  %v155 = vpack.c.b16 %v153, %v153
  %vm158 = vcmask 257024
  %159 = vst.msk [vmem:[%s6] sm:$0xf] %vm158, %v154
  %160 = vst.msk [vmem:[%s6 + $0x4] sm:$0xf] %vm158, %v155
  // Predicated region
  $region26: #{transformer_forward.26} parent=0 // pred_check
    _
  $region27: #{transformer_forward.26} parent=0 // pred_check_branch
    %162 = sbr.rel (0) target = $region29
  $region28: #{transformer_forward.26} parent=0 // pred_region
    _
  $region29: #{transformer_forward.26} parent=0 // pred_fallthru
    _
  // Predicated region
  $region30: #{transformer_forward.26} parent=0 // pred_check
    _
  $region31: #{transformer_forward.26} parent=0 // pred_check_branch
    %164 = sbr.rel (0) target = $region33
  $region32: #{transformer_forward.26} parent=0 // pred_region
    _
  $region33: #{transformer_forward.26} parent=0 // pred_fallthru
    _

// kernel: transformer_forward.25
$region0: #{transformer_forward.25}
  #allocation0 [shape = 'u32[]', space=smem, size = 0x4, offset = 0x4, fixed_abs, tag = 'smem constant byte address 0x4 - core index']
  #allocation1 [shape = 'u32[144,128]{1,0:T(1,128)}', space=vmem, size = 0x12000, scoped, tag = 'internal scratch']
  %s0 = inlined_call_operand.vmem [shape: bf16[2,8,12,8], index: 0, kind: input, shape index: {}]
  %s1 = inlined_call_operand.vmem [shape: bf16[2,8,4,8], index: 1, kind: output, shape index: {}]
  %s2 = sld [smem:[#allocation0]]
  $region37: #{transformer_forward.25} parent=0
    _
  %s4 = ssub.s32 1, %s2
  %s5 = scalar_select 0, %s4, %s2
  loop: start=0, step=1, limit=4
  $region2: #{transformer_forward.25} parent=0 // loop_pre_header
    _
  $region3: #{transformer_forward.25} parent=0 // loop_header
    %s7 = sphi 0, %s11
    %p8 = scmp.ge.s32.totalorder %s7, 4
    %s17 = sphi 0, %s19
    %s20 = sphi 0, %s17
    %s21 = sphi 0, %s20
    %s37 = sphi 0, %s21
    %s43 = sphi 0, %s45
    %s46 = sphi 0, %s43
    %s47 = sphi 0, %s46
    %s63 = sphi 0, %s47
  $region4: #{transformer_forward.25} parent=0 // loop_header_branch
    %10 = sbr.rel (%p8) target = $region8
  $region5: #{transformer_forward.25} parent=0 // loop_body
    %s12 = ssub.s32 %s7, 1
    %s13 = ssub.s32 %s7, 2
    %s14 = sadd.s32 %s7, 1
    %s15 = ssub.s32 %s7, %s14
    %p16 = scmp.eq.s32.totalorder %s15, 0
    %s18 = sadd.s32 %s17, 1
    %s19 = scalar_select %p16, %s17, %s18
    %p22 = pneg %p16
    %p23 = scmp.eq.s32.totalorder %s7, 1
    %p24 = por %p22, %p23
    %p25 = scmp.ne.s32.totalorder %s17, %s20
    %p26 = scmp.eq.s32.totalorder %s7, 0
    %p27 = por %p25, %p26
    %p28 = scmp.ne.s32.totalorder %s17, %s20
    %p29 = scmp.eq.s32.totalorder %s12, 1
    %p30 = por %p28, %p29
    %p31 = scmp.ne.s32.totalorder %s20, %s21
    %p32 = scmp.eq.s32.totalorder %s12, 0
    %p33 = por %p31, %p32
    %p34 = scmp.ne.s32.totalorder %s20, %s21
    %p35 = scmp.eq.s32.totalorder %s13, 1
    %p36 = por %p34, %p35
    %p38 = scmp.ne.s32.totalorder %s21, %s37
    %p39 = scmp.eq.s32.totalorder %s13, 0
    %p40 = por %p38, %p39
    %s41 = ssub.s32 %s7, %s14
    %p42 = scmp.eq.s32.totalorder %s41, 0
    %s44 = sadd.s32 %s43, 1
    %s45 = scalar_select %p42, %s43, %s44
    %p48 = pneg %p42
    %p49 = scmp.eq.s32.totalorder %s7, 1
    %p50 = por %p48, %p49
    %p51 = scmp.ne.s32.totalorder %s43, %s46
    %p52 = scmp.eq.s32.totalorder %s7, 0
    %p53 = por %p51, %p52
    %p54 = scmp.ne.s32.totalorder %s43, %s46
    %p55 = scmp.eq.s32.totalorder %s12, 1
    %p56 = por %p54, %p55
    %p57 = scmp.ne.s32.totalorder %s46, %s47
    %p58 = scmp.eq.s32.totalorder %s12, 0
    %p59 = por %p57, %p58
    %p60 = scmp.ne.s32.totalorder %s46, %s47
    %p61 = scmp.eq.s32.totalorder %s13, 1
    %p62 = por %p60, %p61
    %p64 = scmp.ne.s32.totalorder %s47, %s63
    %p65 = scmp.eq.s32.totalorder %s13, 0
    %p66 = por %p64, %p65
    %p67 = scmp.le.s32.totalorder 1, %s7
    %p68 = scmp.lt.s32.totalorder %s7, 3
    %p69 = pnand %p67, %p68
    %p70 = pneg %p69
    // Predicated region
    $region9: #{transformer_forward.25} parent=5 // pred_check
      _
    $region10: #{transformer_forward.25} parent=5 // pred_check_branch
      %72 = sbr.rel (%p69) target = $region12
    $region11: #{transformer_forward.25} parent=5 // pred_region
      %s73 = ssub.s32 %s7, 1
    $region12: #{transformer_forward.25} parent=5 // pred_fallthru
      _
    %p74 = scmp.lt.s32.totalorder %s7, 2
    // Predicated region
    $region13: #{transformer_forward.25} parent=5 // pred_check
      %p75 = pneg %p74
    $region14: #{transformer_forward.25} parent=5 // pred_check_branch
      %77 = sbr.rel (%p75) target = $region16
    $region15: #{transformer_forward.25} parent=5 // pred_region
      // Predicated region
      $region17: #{transformer_forward.25} parent=15 // pred_check
        %p78 = pneg %p27
      $region18: #{transformer_forward.25} parent=15 // pred_check_branch
        %80 = sbr.rel (%p78) target = $region20
      $region19: #{transformer_forward.25} parent=15 // pred_region
        %p81 = scmp.lt.s32.totalorder %s7, 1
        %s82 = scalar_select %p81, %s7, 1
        %s83 = smul.addr %s82, 16
        %s84 = smul.addr %s83, 4
        %s85 = scalar_lea.vmem %s0, %s84
      $region20: #{transformer_forward.25} parent=15 // pred_fallthru
        _
    $region16: #{transformer_forward.25} parent=5 // pred_fallthru
      _
    %p86 = scmp.le.s32.totalorder 1, %s7
    %p87 = scmp.lt.s32.totalorder %s7, 3
    %p88 = pnand %p86, %p87
    %p89 = pneg %p88
    // Predicated region
    $region21: #{transformer_forward.25} parent=5 // pred_check
      _
    $region22: #{transformer_forward.25} parent=5 // pred_check_branch
      %91 = sbr.rel (%p88) target = $region24
    $region23: #{transformer_forward.25} parent=5 // pred_region
      %s92 = ssub.s32 %s7, 1
      %p93 = scmp.lt.s32.totalorder %s12, 1
      %s94 = scalar_select %p93, %s12, 1
      %s95 = smul.addr %s94, 16
      %s96 = smul.addr %s95, 4
      %s97 = scalar_lea.vmem %s0, %s96
      %p98 = pneg %p33
      %p99 = pneg %p30
      %p100 = pneg %p59
      %p101 = pneg %p56
      %p102 = scmp.lt.s32.totalorder %s12, 1
      %s103 = scalar_select %p102, %s12, 1
      %s104 = smul.addr %s103, 8
      %s105 = smul.addr %s104, 2
      %s106 = scalar_lea.vmem %s1, %s105
      %p107 = scmp.lt.s32.totalorder %s12, 1
      %s108 = scalar_select %p107, %s12, 1
      %s109 = smul.addr %s108, 16
      %s110 = smul.addr %s109, 4
      %s111 = scalar_lea.vmem %s0, %s110
      %p112 = scmp.lt.s32.totalorder %s12, 1
      %s113 = scalar_select %p112, %s12, 1
      %s114 = smul.addr %s113, 8
      %s115 = smul.addr %s114, 2
      %s116 = scalar_lea.vmem %s1, %s115
      %v118 = vld [vmem:[%s111] sm:$0xf]
      %v119 = vld [vmem:[%s111 + $0x4] sm:$0x3]
      %v120 = vld [vmem:[%s111 + $0x8] sm:$0xf]
      %v121 = vld [vmem:[%s111 + $0xc] sm:$0x3]
      %v122 = vld [vmem:[%s111 + $0x10] sm:$0xf]
      %v123 = vld [vmem:[%s111 + $0x14] sm:$0x3]
      %v124 = vld [vmem:[%s111 + $0x18] sm:$0xf]
      %v125 = vld [vmem:[%s111 + $0x1c] sm:$0x3]
      %v126 = vld [vmem:[%s111 + $0x20] sm:$0xf]
      %v127 = vld [vmem:[%s111 + $0x24] sm:$0x3]
      %v128 = vld [vmem:[%s111 + $0x28] sm:$0xf]
      %v129 = vld [vmem:[%s111 + $0x2c] sm:$0x3]
      %v130 = vld [vmem:[%s111 + $0x30] sm:$0xf]
      %v131 = vld [vmem:[%s111 + $0x34] sm:$0x3]
      %v132 = vld [vmem:[%s111 + $0x38] sm:$0xf]
      %v133 = vld [vmem:[%s111 + $0x3c] sm:$0x3]
      %v134 = vcombine.low %v118, %v126
      %v136 = vunpack.c.l.s4 1983009808
      %v137 = vunpack.c.0.s8 %v136
      %v138 = vlaneseq
      %v139 = vshrl.u32 %v138, 7
      %v140 = vsub.s32 %v137, %v139
      %v141 = vrot.slane %v134, %v140
      %v142 = vcombine.low %v122, %v130
      %v144 = vunpack.c.l.s4 1983009808
      %v145 = vunpack.c.0.s8 %v144
      %v146 = vlaneseq
      %v147 = vshrl.u32 %v146, 7
      %v148 = vsub.s32 %v145, %v147
      %v149 = vrot.slane %v142, %v148
      %v150 = vcombine.low %v141, %v149
      %v151 = vcombine.high %v141, %v149
      %v153 = vunpack.c.l.s4 1934713408
      %v154 = vunpack.c.0.s8 %v153
      %v155 = vlaneseq
      %v156 = vshrl.u32 %v155, 7
      %v157 = vsub.s32 %v154, %v156
      %v158 = vrot.slane %v150, %v157
      %v160 = vunpack.c.l.s4 1934713408
      %v161 = vunpack.c.0.s8 %v160
      %v162 = vlaneseq
      %v163 = vshrl.u32 %v162, 7
      %v164 = vsub.s32 %v161, %v163
      %v165 = vrot.slane %v151, %v164
      %v166 = vcombine.high %v158, 0
      %v167 = vcombine.high %v165, 0
      %v168 = vcombine.low %v120, %v128
      %v170 = vunpack.c.l.s4 1983009808
      %v171 = vunpack.c.0.s8 %v170
      %v172 = vlaneseq
      %v173 = vshrl.u32 %v172, 7
      %v174 = vsub.s32 %v171, %v173
      %v175 = vrot.slane %v168, %v174
      %v176 = vcombine.low %v124, %v132
      %v178 = vunpack.c.l.s4 1983009808
      %v179 = vunpack.c.0.s8 %v178
      %v180 = vlaneseq
      %v181 = vshrl.u32 %v180, 7
      %v182 = vsub.s32 %v179, %v181
      %v183 = vrot.slane %v176, %v182
      %v184 = vcombine.low %v175, %v183
      %v185 = vcombine.high %v175, %v183
      %v187 = vunpack.c.l.s4 1934713408
      %v188 = vunpack.c.0.s8 %v187
      %v189 = vlaneseq
      %v190 = vshrl.u32 %v189, 7
      %v191 = vsub.s32 %v188, %v190
      %v192 = vrot.slane %v184, %v191
      %v194 = vunpack.c.l.s4 1934713408
      %v195 = vunpack.c.0.s8 %v194
      %v196 = vlaneseq
      %v197 = vshrl.u32 %v196, 7
      %v198 = vsub.s32 %v195, %v197
      %v199 = vrot.slane %v185, %v198
      %v200 = vcombine.high %v192, 0
      %v201 = vcombine.high %v199, 0
      %v202 = vcombine.low %v119, %v127
      %v204 = vunpack.c.l.s4 1983009808
      %v205 = vunpack.c.0.s8 %v204
      %v206 = vlaneseq
      %v207 = vshrl.u32 %v206, 7
      %v208 = vsub.s32 %v205, %v207
      %v209 = vrot.slane %v202, %v208
      %v210 = vcombine.low %v123, %v131
      %v212 = vunpack.c.l.s4 1983009808
      %v213 = vunpack.c.0.s8 %v212
      %v214 = vlaneseq
      %v215 = vshrl.u32 %v214, 7
      %v216 = vsub.s32 %v213, %v215
      %v217 = vrot.slane %v210, %v216
      %v218 = vcombine.low %v209, %v217
      %v220 = vunpack.c.l.s4 1934713408
      %v221 = vunpack.c.0.s8 %v220
      %v222 = vlaneseq
      %v223 = vshrl.u32 %v222, 7
      %v224 = vsub.s32 %v221, %v223
      %v225 = vrot.slane %v218, %v224
      %v226 = vcombine.high %v225, 0
      %v227 = vcombine.low %v121, %v129
      %v229 = vunpack.c.l.s4 1983009808
      %v230 = vunpack.c.0.s8 %v229
      %v231 = vlaneseq
      %v232 = vshrl.u32 %v231, 7
      %v233 = vsub.s32 %v230, %v232
      %v234 = vrot.slane %v227, %v233
      %v235 = vcombine.low %v125, %v133
      %v237 = vunpack.c.l.s4 1983009808
      %v238 = vunpack.c.0.s8 %v237
      %v239 = vlaneseq
      %v240 = vshrl.u32 %v239, 7
      %v241 = vsub.s32 %v238, %v240
      %v242 = vrot.slane %v235, %v241
      %v243 = vcombine.low %v234, %v242
      %v245 = vunpack.c.l.s4 1934713408
      %v246 = vunpack.c.0.s8 %v245
      %v247 = vlaneseq
      %v248 = vshrl.u32 %v247, 7
      %v249 = vsub.s32 %v246, %v248
      %v250 = vrot.slane %v243, %v249
      %v251 = vcombine.high %v250, 0
      %v254 = vpack.i.b16 %v192, %v158
      %v255 = vshrl.u32 %v158, 16
      %v256 = vshrl.u32 %v192, 16
      %v257 = vpack.i.b16 %v256, %v255
      %v260 = vpack.i.b16 %v200, %v166
      %v261 = vshrl.u32 %v166, 16
      %v262 = vshrl.u32 %v200, 16
      %v263 = vpack.i.b16 %v262, %v261
      %v266 = vpack.i.b16 %v199, %v165
      %v267 = vshrl.u32 %v165, 16
      %v268 = vshrl.u32 %v199, 16
      %v269 = vpack.i.b16 %v268, %v267
      %v272 = vpack.i.b16 %v201, %v167
      %v273 = vshrl.u32 %v167, 16
      %v274 = vshrl.u32 %v201, 16
      %v275 = vpack.i.b16 %v274, %v273
      %v278 = vpack.i.b16 %v250, %v225
      %v279 = vshrl.u32 %v225, 16
      %v280 = vshrl.u32 %v250, 16
      %v281 = vpack.i.b16 %v280, %v279
      %v284 = vpack.i.b16 %v251, %v226
      %v285 = vshrl.u32 %v226, 16
      %v286 = vshrl.u32 %v251, 16
      %v287 = vpack.i.b16 %v286, %v285
      %vm288 = vcmask 64512
      %v290 = vsel %vm288, %v254, 0
      %v293 = vsel %vm288, %v266, 0
      %295 = vmatprep.subr.bf16.mxu0 0
      %296 = vmatpush1.bf16.xpose.msra.mxu0 %v293
      %297 = vmatprep.subr.bf16.mxu0 0
      %298 = vmatpush1.bf16.xpose.msra.mxu0 0
      %299 = vmatprep.subr.bf16.mxu0 0
      %300 = vmatpush1.bf16.xpose.msra.mxu0 0
      %301 = vmatprep.subr.bf16.mxu0 0
      %302 = vmatpush1.bf16.xpose.msra.mxu0 0
      %303 = vmatprep.subr.bf16.mxu0 0
      %304 = vmatpush1.bf16.xpose.msra.mxu0 0
      %305 = vmatprep.subr.bf16.mxu0 0
      %306 = vmatpush1.bf16.xpose.msra.mxu0 0
      %307 = vmatprep.subr.bf16.mxu0 0
      %308 = vmatpush1.bf16.xpose.msra.mxu0 0
      %309 = vmatprep.subr.bf16.mxu0 0
      %310 = vmatpush1.bf16.xpose.msra.mxu0 0
      %311 = vmatprep.subr.bf16.mxu0 0
      %312 = vmatpush1.bf16.xpose.msra.mxu0 0
      %313 = vmatprep.subr.bf16.mxu0 0
      %314 = vmatpush1.bf16.xpose.msra.mxu0 0
      %315 = vmatprep.subr.bf16.mxu0 0
      %316 = vmatpush1.bf16.xpose.msra.mxu0 0
      %317 = vmatprep.subr.bf16.mxu0 0
      %318 = vmatpush1.bf16.xpose.msra.mxu0 0
      %319 = vmatprep.subr.bf16.mxu0 0
      %320 = vmatpush1.bf16.xpose.msra.mxu0 0
      %321 = vmatprep.subr.bf16.mxu0 0
      %322 = vmatpush1.bf16.xpose.msra.mxu0 0
      %323 = vmatprep.subr.bf16.mxu0 0
      %324 = vmatpush1.bf16.xpose.msra.mxu0 0
      %325 = vmatprep.subr.bf16.mxu0 0
      %326 = vmatpush1.bf16.xpose.msra.mxu0 0
      %327 = vmatprep.mubr.bf16.mxu0 0
      %328 = vmatmul.mubr.bf16.gmra.mrb[0].mxu0 %v290
      %v329 = vpop.f32.mrb[0].mxu0
      %v330 = vadd.f32 0.0, %v329
      %v331 = vpop.f32.mrb[0].mxu0
      %v332 = vpop.f32.mrb[0].mxu0
      %v333 = vpop.f32.mrb[0].mxu0
      %334 = vdwg.mxu0
      %v336 = vsel %vm288, %v257, 0
      %v339 = vsel %vm288, %v269, 0
      %341 = vmatprep.subr.bf16.mxu0 0
      %342 = vmatpush1.bf16.xpose.msra.mxu0 %v339
      %343 = vmatprep.subr.bf16.mxu0 0
      %344 = vmatpush1.bf16.xpose.msra.mxu0 0
      %345 = vmatprep.subr.bf16.mxu0 0
      %346 = vmatpush1.bf16.xpose.msra.mxu0 0
      %347 = vmatprep.subr.bf16.mxu0 0
      %348 = vmatpush1.bf16.xpose.msra.mxu0 0
      %349 = vmatprep.subr.bf16.mxu0 0
      %350 = vmatpush1.bf16.xpose.msra.mxu0 0
      %351 = vmatprep.subr.bf16.mxu0 0
      %352 = vmatpush1.bf16.xpose.msra.mxu0 0
      %353 = vmatprep.subr.bf16.mxu0 0
      %354 = vmatpush1.bf16.xpose.msra.mxu0 0
      %355 = vmatprep.subr.bf16.mxu0 0
      %356 = vmatpush1.bf16.xpose.msra.mxu0 0
      %357 = vmatprep.subr.bf16.mxu0 0
      %358 = vmatpush1.bf16.xpose.msra.mxu0 0
      %359 = vmatprep.subr.bf16.mxu0 0
      %360 = vmatpush1.bf16.xpose.msra.mxu0 0
      %361 = vmatprep.subr.bf16.mxu0 0
      %362 = vmatpush1.bf16.xpose.msra.mxu0 0
      %363 = vmatprep.subr.bf16.mxu0 0
      %364 = vmatpush1.bf16.xpose.msra.mxu0 0
      %365 = vmatprep.subr.bf16.mxu0 0
      %366 = vmatpush1.bf16.xpose.msra.mxu0 0
      %367 = vmatprep.subr.bf16.mxu0 0
      %368 = vmatpush1.bf16.xpose.msra.mxu0 0
      %369 = vmatprep.subr.bf16.mxu0 0
      %370 = vmatpush1.bf16.xpose.msra.mxu0 0
      %371 = vmatprep.subr.bf16.mxu0 0
      %372 = vmatpush1.bf16.xpose.msra.mxu0 0
      %373 = vmatprep.mubr.bf16.mxu0 0
      %374 = vmatmul.mubr.bf16.gmra.mrb[0].mxu0 %v336
      %v375 = vpop.f32.mrb[0].mxu0
      %v376 = vadd.f32 0.0, %v375
      %v377 = vpop.f32.mrb[0].mxu0
      %v378 = vpop.f32.mrb[0].mxu0
      %v379 = vpop.f32.mrb[0].mxu0
      %380 = vdwg.mxu0
      %v382 = vsel %vm288, %v260, 0
      %v385 = vsel %vm288, %v272, 0
      %387 = vmatprep.subr.bf16.mxu0 0
      %388 = vmatpush1.bf16.xpose.msra.mxu0 %v385
      %389 = vmatprep.subr.bf16.mxu0 0
      %390 = vmatpush1.bf16.xpose.msra.mxu0 0
      %391 = vmatprep.subr.bf16.mxu0 0
      %392 = vmatpush1.bf16.xpose.msra.mxu0 0
      %393 = vmatprep.subr.bf16.mxu0 0
      %394 = vmatpush1.bf16.xpose.msra.mxu0 0
      %395 = vmatprep.subr.bf16.mxu0 0
      %396 = vmatpush1.bf16.xpose.msra.mxu0 0
      %397 = vmatprep.subr.bf16.mxu0 0
      %398 = vmatpush1.bf16.xpose.msra.mxu0 0
      %399 = vmatprep.subr.bf16.mxu0 0
      %400 = vmatpush1.bf16.xpose.msra.mxu0 0
      %401 = vmatprep.subr.bf16.mxu0 0
      %402 = vmatpush1.bf16.xpose.msra.mxu0 0
      %403 = vmatprep.subr.bf16.mxu0 0
      %404 = vmatpush1.bf16.xpose.msra.mxu0 0
      %405 = vmatprep.subr.bf16.mxu0 0
      %406 = vmatpush1.bf16.xpose.msra.mxu0 0
      %407 = vmatprep.subr.bf16.mxu0 0
      %408 = vmatpush1.bf16.xpose.msra.mxu0 0
      %409 = vmatprep.subr.bf16.mxu0 0
      %410 = vmatpush1.bf16.xpose.msra.mxu0 0
      %411 = vmatprep.subr.bf16.mxu0 0
      %412 = vmatpush1.bf16.xpose.msra.mxu0 0
      %413 = vmatprep.subr.bf16.mxu0 0
      %414 = vmatpush1.bf16.xpose.msra.mxu0 0
      %415 = vmatprep.subr.bf16.mxu0 0
      %416 = vmatpush1.bf16.xpose.msra.mxu0 0
      %417 = vmatprep.subr.bf16.mxu0 0
      %418 = vmatpush1.bf16.xpose.msra.mxu0 0
      %419 = vmatprep.mubr.bf16.mxu0 0
      %420 = vmatmul.mubr.bf16.gmra.mrb[0].mxu0 %v382
      %v421 = vpop.f32.mrb[0].mxu0
      %v422 = vadd.f32 0.0, %v421
      %v423 = vpop.f32.mrb[0].mxu0
      %v424 = vpop.f32.mrb[0].mxu0
      %v425 = vpop.f32.mrb[0].mxu0
      %426 = vdwg.mxu0
      %v428 = vsel %vm288, %v263, 0
      %v431 = vsel %vm288, %v275, 0
      %433 = vmatprep.subr.bf16.mxu0 0
      %434 = vmatpush1.bf16.xpose.msra.mxu0 %v431
      %435 = vmatprep.subr.bf16.mxu0 0
      %436 = vmatpush1.bf16.xpose.msra.mxu0 0
      %437 = vmatprep.subr.bf16.mxu0 0
      %438 = vmatpush1.bf16.xpose.msra.mxu0 0
      %439 = vmatprep.subr.bf16.mxu0 0
      %440 = vmatpush1.bf16.xpose.msra.mxu0 0
      %441 = vmatprep.subr.bf16.mxu0 0
      %442 = vmatpush1.bf16.xpose.msra.mxu0 0
      %443 = vmatprep.subr.bf16.mxu0 0
      %444 = vmatpush1.bf16.xpose.msra.mxu0 0
      %445 = vmatprep.subr.bf16.mxu0 0
      %446 = vmatpush1.bf16.xpose.msra.mxu0 0
      %447 = vmatprep.subr.bf16.mxu0 0
      %448 = vmatpush1.bf16.xpose.msra.mxu0 0
      %449 = vmatprep.subr.bf16.mxu0 0
      %450 = vmatpush1.bf16.xpose.msra.mxu0 0
      %451 = vmatprep.subr.bf16.mxu0 0
      %452 = vmatpush1.bf16.xpose.msra.mxu0 0
      %453 = vmatprep.subr.bf16.mxu0 0
      %454 = vmatpush1.bf16.xpose.msra.mxu0 0
      %455 = vmatprep.subr.bf16.mxu0 0
      %456 = vmatpush1.bf16.xpose.msra.mxu0 0
      %457 = vmatprep.subr.bf16.mxu0 0
      %458 = vmatpush1.bf16.xpose.msra.mxu0 0
      %459 = vmatprep.subr.bf16.mxu0 0
      %460 = vmatpush1.bf16.xpose.msra.mxu0 0
      %461 = vmatprep.subr.bf16.mxu0 0
      %462 = vmatpush1.bf16.xpose.msra.mxu0 0
      %463 = vmatprep.subr.bf16.mxu0 0
      %464 = vmatpush1.bf16.xpose.msra.mxu0 0
      %465 = vmatprep.mubr.bf16.mxu0 0
      %466 = vmatmul.mubr.bf16.gmra.mrb[0].mxu0 %v428
      %v467 = vpop.f32.mrb[0].mxu0
      %v468 = vadd.f32 0.0, %v467
      %v469 = vpop.f32.mrb[0].mxu0
      %v470 = vpop.f32.mrb[0].mxu0
      %v471 = vpop.f32.mrb[0].mxu0
      %472 = vdwg.mxu0
      %v473 = vmul.f32 %v330, 0.35355338
      %v474 = vmul.f32 %v376, 0.35355338
      %v475 = vmul.f32 %v422, 0.35355338
      %v476 = vmul.f32 %v468, 0.35355338
      %v477 = vsel %vm288, %v473, -inf
      %478 = vmax.xlane.f32.xlu0 %v477
      %v479 = vpop.xlane.xlu0 %478
      %v480 = vsel %vm288, %v474, -inf
      %481 = vmax.xlane.f32.xlu0 %v480
      %v482 = vpop.xlane.xlu0 %481
      %v483 = vsel %vm288, %v475, -inf
      %484 = vmax.xlane.f32.xlu0 %v483
      %v485 = vpop.xlane.xlu0 %484
      %v486 = vsel %vm288, %v476, -inf
      %487 = vmax.xlane.f32.xlu0 %v486
      %v488 = vpop.xlane.xlu0 %487
      %v489 = vsub.f32 %v473, %v479
      %v490 = vsub.f32 %v474, %v482
      %v491 = vsub.f32 %v475, %v485
      %v492 = vsub.f32 %v476, %v488
      %v493 = vmul.f32 %v489, 1.442695
      %v494 = vpow.pop %v493
      %v495 = vmul.f32 %v490, 1.442695
      %v496 = vpow.pop %v495
      %v497 = vmul.f32 %v491, 1.442695
      %v498 = vpow.pop %v497
      %v499 = vmul.f32 %v492, 1.442695
      %v500 = vpow.pop %v499
      %v501 = vsel %vm288, %v494, 0.0
      %502 = vadd.xlane.f32.xlu0 %v501
      %v503 = vpop.xlane.xlu0 %502
      %v504 = vsel %vm288, %v496, 0.0
      %505 = vadd.xlane.f32.xlu0 %v504
      %v506 = vpop.xlane.xlu0 %505
      %v507 = vsel %vm288, %v498, 0.0
      %508 = vadd.xlane.f32.xlu0 %v507
      %v509 = vpop.xlane.xlu0 %508
      %v510 = vsel %vm288, %v500, 0.0
      %511 = vadd.xlane.f32.xlu0 %v510
      %v512 = vpop.xlane.xlu0 %511
      %v513 = vpack.c.bf16 %v494, %v494
      %v514 = vpack.c.bf16 %v496, %v496
      %v515 = vpack.c.bf16 %v498, %v498
      %v516 = vpack.c.bf16 %v500, %v500
      %v518 = vsel %vm288, %v513, 0
      %vm520 = vcmask 1043456
      %v522 = vsel %vm520, %v278, 0
      %524 = vmatprep.subr.bf16.mxu0 0
      %525 = vmatpush1.bf16.msra.mxu0 %v522
      %526 = vmatprep.subr.bf16.mxu0 0
      %527 = vmatpush1.bf16.msra.mxu0 0
      %528 = vmatprep.subr.bf16.mxu0 0
      %529 = vmatpush1.bf16.msra.mxu0 0
      %530 = vmatprep.subr.bf16.mxu0 0
      %531 = vmatpush1.bf16.msra.mxu0 0
      %532 = vmatprep.subr.bf16.mxu0 0
      %533 = vmatpush1.bf16.msra.mxu0 0
      %534 = vmatprep.subr.bf16.mxu0 0
      %535 = vmatpush1.bf16.msra.mxu0 0
      %536 = vmatprep.subr.bf16.mxu0 0
      %537 = vmatpush1.bf16.msra.mxu0 0
      %538 = vmatprep.subr.bf16.mxu0 0
      %539 = vmatpush1.bf16.msra.mxu0 0
      %540 = vmatprep.subr.bf16.mxu0 0
      %541 = vmatpush1.bf16.msra.mxu0 0
      %542 = vmatprep.subr.bf16.mxu0 0
      %543 = vmatpush1.bf16.msra.mxu0 0
      %544 = vmatprep.subr.bf16.mxu0 0
      %545 = vmatpush1.bf16.msra.mxu0 0
      %546 = vmatprep.subr.bf16.mxu0 0
      %547 = vmatpush1.bf16.msra.mxu0 0
      %548 = vmatprep.subr.bf16.mxu0 0
      %549 = vmatpush1.bf16.msra.mxu0 0
      %550 = vmatprep.subr.bf16.mxu0 0
      %551 = vmatpush1.bf16.msra.mxu0 0
      %552 = vmatprep.subr.bf16.mxu0 0
      %553 = vmatpush1.bf16.msra.mxu0 0
      %554 = vmatprep.subr.bf16.mxu0 0
      %555 = vmatpush1.bf16.msra.mxu0 0
      %556 = vmatprep.mubr.bf16.mxu0 0
      %557 = vmatmul.mubr.bf16.gmra.mrb[0].mxu0 %v518
      %v558 = vpop.f32.mrb[0].mxu0
      %v559 = vadd.f32 0.0, %v558
      %v560 = vpop.f32.mrb[0].mxu0
      %v561 = vpop.f32.mrb[0].mxu0
      %v562 = vpop.f32.mrb[0].mxu0
      %563 = vdwg.mxu0
      %v565 = vsel %vm288, %v514, 0
      %v568 = vsel %vm520, %v281, 0
      %570 = vmatprep.subr.bf16.mxu0 0
      %571 = vmatpush1.bf16.msra.mxu0 %v568
      %572 = vmatprep.subr.bf16.mxu0 0
      %573 = vmatpush1.bf16.msra.mxu0 0
      %574 = vmatprep.subr.bf16.mxu0 0
      %575 = vmatpush1.bf16.msra.mxu0 0
      %576 = vmatprep.subr.bf16.mxu0 0
      %577 = vmatpush1.bf16.msra.mxu0 0
      %578 = vmatprep.subr.bf16.mxu0 0
      %579 = vmatpush1.bf16.msra.mxu0 0
      %580 = vmatprep.subr.bf16.mxu0 0
      %581 = vmatpush1.bf16.msra.mxu0 0
      %582 = vmatprep.subr.bf16.mxu0 0
      %583 = vmatpush1.bf16.msra.mxu0 0
      %584 = vmatprep.subr.bf16.mxu0 0
      %585 = vmatpush1.bf16.msra.mxu0 0
      %586 = vmatprep.subr.bf16.mxu0 0
      %587 = vmatpush1.bf16.msra.mxu0 0
      %588 = vmatprep.subr.bf16.mxu0 0
      %589 = vmatpush1.bf16.msra.mxu0 0
      %590 = vmatprep.subr.bf16.mxu0 0
      %591 = vmatpush1.bf16.msra.mxu0 0
      %592 = vmatprep.subr.bf16.mxu0 0
      %593 = vmatpush1.bf16.msra.mxu0 0
      %594 = vmatprep.subr.bf16.mxu0 0
      %595 = vmatpush1.bf16.msra.mxu0 0
      %596 = vmatprep.subr.bf16.mxu0 0
      %597 = vmatpush1.bf16.msra.mxu0 0
      %598 = vmatprep.subr.bf16.mxu0 0
      %599 = vmatpush1.bf16.msra.mxu0 0
      %600 = vmatprep.subr.bf16.mxu0 0
      %601 = vmatpush1.bf16.msra.mxu0 0
      %602 = vmatprep.mubr.bf16.mxu0 0
      %603 = vmatmul.mubr.bf16.gmra.mrb[0].mxu0 %v565
      %v604 = vpop.f32.mrb[0].mxu0
      %v605 = vadd.f32 0.0, %v604
      %v606 = vpop.f32.mrb[0].mxu0
      %v607 = vpop.f32.mrb[0].mxu0
      %v608 = vpop.f32.mrb[0].mxu0
      %609 = vdwg.mxu0
      %v611 = vsel %vm288, %v515, 0
      %v614 = vsel %vm520, %v284, 0
      %616 = vmatprep.subr.bf16.mxu0 0
      %617 = vmatpush1.bf16.msra.mxu0 %v614
      %618 = vmatprep.subr.bf16.mxu0 0
      %619 = vmatpush1.bf16.msra.mxu0 0
      %620 = vmatprep.subr.bf16.mxu0 0
      %621 = vmatpush1.bf16.msra.mxu0 0
      %622 = vmatprep.subr.bf16.mxu0 0
      %623 = vmatpush1.bf16.msra.mxu0 0
      %624 = vmatprep.subr.bf16.mxu0 0
      %625 = vmatpush1.bf16.msra.mxu0 0
      %626 = vmatprep.subr.bf16.mxu0 0
      %627 = vmatpush1.bf16.msra.mxu0 0
      %628 = vmatprep.subr.bf16.mxu0 0
      %629 = vmatpush1.bf16.msra.mxu0 0
      %630 = vmatprep.subr.bf16.mxu0 0
      %631 = vmatpush1.bf16.msra.mxu0 0
      %632 = vmatprep.subr.bf16.mxu0 0
      %633 = vmatpush1.bf16.msra.mxu0 0
      %634 = vmatprep.subr.bf16.mxu0 0
      %635 = vmatpush1.bf16.msra.mxu0 0
      %636 = vmatprep.subr.bf16.mxu0 0
      %637 = vmatpush1.bf16.msra.mxu0 0
      %638 = vmatprep.subr.bf16.mxu0 0
      %639 = vmatpush1.bf16.msra.mxu0 0
      %640 = vmatprep.subr.bf16.mxu0 0
      %641 = vmatpush1.bf16.msra.mxu0 0
      %642 = vmatprep.subr.bf16.mxu0 0
      %643 = vmatpush1.bf16.msra.mxu0 0
      %644 = vmatprep.subr.bf16.mxu0 0
      %645 = vmatpush1.bf16.msra.mxu0 0
      %646 = vmatprep.subr.bf16.mxu0 0
      %647 = vmatpush1.bf16.msra.mxu0 0
      %648 = vmatprep.mubr.bf16.mxu0 0
      %649 = vmatmul.mubr.bf16.gmra.mrb[0].mxu0 %v611
      %v650 = vpop.f32.mrb[0].mxu0
      %v651 = vadd.f32 0.0, %v650
      %v652 = vpop.f32.mrb[0].mxu0
      %v653 = vpop.f32.mrb[0].mxu0
      %v654 = vpop.f32.mrb[0].mxu0
      %655 = vdwg.mxu0
      %v657 = vsel %vm288, %v516, 0
      %v660 = vsel %vm520, %v287, 0
      %662 = vmatprep.subr.bf16.mxu0 0
      %663 = vmatpush1.bf16.msra.mxu0 %v660
      %664 = vmatprep.subr.bf16.mxu0 0
      %665 = vmatpush1.bf16.msra.mxu0 0
      %666 = vmatprep.subr.bf16.mxu0 0
      %667 = vmatpush1.bf16.msra.mxu0 0
      %668 = vmatprep.subr.bf16.mxu0 0
      %669 = vmatpush1.bf16.msra.mxu0 0
      %670 = vmatprep.subr.bf16.mxu0 0
      %671 = vmatpush1.bf16.msra.mxu0 0
      %672 = vmatprep.subr.bf16.mxu0 0
      %673 = vmatpush1.bf16.msra.mxu0 0
      %674 = vmatprep.subr.bf16.mxu0 0
      %675 = vmatpush1.bf16.msra.mxu0 0
      %676 = vmatprep.subr.bf16.mxu0 0
      %677 = vmatpush1.bf16.msra.mxu0 0
      %678 = vmatprep.subr.bf16.mxu0 0
      %679 = vmatpush1.bf16.msra.mxu0 0
      %680 = vmatprep.subr.bf16.mxu0 0
      %681 = vmatpush1.bf16.msra.mxu0 0
      %682 = vmatprep.subr.bf16.mxu0 0
      %683 = vmatpush1.bf16.msra.mxu0 0
      %684 = vmatprep.subr.bf16.mxu0 0
      %685 = vmatpush1.bf16.msra.mxu0 0
      %686 = vmatprep.subr.bf16.mxu0 0
      %687 = vmatpush1.bf16.msra.mxu0 0
      %688 = vmatprep.subr.bf16.mxu0 0
      %689 = vmatpush1.bf16.msra.mxu0 0
      %690 = vmatprep.subr.bf16.mxu0 0
      %691 = vmatpush1.bf16.msra.mxu0 0
      %692 = vmatprep.subr.bf16.mxu0 0
      %693 = vmatpush1.bf16.msra.mxu0 0
      %694 = vmatprep.mubr.bf16.mxu0 0
      %695 = vmatmul.mubr.bf16.gmra.mrb[0].mxu0 %v657
      %v696 = vpop.f32.mrb[0].mxu0
      %v697 = vadd.f32 0.0, %v696
      %v698 = vpop.f32.mrb[0].mxu0
      %v699 = vpop.f32.mrb[0].mxu0
      %v700 = vpop.f32.mrb[0].mxu0
      %701 = vdwg.mxu0
      %v702 = vrcp.pop %v503
      %v703 = vrcp.pop %v506
      %v704 = vrcp.pop %v509
      %v705 = vrcp.pop %v512
      %v706 = vmul.f32 %v559, %v702
      %v707 = vmul.f32 %v605, %v703
      %v708 = vmul.f32 %v651, %v704
      %v709 = vmul.f32 %v697, %v705
      %v710 = vcombine.low %v706, %v708
      %v711 = vcombine.high %v706, %v708
      %v713 = vunpack.c.l.s4 1983009808
      %v714 = vunpack.c.0.s8 %v713
      %v715 = vlaneseq
      %v716 = vshrl.u32 %v715, 7
      %v717 = vsub.s32 %v714, %v716
      %v718 = vrot.slane %v710, %v717
      %v720 = vunpack.c.l.s4 1983009808
      %v721 = vunpack.c.0.s8 %v720
      %v722 = vlaneseq
      %v723 = vshrl.u32 %v722, 7
      %v724 = vsub.s32 %v721, %v723
      %v725 = vrot.slane %v711, %v724
      %v726 = vcombine.low %v707, %v709
      %v727 = vcombine.high %v707, %v709
      %v729 = vunpack.c.l.s4 1983009808
      %v730 = vunpack.c.0.s8 %v729
      %v731 = vlaneseq
      %v732 = vshrl.u32 %v731, 7
      %v733 = vsub.s32 %v730, %v732
      %v734 = vrot.slane %v726, %v733
      %v736 = vunpack.c.l.s4 1983009808
      %v737 = vunpack.c.0.s8 %v736
      %v738 = vlaneseq
      %v739 = vshrl.u32 %v738, 7
      %v740 = vsub.s32 %v737, %v739
      %v741 = vrot.slane %v727, %v740
      %v742 = vcombine.low %v718, %v734
      %v743 = vcombine.high %v718, %v734
      %v745 = vunpack.c.l.s4 1934713408
      %v746 = vunpack.c.0.s8 %v745
      %v747 = vlaneseq
      %v748 = vshrl.u32 %v747, 7
      %v749 = vsub.s32 %v746, %v748
      %v750 = vrot.slane %v742, %v749
      %v752 = vunpack.c.l.s4 1934713408
      %v753 = vunpack.c.0.s8 %v752
      %v754 = vlaneseq
      %v755 = vshrl.u32 %v754, 7
      %v756 = vsub.s32 %v753, %v755
      %v757 = vrot.slane %v743, %v756
      %v758 = vcombine.low %v725, %v741
      %v759 = vcombine.high %v725, %v741
      %v761 = vunpack.c.l.s4 1934713408
      %v762 = vunpack.c.0.s8 %v761
      %v763 = vlaneseq
      %v764 = vshrl.u32 %v763, 7
      %v765 = vsub.s32 %v762, %v764
      %v766 = vrot.slane %v758, %v765
      %v768 = vunpack.c.l.s4 1934713408
      %v769 = vunpack.c.0.s8 %v768
      %v770 = vlaneseq
      %v771 = vshrl.u32 %v770, 7
      %v772 = vsub.s32 %v769, %v771
      %v773 = vrot.slane %v759, %v772
      %v774 = vcombine.high %v750, 0.0
      %v775 = vcombine.high %v757, 0.0
      %v776 = vcombine.high %v766, 0.0
      %v777 = vcombine.high %v773, 0.0
      %v778 = vpack.c.bf16 %v750, %v750
      %v779 = vpack.c.bf16 %v774, %v774
      %v780 = vpack.c.bf16 %v757, %v757
      %v781 = vpack.c.bf16 %v775, %v775
      %v782 = vpack.c.bf16 %v766, %v766
      %v783 = vpack.c.bf16 %v776, %v776
      %v784 = vpack.c.bf16 %v773, %v773
      %v785 = vpack.c.bf16 %v777, %v777
      %vm786 = vcmask 58368
      %787 = vst.msk [vmem:[%s116] sm:$0x3] %vm786, %v778
      %788 = vst.msk [vmem:[%s116 + $0x2] sm:$0x3] %vm786, %v779
      %789 = vst.msk [vmem:[%s116 + $0x4] sm:$0x3] %vm786, %v780
      %790 = vst.msk [vmem:[%s116 + $0x6] sm:$0x3] %vm786, %v781
      %791 = vst.msk [vmem:[%s116 + $0x8] sm:$0x3] %vm786, %v782
      %792 = vst.msk [vmem:[%s116 + $0xa] sm:$0x3] %vm786, %v783
      %793 = vst.msk [vmem:[%s116 + $0xc] sm:$0x3] %vm786, %v784
      %794 = vst.msk [vmem:[%s116 + $0xe] sm:$0x3] %vm786, %v785
      %p795 = scmp.lt.s32.totalorder %s12, 1
      %s796 = scalar_select %p795, %s12, 1
      %s797 = smul.addr %s796, 8
      %s798 = smul.addr %s797, 2
      %s799 = scalar_lea.vmem %s1, %s798
      // Predicated region
      $region25: #{transformer_forward.25} parent=23 // pred_check
        %p800 = pneg %p56
      $region26: #{transformer_forward.25} parent=23 // pred_check_branch
        %802 = sbr.rel (%p800) target = $region28
      $region27: #{transformer_forward.25} parent=23 // pred_region
        _
      $region28: #{transformer_forward.25} parent=23 // pred_fallthru
        _
    $region24: #{transformer_forward.25} parent=5 // pred_fallthru
      _
    %p803 = scmp.le.s32.totalorder 2, %s7
    // Predicated region
    $region29: #{transformer_forward.25} parent=5 // pred_check
      %p804 = pneg %p803
    $region30: #{transformer_forward.25} parent=5 // pred_check_branch
      %806 = sbr.rel (%p804) target = $region32
    $region31: #{transformer_forward.25} parent=5 // pred_region
      %s807 = ssub.s32 %s7, 2
      // Predicated region
      $region33: #{transformer_forward.25} parent=31 // pred_check
        %p808 = pneg %p62
      $region34: #{transformer_forward.25} parent=31 // pred_check_branch
        %810 = sbr.rel (%p808) target = $region36
      $region35: #{transformer_forward.25} parent=31 // pred_region
        %p811 = scmp.lt.s32.totalorder %s13, 1
        %s812 = scalar_select %p811, %s13, 1
        %s813 = smul.addr %s812, 8
        %s814 = smul.addr %s813, 2
        %s815 = scalar_lea.vmem %s1, %s814
      $region36: #{transformer_forward.25} parent=31 // pred_fallthru
        _
    $region32: #{transformer_forward.25} parent=5 // pred_fallthru
      _
  $region6: #{transformer_forward.25} parent=0 // loop_footer
    %s11 = sadd.s32 1, %s7
  $region7: #{transformer_forward.25} parent=0 // loop_footer_branch
    %6 = sbr.rel target = $region3
  $region8: #{transformer_forward.25} parent=0 // loop_exit
    _

// kernel: transformer_forward.27
$region0: #{transformer_forward.27}
  #allocation0 [shape = 'u32[]', space=smem, size = 0x4, offset = 0x4, fixed_abs, tag = 'smem constant byte address 0x4 - core index']
  #allocation1 [shape = 'u32[144,128]{1,0:T(1,128)}', space=vmem, size = 0x12000, scoped, tag = 'internal scratch']
  #allocation2 [shape = 'f32[16,32]{1,0:T(8,128)}', space=vmem, size = 0x2000, scoped, tag = 'scratch operand']
  %s0 = inlined_call_operand.vmem [shape: bf16[16,32], index: 0, kind: input, shape index: {}]
  %s1 = inlined_call_operand.vmem [shape: bf16[32,64], index: 1, kind: input, shape index: {}]
  %s2 = inlined_call_operand.vmem [shape: f32[1,64], index: 2, kind: input, shape index: {}]
  %s3 = inlined_call_operand.vmem [shape: bf16[64,32], index: 3, kind: input, shape index: {}]
  %s4 = inlined_call_operand.vmem [shape: f32[1,32], index: 4, kind: input, shape index: {}]
  %s5 = inlined_call_operand.vmem [shape: f32[1,32], index: 5, kind: input, shape index: {}]
  %s6 = inlined_call_operand.vmem [shape: f32[1,32], index: 6, kind: input, shape index: {}]
  %s7 = inlined_call_operand.vmem [shape: bf16[16,32], index: 7, kind: output, shape index: {}]
  %s8 = sld [smem:[#allocation0]]
  $region46: #{transformer_forward.27} parent=0
    _
  %s10 = ssub.s32 1, %s8
  %s11 = scalar_select 0, %s10, %s8
  // Predicated region
  $region2: #{transformer_forward.27} parent=0 // pred_check
    _
  $region3: #{transformer_forward.27} parent=0 // pred_check_branch
    %13 = sbr.rel (0) target = $region5
  $region4: #{transformer_forward.27} parent=0 // pred_region
    _
  $region5: #{transformer_forward.27} parent=0 // pred_fallthru
    _
  // Predicated region
  $region6: #{transformer_forward.27} parent=0 // pred_check
    _
  $region7: #{transformer_forward.27} parent=0 // pred_check_branch
    %15 = sbr.rel (0) target = $region9
  $region8: #{transformer_forward.27} parent=0 // pred_region
    _
  $region9: #{transformer_forward.27} parent=0 // pred_fallthru
    _
  // Predicated region
  $region10: #{transformer_forward.27} parent=0 // pred_check
    _
  $region11: #{transformer_forward.27} parent=0 // pred_check_branch
    %17 = sbr.rel (0) target = $region13
  $region12: #{transformer_forward.27} parent=0 // pred_region
    _
  $region13: #{transformer_forward.27} parent=0 // pred_fallthru
    _
  // Predicated region
  $region14: #{transformer_forward.27} parent=0 // pred_check
    _
  $region15: #{transformer_forward.27} parent=0 // pred_check_branch
    %19 = sbr.rel (0) target = $region17
  $region16: #{transformer_forward.27} parent=0 // pred_region
    _
  $region17: #{transformer_forward.27} parent=0 // pred_fallthru
    _
  // Predicated region
  $region18: #{transformer_forward.27} parent=0 // pred_check
    _
  $region19: #{transformer_forward.27} parent=0 // pred_check_branch
    %21 = sbr.rel (0) target = $region21
  $region20: #{transformer_forward.27} parent=0 // pred_region
    _
  $region21: #{transformer_forward.27} parent=0 // pred_fallthru
    _
  // Predicated region
  $region22: #{transformer_forward.27} parent=0 // pred_check
    _
  $region23: #{transformer_forward.27} parent=0 // pred_check_branch
    %23 = sbr.rel (0) target = $region25
  $region24: #{transformer_forward.27} parent=0 // pred_region
    _
  $region25: #{transformer_forward.27} parent=0 // pred_fallthru
    _
  // Predicated region
  $region26: #{transformer_forward.27} parent=0 // pred_check
    _
  $region27: #{transformer_forward.27} parent=0 // pred_check_branch
    %25 = sbr.rel (0) target = $region29
  $region28: #{transformer_forward.27} parent=0 // pred_region
    _
  $region29: #{transformer_forward.27} parent=0 // pred_fallthru
    _
  %p27 = scmp.eq.s32.totalorder 0, 0
  // Predicated region
  $region30: #{transformer_forward.27} parent=0 // pred_check
    %p28 = pneg %p27
  $region31: #{transformer_forward.27} parent=0 // pred_check_branch
    %30 = sbr.rel (%p28) target = $region33
  $region32: #{transformer_forward.27} parent=0 // pred_region
    %vm31 = vcmask 261120
    %32 = vst.msk [vmem:[#allocation2] sm:$0xff] %vm31, 0.0
    %33 = vst.msk [vmem:[#allocation2 + $0x8] sm:$0xff] %vm31, 0.0
  $region33: #{transformer_forward.27} parent=0 // pred_fallthru
    _
  %v34 = vld [vmem:[%s0] sm:$0xf]
  %v35 = vld [vmem:[%s0 + $0x4] sm:$0xf]
  %v36 = vld [vmem:[%s1] sm:$0xf]
  %v37 = vld [vmem:[%s1 + $0x4] sm:$0xf]
  %v38 = vld [vmem:[%s1 + $0x8] sm:$0xf]
  %v39 = vld [vmem:[%s1 + $0xc] sm:$0xf]
  %v40 = vld [vmem:[%s2] sm:$0x1]
  %v42 = vlaneseq
  %v43 = vshrl.u32 %v42, 7
  %v44 = vsub.s32 0, %v43
  %v45 = vrot.slane %v40, %v44
  %v49 = vunpack.c.l.b16 %v34
  %v50 = vunpack.c.l.b16 %v35
  %v51 = vpack.c.b16 %v50, %v49
  %v56 = vunpack.c.l.b16 %v36
  %v57 = vunpack.c.l.b16 %v37
  %v58 = vunpack.c.l.b16 %v38
  %v59 = vunpack.c.l.b16 %v39
  %v60 = vpack.c.b16 %v57, %v56
  %v61 = vpack.c.b16 %v59, %v58
  %vm64 = vcmask 261120
  %v66 = vsel %vm64, %v51, 0
  %68 = vmatprep.subr.bf16.mxu0 0
  %69 = vmatpush1.bf16.msra.mxu0 %v60
  %70 = vmatprep.subr.bf16.mxu0 0
  %71 = vmatpush1.bf16.msra.mxu0 %v61
  %72 = vmatprep.subr.bf16.mxu0 0
  %73 = vmatpush1.bf16.msra.mxu0 0
  %74 = vmatprep.subr.bf16.mxu0 0
  %75 = vmatpush1.bf16.msra.mxu0 0
  %76 = vmatprep.subr.bf16.mxu0 0
  %77 = vmatpush1.bf16.msra.mxu0 0
  %78 = vmatprep.subr.bf16.mxu0 0
  %79 = vmatpush1.bf16.msra.mxu0 0
  %80 = vmatprep.subr.bf16.mxu0 0
  %81 = vmatpush1.bf16.msra.mxu0 0
  %82 = vmatprep.subr.bf16.mxu0 0
  %83 = vmatpush1.bf16.msra.mxu0 0
  %84 = vmatprep.subr.bf16.mxu0 0
  %85 = vmatpush1.bf16.msra.mxu0 0
  %86 = vmatprep.subr.bf16.mxu0 0
  %87 = vmatpush1.bf16.msra.mxu0 0
  %88 = vmatprep.subr.bf16.mxu0 0
  %89 = vmatpush1.bf16.msra.mxu0 0
  %90 = vmatprep.subr.bf16.mxu0 0
  %91 = vmatpush1.bf16.msra.mxu0 0
  %92 = vmatprep.subr.bf16.mxu0 0
  %93 = vmatpush1.bf16.msra.mxu0 0
  %94 = vmatprep.subr.bf16.mxu0 0
  %95 = vmatpush1.bf16.msra.mxu0 0
  %96 = vmatprep.subr.bf16.mxu0 0
  %97 = vmatpush1.bf16.msra.mxu0 0
  %98 = vmatprep.subr.bf16.mxu0 0
  %99 = vmatpush1.bf16.msra.mxu0 0
  %100 = vmatprep.mubr.bf16.mxu0 0
  %101 = vmatmul.mubr.bf16.gmra.mrb[0].mxu0 %v66
  %v102 = vpop.f32.mrb[0].mxu0
  %v103 = vadd.f32 %v45, %v102
  %v104 = vpop.f32.mrb[0].mxu0
  %v105 = vpop.f32.mrb[0].mxu0
  %v106 = vadd.f32 %v45, %v105
  %v107 = vpop.f32.mrb[0].mxu0
  %108 = vdwg.mxu0
  %v109 = vmax.f32 %v103, 0.0
  %v110 = vmax.f32 %v106, 0.0
  %v111 = vld [vmem:[#allocation2] sm:$0xff]
  %v112 = vld [vmem:[#allocation2 + $0x8] sm:$0xff]
  %v113 = vpack.c.bf16 %v110, %v109
  %v114 = vld [vmem:[%s3] sm:$0xf]
  %v115 = vld [vmem:[%s3 + $0x4] sm:$0xf]
  %v116 = vld [vmem:[%s3 + $0x8] sm:$0xf]
  %v117 = vld [vmem:[%s3 + $0xc] sm:$0xf]
  %v118 = vld [vmem:[%s3 + $0x10] sm:$0xf]
  %v119 = vld [vmem:[%s3 + $0x14] sm:$0xf]
  %v120 = vld [vmem:[%s3 + $0x18] sm:$0xf]
  %v121 = vld [vmem:[%s3 + $0x1c] sm:$0xf]
  %v130 = vunpack.c.l.b16 %v114
  %v131 = vunpack.c.l.b16 %v115
  %v132 = vunpack.c.l.b16 %v116
  %v133 = vunpack.c.l.b16 %v117
  %v134 = vunpack.c.l.b16 %v118
  %v135 = vunpack.c.l.b16 %v119
  %v136 = vunpack.c.l.b16 %v120
  %v137 = vunpack.c.l.b16 %v121
  %v138 = vpack.c.b16 %v131, %v130
  %v139 = vpack.c.b16 %v133, %v132
  %v140 = vpack.c.b16 %v135, %v134
  %v141 = vpack.c.b16 %v137, %v136
  %vm146 = vcmask 523264
  %v148 = vsel %vm146, %v113, 0
  %150 = vmatprep.subr.bf16.mxu0 0
  %151 = vmatpush1.bf16.msra.mxu0 %v138
  %152 = vmatprep.subr.bf16.mxu0 0
  %153 = vmatpush1.bf16.msra.mxu0 %v139
  %154 = vmatprep.subr.bf16.mxu0 0
  %155 = vmatpush1.bf16.msra.mxu0 %v140
  %156 = vmatprep.subr.bf16.mxu0 0
  %157 = vmatpush1.bf16.msra.mxu0 %v141
  %158 = vmatprep.subr.bf16.mxu0 0
  %159 = vmatpush1.bf16.msra.mxu0 0
  %160 = vmatprep.subr.bf16.mxu0 0
  %161 = vmatpush1.bf16.msra.mxu0 0
  %162 = vmatprep.subr.bf16.mxu0 0
  %163 = vmatpush1.bf16.msra.mxu0 0
  %164 = vmatprep.subr.bf16.mxu0 0
  %165 = vmatpush1.bf16.msra.mxu0 0
  %166 = vmatprep.subr.bf16.mxu0 0
  %167 = vmatpush1.bf16.msra.mxu0 0
  %168 = vmatprep.subr.bf16.mxu0 0
  %169 = vmatpush1.bf16.msra.mxu0 0
  %170 = vmatprep.subr.bf16.mxu0 0
  %171 = vmatpush1.bf16.msra.mxu0 0
  %172 = vmatprep.subr.bf16.mxu0 0
  %173 = vmatpush1.bf16.msra.mxu0 0
  %174 = vmatprep.subr.bf16.mxu0 0
  %175 = vmatpush1.bf16.msra.mxu0 0
  %176 = vmatprep.subr.bf16.mxu0 0
  %177 = vmatpush1.bf16.msra.mxu0 0
  %178 = vmatprep.subr.bf16.mxu0 0
  %179 = vmatpush1.bf16.msra.mxu0 0
  %180 = vmatprep.subr.bf16.mxu0 0
  %181 = vmatpush1.bf16.msra.mxu0 0
  %182 = vmatprep.mubr.bf16.mxu0 0
  %183 = vmatmul.mubr.bf16.gmra.mrb[0].mxu0 %v148
  %v184 = vpop.f32.mrb[0].mxu0
  %v185 = vadd.f32 0.0, %v184
  %v186 = vpop.f32.mrb[0].mxu0
  %v187 = vpop.f32.mrb[0].mxu0
  %v188 = vadd.f32 0.0, %v187
  %v189 = vpop.f32.mrb[0].mxu0
  %190 = vdwg.mxu0
  %v191 = vadd.f32 %v111, %v185
  %v192 = vadd.f32 %v112, %v188
  %193 = vst.msk [vmem:[#allocation2] sm:$0xff] %vm64, %v191
  %194 = vst.msk [vmem:[#allocation2 + $0x8] sm:$0xff] %vm64, %v192
  // Predicated region
  $region34: #{transformer_forward.27} parent=0 // pred_check
    %p195 = pneg %p27
  $region35: #{transformer_forward.27} parent=0 // pred_check_branch
    %197 = sbr.rel (%p195) target = $region37
  $region36: #{transformer_forward.27} parent=0 // pred_region
    %v198 = vld [vmem:[#allocation2] sm:$0xff]
    %v199 = vld [vmem:[#allocation2 + $0x8] sm:$0xff]
    %v200 = vld [vmem:[%s4] sm:$0x1]
    %v202 = vlaneseq
    %v203 = vshrl.u32 %v202, 7
    %v204 = vsub.s32 0, %v203
    %v205 = vrot.slane %v200, %v204
    %v207 = vadd.f32 %v198, %v205
    %v208 = vadd.f32 %v199, %v205
    %v209 = vunpack.c.l.bf16 %v34
    %v210 = vunpack.c.l.bf16 %v35
    %v211 = vadd.f32 %v207, %v209
    %v212 = vadd.f32 %v208, %v210
    %v213 = vsel %vm64, %v211, 0.0
    %214 = vadd.xlane.f32.xlu0 %v213
    %v215 = vpop.xlane.xlu0 %214
    %v216 = vsel %vm64, %v212, 0.0
    %217 = vadd.xlane.f32.xlu0 %v216
    %v218 = vpop.xlane.xlu0 %217
    %v219 = vrcp.pop 32.0
    %v220 = vmul.f32 %v215, %v219
    %v221 = vmul.f32 %v218, %v219
    %v222 = vsub.f32 %v211, %v220
    %v223 = vsub.f32 %v212, %v221
    %v224 = vmul.f32 %v222, %v222
    %v225 = vmul.f32 %v223, %v223
    %v226 = vsel %vm64, %v224, 0.0
    %227 = vadd.xlane.f32.xlu0 %v226
    %v228 = vpop.xlane.xlu0 %227
    %v229 = vsel %vm64, %v225, 0.0
    %230 = vadd.xlane.f32.xlu0 %v229
    %v231 = vpop.xlane.xlu0 %230
    %v232 = vmul.f32 %v228, %v219
    %v233 = vmul.f32 %v231, %v219
    %v234 = vadd.f32 %v232, 1e-05
    %v235 = vadd.f32 %v233, 1e-05
    %v236 = vrsqrt.pop %v234
    %v237 = vrsqrt.pop %v235
    %v238 = vmul.f32 %v222, %v236
    %v239 = vmul.f32 %v223, %v237
    %v240 = vld [vmem:[%s5] sm:$0x1]
    %v242 = vlaneseq
    %v243 = vshrl.u32 %v242, 7
    %v244 = vsub.s32 0, %v243
    %v245 = vrot.slane %v240, %v244
    %v247 = vmul.f32 %v238, %v245
    %v248 = vmul.f32 %v239, %v245
    %v249 = vld [vmem:[%s6] sm:$0x1]
    %v251 = vlaneseq
    %v252 = vshrl.u32 %v251, 7
    %v253 = vsub.s32 0, %v252
    %v254 = vrot.slane %v249, %v253
    %v256 = vadd.f32 %v247, %v254
    %v257 = vadd.f32 %v248, %v254
    %v258 = vpack.c.bf16 %v257, %v256
    %v260 = vunpack.c.l.b16 %v258
    %v261 = vunpack.c.h.b16 %v258
    %v262 = vpack.c.b16 %v260, %v260
    %v263 = vpack.c.b16 %v261, %v261
    %vm266 = vcmask 257024
    %267 = vst.msk [vmem:[%s7] sm:$0xf] %vm266, %v262
    %268 = vst.msk [vmem:[%s7 + $0x4] sm:$0xf] %vm266, %v263
  $region37: #{transformer_forward.27} parent=0 // pred_fallthru
    _
  // Predicated region
  $region38: #{transformer_forward.27} parent=0 // pred_check
    _
  $region39: #{transformer_forward.27} parent=0 // pred_check_branch
    %270 = sbr.rel (0) target = $region41
  $region40: #{transformer_forward.27} parent=0 // pred_region
    _
  $region41: #{transformer_forward.27} parent=0 // pred_fallthru
    _
  // Predicated region
  $region42: #{transformer_forward.27} parent=0 // pred_check
    _
  $region43: #{transformer_forward.27} parent=0 // pred_check_branch
    %272 = sbr.rel (0) target = $region45
  $region44: #{transformer_forward.27} parent=0 // pred_region
    _
  $region45: #{transformer_forward.27} parent=0 // pred_fallthru
    _

// kernel: transformer_forward.32
$region0: #{transformer_forward.32}
  #allocation0 [shape = 'u32[]', space=smem, size = 0x4, offset = 0x4, fixed_abs, tag = 'smem constant byte address 0x4 - core index']
  #allocation1 [shape = 'u32[144,128]{1,0:T(1,128)}', space=vmem, size = 0x12000, scoped, tag = 'internal scratch']
  %s0 = inlined_call_operand.vmem [shape: bf16[16,32], index: 0, kind: input, shape index: {}]
  %s1 = inlined_call_operand.vmem [shape: bf16[32,64], index: 1, kind: input, shape index: {}]
  %s2 = inlined_call_operand.vmem [shape: f32[1,64], index: 2, kind: input, shape index: {}]
  %s3 = inlined_call_operand.vmem [shape: bf16[16,64], index: 3, kind: output, shape index: {}]
  %s4 = sld [smem:[#allocation0]]
  $region22: #{transformer_forward.32} parent=0
    _
  %s6 = ssub.s32 1, %s4
  %s7 = scalar_select 0, %s6, %s4
  // Predicated region
  $region2: #{transformer_forward.32} parent=0 // pred_check
    _
  $region3: #{transformer_forward.32} parent=0 // pred_check_branch
    %9 = sbr.rel (0) target = $region5
  $region4: #{transformer_forward.32} parent=0 // pred_region
    _
  $region5: #{transformer_forward.32} parent=0 // pred_fallthru
    _
  // Predicated region
  $region6: #{transformer_forward.32} parent=0 // pred_check
    _
  $region7: #{transformer_forward.32} parent=0 // pred_check_branch
    %11 = sbr.rel (0) target = $region9
  $region8: #{transformer_forward.32} parent=0 // pred_region
    _
  $region9: #{transformer_forward.32} parent=0 // pred_fallthru
    _
  // Predicated region
  $region10: #{transformer_forward.32} parent=0 // pred_check
    _
  $region11: #{transformer_forward.32} parent=0 // pred_check_branch
    %13 = sbr.rel (0) target = $region13
  $region12: #{transformer_forward.32} parent=0 // pred_region
    _
  $region13: #{transformer_forward.32} parent=0 // pred_fallthru
    _
  %v15 = vld [vmem:[%s0] sm:$0xf]
  %v16 = vld [vmem:[%s0 + $0x4] sm:$0xf]
  %v17 = vld [vmem:[%s1] sm:$0xf]
  %v18 = vld [vmem:[%s1 + $0x4] sm:$0xf]
  %v19 = vld [vmem:[%s1 + $0x8] sm:$0xf]
  %v20 = vld [vmem:[%s1 + $0xc] sm:$0xf]
  %v21 = vld [vmem:[%s2] sm:$0x1]
  %v23 = vlaneseq
  %v24 = vshrl.u32 %v23, 7
  %v25 = vsub.s32 0, %v24
  %v26 = vrot.slane %v21, %v25
  %v30 = vunpack.c.l.b16 %v15
  %v31 = vunpack.c.l.b16 %v16
  %v32 = vpack.c.b16 %v31, %v30
  %v37 = vunpack.c.l.b16 %v17
  %v38 = vunpack.c.l.b16 %v18
  %v39 = vunpack.c.l.b16 %v19
  %v40 = vunpack.c.l.b16 %v20
  %v41 = vpack.c.b16 %v38, %v37
  %v42 = vpack.c.b16 %v40, %v39
  %vm45 = vcmask 261120
  %v47 = vsel %vm45, %v32, 0
  %49 = vmatprep.subr.bf16.mxu0 0
  %50 = vmatpush1.bf16.msra.mxu0 %v41
  %51 = vmatprep.subr.bf16.mxu0 0
  %52 = vmatpush1.bf16.msra.mxu0 %v42
  %53 = vmatprep.subr.bf16.mxu0 0
  %54 = vmatpush1.bf16.msra.mxu0 0
  %55 = vmatprep.subr.bf16.mxu0 0
  %56 = vmatpush1.bf16.msra.mxu0 0
  %57 = vmatprep.subr.bf16.mxu0 0
  %58 = vmatpush1.bf16.msra.mxu0 0
  %59 = vmatprep.subr.bf16.mxu0 0
  %60 = vmatpush1.bf16.msra.mxu0 0
  %61 = vmatprep.subr.bf16.mxu0 0
  %62 = vmatpush1.bf16.msra.mxu0 0
  %63 = vmatprep.subr.bf16.mxu0 0
  %64 = vmatpush1.bf16.msra.mxu0 0
  %65 = vmatprep.subr.bf16.mxu0 0
  %66 = vmatpush1.bf16.msra.mxu0 0
  %67 = vmatprep.subr.bf16.mxu0 0
  %68 = vmatpush1.bf16.msra.mxu0 0
  %69 = vmatprep.subr.bf16.mxu0 0
  %70 = vmatpush1.bf16.msra.mxu0 0
  %71 = vmatprep.subr.bf16.mxu0 0
  %72 = vmatpush1.bf16.msra.mxu0 0
  %73 = vmatprep.subr.bf16.mxu0 0
  %74 = vmatpush1.bf16.msra.mxu0 0
  %75 = vmatprep.subr.bf16.mxu0 0
  %76 = vmatpush1.bf16.msra.mxu0 0
  %77 = vmatprep.subr.bf16.mxu0 0
  %78 = vmatpush1.bf16.msra.mxu0 0
  %79 = vmatprep.subr.bf16.mxu0 0
  %80 = vmatpush1.bf16.msra.mxu0 0
  %81 = vmatprep.mubr.bf16.mxu0 0
  %82 = vmatmul.mubr.bf16.gmra.mrb[0].mxu0 %v47
  %v83 = vpop.f32.mrb[0].mxu0
  %v84 = vadd.f32 %v26, %v83
  %v85 = vpop.f32.mrb[0].mxu0
  %v86 = vpop.f32.mrb[0].mxu0
  %v87 = vadd.f32 %v26, %v86
  %v88 = vpop.f32.mrb[0].mxu0
  %89 = vdwg.mxu0
  %v90 = vpack.c.bf16 %v87, %v84
  %v92 = vunpack.c.l.b16 %v90
  %v93 = vunpack.c.h.b16 %v90
  %v94 = vpack.c.b16 %v92, %v92
  %v95 = vpack.c.b16 %v93, %v93
  %vm98 = vcmask 519168
  %99 = vst.msk [vmem:[%s3] sm:$0xf] %vm98, %v94
  %100 = vst.msk [vmem:[%s3 + $0x4] sm:$0xf] %vm98, %v95
  // Predicated region
  $region14: #{transformer_forward.32} parent=0 // pred_check
    _
  $region15: #{transformer_forward.32} parent=0 // pred_check_branch
    %102 = sbr.rel (0) target = $region17
  $region16: #{transformer_forward.32} parent=0 // pred_region
    _
  $region17: #{transformer_forward.32} parent=0 // pred_fallthru
    _
  // Predicated region
  $region18: #{transformer_forward.32} parent=0 // pred_check
    _
  $region19: #{transformer_forward.32} parent=0 // pred_check_branch
    %104 = sbr.rel (0) target = $region21
  $region20: #{transformer_forward.32} parent=0 // pred_region
    _
  $region21: #{transformer_forward.32} parent=0 // pred_fallthru
    _

// kernel: transformer_forward.36
$region0: #{transformer_forward.36}
  #allocation0 [shape = 'u32[]', space=smem, size = 0x4, offset = 0x4, fixed_abs, tag = 'smem constant byte address 0x4 - core index']
  #allocation1 [shape = 'u32[144,128]{1,0:T(1,128)}', space=vmem, size = 0x12000, scoped, tag = 'internal scratch']
  %s0 = inlined_call_operand.vmem [shape: bf16[16,32], index: 0, kind: input, shape index: {}]
  %s1 = inlined_call_operand.vmem [shape: bf16[32,32], index: 1, kind: input, shape index: {}]
  %s2 = inlined_call_operand.vmem [shape: f32[1,32], index: 2, kind: input, shape index: {}]
  %s3 = inlined_call_operand.vmem [shape: bf16[16,32], index: 3, kind: output, shape index: {}]
  %s4 = sld [smem:[#allocation0]]
  $region22: #{transformer_forward.36} parent=0
    _
  %s6 = ssub.s32 1, %s4
  %s7 = scalar_select 0, %s6, %s4
  // Predicated region
  $region2: #{transformer_forward.36} parent=0 // pred_check
    _
  $region3: #{transformer_forward.36} parent=0 // pred_check_branch
    %9 = sbr.rel (0) target = $region5
  $region4: #{transformer_forward.36} parent=0 // pred_region
    _
  $region5: #{transformer_forward.36} parent=0 // pred_fallthru
    _
  // Predicated region
  $region6: #{transformer_forward.36} parent=0 // pred_check
    _
  $region7: #{transformer_forward.36} parent=0 // pred_check_branch
    %11 = sbr.rel (0) target = $region9
  $region8: #{transformer_forward.36} parent=0 // pred_region
    _
  $region9: #{transformer_forward.36} parent=0 // pred_fallthru
    _
  // Predicated region
  $region10: #{transformer_forward.36} parent=0 // pred_check
    _
  $region11: #{transformer_forward.36} parent=0 // pred_check_branch
    %13 = sbr.rel (0) target = $region13
  $region12: #{transformer_forward.36} parent=0 // pred_region
    _
  $region13: #{transformer_forward.36} parent=0 // pred_fallthru
    _
  %v15 = vld [vmem:[%s0] sm:$0xf]
  %v16 = vld [vmem:[%s0 + $0x4] sm:$0xf]
  %v17 = vld [vmem:[%s1] sm:$0xf]
  %v18 = vld [vmem:[%s1 + $0x4] sm:$0xf]
  %v19 = vld [vmem:[%s1 + $0x8] sm:$0xf]
  %v20 = vld [vmem:[%s1 + $0xc] sm:$0xf]
  %v21 = vld [vmem:[%s2] sm:$0x1]
  %v23 = vlaneseq
  %v24 = vshrl.u32 %v23, 7
  %v25 = vsub.s32 0, %v24
  %v26 = vrot.slane %v21, %v25
  %v30 = vunpack.c.l.b16 %v15
  %v31 = vunpack.c.l.b16 %v16
  %v32 = vpack.c.b16 %v31, %v30
  %v37 = vunpack.c.l.b16 %v17
  %v38 = vunpack.c.l.b16 %v18
  %v39 = vunpack.c.l.b16 %v19
  %v40 = vunpack.c.l.b16 %v20
  %v41 = vpack.c.b16 %v38, %v37
  %v42 = vpack.c.b16 %v40, %v39
  %vm45 = vcmask 261120
  %v47 = vsel %vm45, %v32, 0
  %49 = vmatprep.subr.bf16.mxu0 0
  %50 = vmatpush1.bf16.msra.mxu0 %v41
  %51 = vmatprep.subr.bf16.mxu0 0
  %52 = vmatpush1.bf16.msra.mxu0 %v42
  %53 = vmatprep.subr.bf16.mxu0 0
  %54 = vmatpush1.bf16.msra.mxu0 0
  %55 = vmatprep.subr.bf16.mxu0 0
  %56 = vmatpush1.bf16.msra.mxu0 0
  %57 = vmatprep.subr.bf16.mxu0 0
  %58 = vmatpush1.bf16.msra.mxu0 0
  %59 = vmatprep.subr.bf16.mxu0 0
  %60 = vmatpush1.bf16.msra.mxu0 0
  %61 = vmatprep.subr.bf16.mxu0 0
  %62 = vmatpush1.bf16.msra.mxu0 0
  %63 = vmatprep.subr.bf16.mxu0 0
  %64 = vmatpush1.bf16.msra.mxu0 0
  %65 = vmatprep.subr.bf16.mxu0 0
  %66 = vmatpush1.bf16.msra.mxu0 0
  %67 = vmatprep.subr.bf16.mxu0 0
  %68 = vmatpush1.bf16.msra.mxu0 0
  %69 = vmatprep.subr.bf16.mxu0 0
  %70 = vmatpush1.bf16.msra.mxu0 0
  %71 = vmatprep.subr.bf16.mxu0 0
  %72 = vmatpush1.bf16.msra.mxu0 0
  %73 = vmatprep.subr.bf16.mxu0 0
  %74 = vmatpush1.bf16.msra.mxu0 0
  %75 = vmatprep.subr.bf16.mxu0 0
  %76 = vmatpush1.bf16.msra.mxu0 0
  %77 = vmatprep.subr.bf16.mxu0 0
  %78 = vmatpush1.bf16.msra.mxu0 0
  %79 = vmatprep.subr.bf16.mxu0 0
  %80 = vmatpush1.bf16.msra.mxu0 0
  %81 = vmatprep.mubr.bf16.mxu0 0
  %82 = vmatmul.mubr.bf16.gmra.mrb[0].mxu0 %v47
  %v83 = vpop.f32.mrb[0].mxu0
  %v84 = vadd.f32 %v26, %v83
  %v85 = vpop.f32.mrb[0].mxu0
  %v86 = vpop.f32.mrb[0].mxu0
  %v87 = vadd.f32 %v26, %v86
  %v88 = vpop.f32.mrb[0].mxu0
  %89 = vdwg.mxu0
  %v90 = vpack.c.bf16 %v87, %v84
  %v92 = vunpack.c.l.b16 %v90
  %v93 = vunpack.c.h.b16 %v90
  %v94 = vpack.c.b16 %v92, %v92
  %v95 = vpack.c.b16 %v93, %v93
  %vm98 = vcmask 257024
  %99 = vst.msk [vmem:[%s3] sm:$0xf] %vm98, %v94
  %100 = vst.msk [vmem:[%s3 + $0x4] sm:$0xf] %vm98, %v95
  // Predicated region
  $region14: #{transformer_forward.36} parent=0 // pred_check
    _
  $region15: #{transformer_forward.36} parent=0 // pred_check_branch
    %102 = sbr.rel (0) target = $region17
  $region16: #{transformer_forward.36} parent=0 // pred_region
    _
  $region17: #{transformer_forward.36} parent=0 // pred_fallthru
    _
  // Predicated region
  $region18: #{transformer_forward.36} parent=0 // pred_check
    _
  $region19: #{transformer_forward.36} parent=0 // pred_check_branch
    %104 = sbr.rel (0) target = $region21
  $region20: #{transformer_forward.36} parent=0 // pred_region
    _
  $region21: #{transformer_forward.36} parent=0 // pred_fallthru
    _

// kernel: transformer_forward.34
$region0: #{transformer_forward.34}
  #allocation0 [shape = 'u32[]', space=smem, size = 0x4, offset = 0x4, fixed_abs, tag = 'smem constant byte address 0x4 - core index']
  #allocation1 [shape = 'u32[144,128]{1,0:T(1,128)}', space=vmem, size = 0x12000, scoped, tag = 'internal scratch']
  %s0 = inlined_call_operand.vmem [shape: bf16[2,8,12,8], index: 0, kind: input, shape index: {}]
  %s1 = inlined_call_operand.vmem [shape: f32[8,8], index: 1, kind: input, shape index: {}]
  %s2 = inlined_call_operand.vmem [shape: bf16[2,8,4,8], index: 2, kind: output, shape index: {}]
  %s3 = sld [smem:[#allocation0]]
  $region41: #{transformer_forward.34} parent=0
    _
  %s5 = ssub.s32 1, %s3
  %s6 = scalar_select 0, %s5, %s3
  loop: start=0, step=1, limit=4
  $region2: #{transformer_forward.34} parent=0 // loop_pre_header
    _
  $region3: #{transformer_forward.34} parent=0 // loop_header
    %s8 = sphi 0, %s12
    %p9 = scmp.ge.s32.totalorder %s8, 4
    %s18 = sphi 0, %s20
    %s21 = sphi 0, %s18
    %s22 = sphi 0, %s21
    %s38 = sphi 0, %s22
    %s42 = sphi 0, %s42
    %s44 = sphi 0, %s42
    %s45 = sphi 0, %s44
    %s59 = sphi 0, %s45
    %s65 = sphi 0, %s67
    %s68 = sphi 0, %s65
    %s69 = sphi 0, %s68
    %s85 = sphi 0, %s69
  $region4: #{transformer_forward.34} parent=0 // loop_header_branch
    %11 = sbr.rel (%p9) target = $region8
  $region5: #{transformer_forward.34} parent=0 // loop_body
    %s13 = ssub.s32 %s8, 1
    %s14 = ssub.s32 %s8, 2
    %s15 = sadd.s32 %s8, 1
    %s16 = ssub.s32 %s8, %s15
    %p17 = scmp.eq.s32.totalorder %s16, 0
    %s19 = sadd.s32 %s18, 1
    %s20 = scalar_select %p17, %s18, %s19
    %p23 = pneg %p17
    %p24 = scmp.eq.s32.totalorder %s8, 1
    %p25 = por %p23, %p24
    %p26 = scmp.ne.s32.totalorder %s18, %s21
    %p27 = scmp.eq.s32.totalorder %s8, 0
    %p28 = por %p26, %p27
    %p29 = scmp.ne.s32.totalorder %s18, %s21
    %p30 = scmp.eq.s32.totalorder %s13, 1
    %p31 = por %p29, %p30
    %p32 = scmp.ne.s32.totalorder %s21, %s22
    %p33 = scmp.eq.s32.totalorder %s13, 0
    %p34 = por %p32, %p33
    %p35 = scmp.ne.s32.totalorder %s21, %s22
    %p36 = scmp.eq.s32.totalorder %s14, 1
    %p37 = por %p35, %p36
    %p39 = scmp.ne.s32.totalorder %s22, %s38
    %p40 = scmp.eq.s32.totalorder %s14, 0
    %p41 = por %p39, %p40
    %s43 = sadd.s32 %s42, 1
    %p46 = scmp.eq.s32.totalorder %s8, 1
    %p47 = scmp.ne.s32.totalorder %s42, %s44
    %p48 = scmp.eq.s32.totalorder %s8, 0
    %p49 = por %p47, %p48
    %p50 = scmp.ne.s32.totalorder %s42, %s44
    %p51 = scmp.eq.s32.totalorder %s13, 1
    %p52 = por %p50, %p51
    %p53 = scmp.ne.s32.totalorder %s44, %s45
    %p54 = scmp.eq.s32.totalorder %s13, 0
    %p55 = por %p53, %p54
    %p56 = scmp.ne.s32.totalorder %s44, %s45
    %p57 = scmp.eq.s32.totalorder %s14, 1
    %p58 = por %p56, %p57
    %p60 = scmp.ne.s32.totalorder %s45, %s59
    %p61 = scmp.eq.s32.totalorder %s14, 0
    %p62 = por %p60, %p61
    %s63 = ssub.s32 %s8, %s15
    %p64 = scmp.eq.s32.totalorder %s63, 0
    %s66 = sadd.s32 %s65, 1
    %s67 = scalar_select %p64, %s65, %s66
    %p70 = pneg %p64
    %p71 = scmp.eq.s32.totalorder %s8, 1
    %p72 = por %p70, %p71
    %p73 = scmp.ne.s32.totalorder %s65, %s68
    %p74 = scmp.eq.s32.totalorder %s8, 0
    %p75 = por %p73, %p74
    %p76 = scmp.ne.s32.totalorder %s65, %s68
    %p77 = scmp.eq.s32.totalorder %s13, 1
    %p78 = por %p76, %p77
    %p79 = scmp.ne.s32.totalorder %s68, %s69
    %p80 = scmp.eq.s32.totalorder %s13, 0
    %p81 = por %p79, %p80
    %p82 = scmp.ne.s32.totalorder %s68, %s69
    %p83 = scmp.eq.s32.totalorder %s14, 1
    %p84 = por %p82, %p83
    %p86 = scmp.ne.s32.totalorder %s69, %s85
    %p87 = scmp.eq.s32.totalorder %s14, 0
    %p88 = por %p86, %p87
    %p89 = scmp.le.s32.totalorder 1, %s8
    %p90 = scmp.lt.s32.totalorder %s8, 3
    %p91 = pnand %p89, %p90
    %p92 = pneg %p91
    // Predicated region
    $region9: #{transformer_forward.34} parent=5 // pred_check
      _
    $region10: #{transformer_forward.34} parent=5 // pred_check_branch
      %94 = sbr.rel (%p91) target = $region12
    $region11: #{transformer_forward.34} parent=5 // pred_region
      %s95 = ssub.s32 %s8, 1
      // Predicated region
      $region13: #{transformer_forward.34} parent=11 // pred_check
        %p96 = pneg %p55
      $region14: #{transformer_forward.34} parent=11 // pred_check_branch
        %98 = sbr.rel (%p96) target = $region16
      $region15: #{transformer_forward.34} parent=11 // pred_region
        _
      $region16: #{transformer_forward.34} parent=11 // pred_fallthru
        _
    $region12: #{transformer_forward.34} parent=5 // pred_fallthru
      _
    %p99 = scmp.lt.s32.totalorder %s8, 2
    // Predicated region
    $region17: #{transformer_forward.34} parent=5 // pred_check
      %p100 = pneg %p99
    $region18: #{transformer_forward.34} parent=5 // pred_check_branch
      %102 = sbr.rel (%p100) target = $region20
    $region19: #{transformer_forward.34} parent=5 // pred_region
      // Predicated region
      $region21: #{transformer_forward.34} parent=19 // pred_check
        %p103 = pneg %p28
      $region22: #{transformer_forward.34} parent=19 // pred_check_branch
        %105 = sbr.rel (%p103) target = $region24
      $region23: #{transformer_forward.34} parent=19 // pred_region
        %p106 = scmp.lt.s32.totalorder %s8, 1
        %s107 = scalar_select %p106, %s8, 1
        %s108 = smul.addr %s107, 16
        %s109 = smul.addr %s108, 4
        %s110 = scalar_lea.vmem %s0, %s109
      $region24: #{transformer_forward.34} parent=19 // pred_fallthru
        _
    $region20: #{transformer_forward.34} parent=5 // pred_fallthru
      _
    %p111 = scmp.le.s32.totalorder 1, %s8
    %p112 = scmp.lt.s32.totalorder %s8, 3
    %p113 = pnand %p111, %p112
    %p114 = pneg %p113
    // Predicated region
    $region25: #{transformer_forward.34} parent=5 // pred_check
      _
    $region26: #{transformer_forward.34} parent=5 // pred_check_branch
      %116 = sbr.rel (%p113) target = $region28
    $region27: #{transformer_forward.34} parent=5 // pred_region
      %s117 = ssub.s32 %s8, 1
      %p118 = scmp.lt.s32.totalorder %s13, 1
      %s119 = scalar_select %p118, %s13, 1
      %s120 = smul.addr %s119, 16
      %s121 = smul.addr %s120, 4
      %s122 = scalar_lea.vmem %s0, %s121
      %p123 = pneg %p34
      %p124 = pneg %p31
      %p125 = pneg %p55
      %p126 = pneg %p52
      %p127 = pneg %p81
      %p128 = pneg %p78
      %p129 = scmp.lt.s32.totalorder %s13, 1
      %s130 = scalar_select %p129, %s13, 1
      %s131 = smul.addr %s130, 8
      %s132 = smul.addr %s131, 2
      %s133 = scalar_lea.vmem %s2, %s132
      %p134 = scmp.lt.s32.totalorder %s13, 1
      %s135 = scalar_select %p134, %s13, 1
      %s136 = smul.addr %s135, 16
      %s137 = smul.addr %s136, 4
      %s138 = scalar_lea.vmem %s0, %s137
      %p139 = scmp.lt.s32.totalorder %s13, 1
      %s140 = scalar_select %p139, %s13, 1
      %s141 = smul.addr %s140, 8
      %s142 = smul.addr %s141, 2
      %s143 = scalar_lea.vmem %s2, %s142
      %v145 = vld [vmem:[%s138] sm:$0xf]
      %v146 = vld [vmem:[%s138 + $0x4] sm:$0x3]
      %v147 = vld [vmem:[%s138 + $0x8] sm:$0xf]
      %v148 = vld [vmem:[%s138 + $0xc] sm:$0x3]
      %v149 = vld [vmem:[%s138 + $0x10] sm:$0xf]
      %v150 = vld [vmem:[%s138 + $0x14] sm:$0x3]
      %v151 = vld [vmem:[%s138 + $0x18] sm:$0xf]
      %v152 = vld [vmem:[%s138 + $0x1c] sm:$0x3]
      %v153 = vld [vmem:[%s138 + $0x20] sm:$0xf]
      %v154 = vld [vmem:[%s138 + $0x24] sm:$0x3]
      %v155 = vld [vmem:[%s138 + $0x28] sm:$0xf]
      %v156 = vld [vmem:[%s138 + $0x2c] sm:$0x3]
      %v157 = vld [vmem:[%s138 + $0x30] sm:$0xf]
      %v158 = vld [vmem:[%s138 + $0x34] sm:$0x3]
      %v159 = vld [vmem:[%s138 + $0x38] sm:$0xf]
      %v160 = vld [vmem:[%s138 + $0x3c] sm:$0x3]
      %v161 = vcombine.low %v145, %v153
      %v163 = vunpack.c.l.s4 1983009808
      %v164 = vunpack.c.0.s8 %v163
      %v165 = vlaneseq
      %v166 = vshrl.u32 %v165, 7
      %v167 = vsub.s32 %v164, %v166
      %v168 = vrot.slane %v161, %v167
      %v169 = vcombine.low %v149, %v157
      %v171 = vunpack.c.l.s4 1983009808
      %v172 = vunpack.c.0.s8 %v171
      %v173 = vlaneseq
      %v174 = vshrl.u32 %v173, 7
      %v175 = vsub.s32 %v172, %v174
      %v176 = vrot.slane %v169, %v175
      %v177 = vcombine.low %v168, %v176
      %v178 = vcombine.high %v168, %v176
      %v180 = vunpack.c.l.s4 1934713408
      %v181 = vunpack.c.0.s8 %v180
      %v182 = vlaneseq
      %v183 = vshrl.u32 %v182, 7
      %v184 = vsub.s32 %v181, %v183
      %v185 = vrot.slane %v177, %v184
      %v187 = vunpack.c.l.s4 1934713408
      %v188 = vunpack.c.0.s8 %v187
      %v189 = vlaneseq
      %v190 = vshrl.u32 %v189, 7
      %v191 = vsub.s32 %v188, %v190
      %v192 = vrot.slane %v178, %v191
      %v193 = vcombine.high %v185, 0
      %v194 = vcombine.high %v192, 0
      %v195 = vcombine.low %v147, %v155
      %v197 = vunpack.c.l.s4 1983009808
      %v198 = vunpack.c.0.s8 %v197
      %v199 = vlaneseq
      %v200 = vshrl.u32 %v199, 7
      %v201 = vsub.s32 %v198, %v200
      %v202 = vrot.slane %v195, %v201
      %v203 = vcombine.low %v151, %v159
      %v205 = vunpack.c.l.s4 1983009808
      %v206 = vunpack.c.0.s8 %v205
      %v207 = vlaneseq
      %v208 = vshrl.u32 %v207, 7
      %v209 = vsub.s32 %v206, %v208
      %v210 = vrot.slane %v203, %v209
      %v211 = vcombine.low %v202, %v210
      %v212 = vcombine.high %v202, %v210
      %v214 = vunpack.c.l.s4 1934713408
      %v215 = vunpack.c.0.s8 %v214
      %v216 = vlaneseq
      %v217 = vshrl.u32 %v216, 7
      %v218 = vsub.s32 %v215, %v217
      %v219 = vrot.slane %v211, %v218
      %v221 = vunpack.c.l.s4 1934713408
      %v222 = vunpack.c.0.s8 %v221
      %v223 = vlaneseq
      %v224 = vshrl.u32 %v223, 7
      %v225 = vsub.s32 %v222, %v224
      %v226 = vrot.slane %v212, %v225
      %v227 = vcombine.high %v219, 0
      %v228 = vcombine.high %v226, 0
      %v229 = vcombine.low %v146, %v154
      %v231 = vunpack.c.l.s4 1983009808
      %v232 = vunpack.c.0.s8 %v231
      %v233 = vlaneseq
      %v234 = vshrl.u32 %v233, 7
      %v235 = vsub.s32 %v232, %v234
      %v236 = vrot.slane %v229, %v235
      %v237 = vcombine.low %v150, %v158
      %v239 = vunpack.c.l.s4 1983009808
      %v240 = vunpack.c.0.s8 %v239
      %v241 = vlaneseq
      %v242 = vshrl.u32 %v241, 7
      %v243 = vsub.s32 %v240, %v242
      %v244 = vrot.slane %v237, %v243
      %v245 = vcombine.low %v236, %v244
      %v247 = vunpack.c.l.s4 1934713408
      %v248 = vunpack.c.0.s8 %v247
      %v249 = vlaneseq
      %v250 = vshrl.u32 %v249, 7
      %v251 = vsub.s32 %v248, %v250
      %v252 = vrot.slane %v245, %v251
      %v253 = vcombine.high %v252, 0
      %v254 = vcombine.low %v148, %v156
      %v256 = vunpack.c.l.s4 1983009808
      %v257 = vunpack.c.0.s8 %v256
      %v258 = vlaneseq
      %v259 = vshrl.u32 %v258, 7
      %v260 = vsub.s32 %v257, %v259
      %v261 = vrot.slane %v254, %v260
      %v262 = vcombine.low %v152, %v160
      %v264 = vunpack.c.l.s4 1983009808
      %v265 = vunpack.c.0.s8 %v264
      %v266 = vlaneseq
      %v267 = vshrl.u32 %v266, 7
      %v268 = vsub.s32 %v265, %v267
      %v269 = vrot.slane %v262, %v268
      %v270 = vcombine.low %v261, %v269
      %v272 = vunpack.c.l.s4 1934713408
      %v273 = vunpack.c.0.s8 %v272
      %v274 = vlaneseq
      %v275 = vshrl.u32 %v274, 7
      %v276 = vsub.s32 %v273, %v275
      %v277 = vrot.slane %v270, %v276
      %v278 = vcombine.high %v277, 0
      %v281 = vpack.i.b16 %v219, %v185
      %v282 = vshrl.u32 %v185, 16
      %v283 = vshrl.u32 %v219, 16
      %v284 = vpack.i.b16 %v283, %v282
      %v287 = vpack.i.b16 %v227, %v193
      %v288 = vshrl.u32 %v193, 16
      %v289 = vshrl.u32 %v227, 16
      %v290 = vpack.i.b16 %v289, %v288
      %v293 = vpack.i.b16 %v226, %v192
      %v294 = vshrl.u32 %v192, 16
      %v295 = vshrl.u32 %v226, 16
      %v296 = vpack.i.b16 %v295, %v294
      %v299 = vpack.i.b16 %v228, %v194
      %v300 = vshrl.u32 %v194, 16
      %v301 = vshrl.u32 %v228, 16
      %v302 = vpack.i.b16 %v301, %v300
      %v305 = vpack.i.b16 %v277, %v252
      %v306 = vshrl.u32 %v252, 16
      %v307 = vshrl.u32 %v277, 16
      %v308 = vpack.i.b16 %v307, %v306
      %v311 = vpack.i.b16 %v278, %v253
      %v312 = vshrl.u32 %v253, 16
      %v313 = vshrl.u32 %v278, 16
      %v314 = vpack.i.b16 %v313, %v312
      %v315 = vld [vmem:[%s1] sm:$0xff]
      %vm316 = vcmask 64512
      %v318 = vsel %vm316, %v281, 0
      %v321 = vsel %vm316, %v293, 0
      %323 = vmatprep.subr.bf16.mxu0 0
      %324 = vmatpush1.bf16.xpose.msra.mxu0 %v321
      %325 = vmatprep.subr.bf16.mxu0 0
      %326 = vmatpush1.bf16.xpose.msra.mxu0 0
      %327 = vmatprep.subr.bf16.mxu0 0
      %328 = vmatpush1.bf16.xpose.msra.mxu0 0
      %329 = vmatprep.subr.bf16.mxu0 0
      %330 = vmatpush1.bf16.xpose.msra.mxu0 0
      %331 = vmatprep.subr.bf16.mxu0 0
      %332 = vmatpush1.bf16.xpose.msra.mxu0 0
      %333 = vmatprep.subr.bf16.mxu0 0
      %334 = vmatpush1.bf16.xpose.msra.mxu0 0
      %335 = vmatprep.subr.bf16.mxu0 0
      %336 = vmatpush1.bf16.xpose.msra.mxu0 0
      %337 = vmatprep.subr.bf16.mxu0 0
      %338 = vmatpush1.bf16.xpose.msra.mxu0 0
      %339 = vmatprep.subr.bf16.mxu0 0
      %340 = vmatpush1.bf16.xpose.msra.mxu0 0
      %341 = vmatprep.subr.bf16.mxu0 0
      %342 = vmatpush1.bf16.xpose.msra.mxu0 0
      %343 = vmatprep.subr.bf16.mxu0 0
      %344 = vmatpush1.bf16.xpose.msra.mxu0 0
      %345 = vmatprep.subr.bf16.mxu0 0
      %346 = vmatpush1.bf16.xpose.msra.mxu0 0
      %347 = vmatprep.subr.bf16.mxu0 0
      %348 = vmatpush1.bf16.xpose.msra.mxu0 0
      %349 = vmatprep.subr.bf16.mxu0 0
      %350 = vmatpush1.bf16.xpose.msra.mxu0 0
      %351 = vmatprep.subr.bf16.mxu0 0
      %352 = vmatpush1.bf16.xpose.msra.mxu0 0
      %353 = vmatprep.subr.bf16.mxu0 0
      %354 = vmatpush1.bf16.xpose.msra.mxu0 0
      %355 = vmatprep.mubr.bf16.mxu0 0
      %356 = vmatmul.mubr.bf16.gmra.mrb[0].mxu0 %v318
      %v357 = vpop.f32.mrb[0].mxu0
      %v358 = vadd.f32 0.0, %v357
      %v359 = vpop.f32.mrb[0].mxu0
      %v360 = vpop.f32.mrb[0].mxu0
      %v361 = vpop.f32.mrb[0].mxu0
      %362 = vdwg.mxu0
      %v364 = vsel %vm316, %v284, 0
      %v367 = vsel %vm316, %v296, 0
      %369 = vmatprep.subr.bf16.mxu0 0
      %370 = vmatpush1.bf16.xpose.msra.mxu0 %v367
      %371 = vmatprep.subr.bf16.mxu0 0
      %372 = vmatpush1.bf16.xpose.msra.mxu0 0
      %373 = vmatprep.subr.bf16.mxu0 0
      %374 = vmatpush1.bf16.xpose.msra.mxu0 0
      %375 = vmatprep.subr.bf16.mxu0 0
      %376 = vmatpush1.bf16.xpose.msra.mxu0 0
      %377 = vmatprep.subr.bf16.mxu0 0
      %378 = vmatpush1.bf16.xpose.msra.mxu0 0
      %379 = vmatprep.subr.bf16.mxu0 0
      %380 = vmatpush1.bf16.xpose.msra.mxu0 0
      %381 = vmatprep.subr.bf16.mxu0 0
      %382 = vmatpush1.bf16.xpose.msra.mxu0 0
      %383 = vmatprep.subr.bf16.mxu0 0
      %384 = vmatpush1.bf16.xpose.msra.mxu0 0
      %385 = vmatprep.subr.bf16.mxu0 0
      %386 = vmatpush1.bf16.xpose.msra.mxu0 0
      %387 = vmatprep.subr.bf16.mxu0 0
      %388 = vmatpush1.bf16.xpose.msra.mxu0 0
      %389 = vmatprep.subr.bf16.mxu0 0
      %390 = vmatpush1.bf16.xpose.msra.mxu0 0
      %391 = vmatprep.subr.bf16.mxu0 0
      %392 = vmatpush1.bf16.xpose.msra.mxu0 0
      %393 = vmatprep.subr.bf16.mxu0 0
      %394 = vmatpush1.bf16.xpose.msra.mxu0 0
      %395 = vmatprep.subr.bf16.mxu0 0
      %396 = vmatpush1.bf16.xpose.msra.mxu0 0
      %397 = vmatprep.subr.bf16.mxu0 0
      %398 = vmatpush1.bf16.xpose.msra.mxu0 0
      %399 = vmatprep.subr.bf16.mxu0 0
      %400 = vmatpush1.bf16.xpose.msra.mxu0 0
      %401 = vmatprep.mubr.bf16.mxu0 0
      %402 = vmatmul.mubr.bf16.gmra.mrb[0].mxu0 %v364
      %v403 = vpop.f32.mrb[0].mxu0
      %v404 = vadd.f32 0.0, %v403
      %v405 = vpop.f32.mrb[0].mxu0
      %v406 = vpop.f32.mrb[0].mxu0
      %v407 = vpop.f32.mrb[0].mxu0
      %408 = vdwg.mxu0
      %v410 = vsel %vm316, %v287, 0
      %v413 = vsel %vm316, %v299, 0
      %415 = vmatprep.subr.bf16.mxu0 0
      %416 = vmatpush1.bf16.xpose.msra.mxu0 %v413
      %417 = vmatprep.subr.bf16.mxu0 0
      %418 = vmatpush1.bf16.xpose.msra.mxu0 0
      %419 = vmatprep.subr.bf16.mxu0 0
      %420 = vmatpush1.bf16.xpose.msra.mxu0 0
      %421 = vmatprep.subr.bf16.mxu0 0
      %422 = vmatpush1.bf16.xpose.msra.mxu0 0
      %423 = vmatprep.subr.bf16.mxu0 0
      %424 = vmatpush1.bf16.xpose.msra.mxu0 0
      %425 = vmatprep.subr.bf16.mxu0 0
      %426 = vmatpush1.bf16.xpose.msra.mxu0 0
      %427 = vmatprep.subr.bf16.mxu0 0
      %428 = vmatpush1.bf16.xpose.msra.mxu0 0
      %429 = vmatprep.subr.bf16.mxu0 0
      %430 = vmatpush1.bf16.xpose.msra.mxu0 0
      %431 = vmatprep.subr.bf16.mxu0 0
      %432 = vmatpush1.bf16.xpose.msra.mxu0 0
      %433 = vmatprep.subr.bf16.mxu0 0
      %434 = vmatpush1.bf16.xpose.msra.mxu0 0
      %435 = vmatprep.subr.bf16.mxu0 0
      %436 = vmatpush1.bf16.xpose.msra.mxu0 0
      %437 = vmatprep.subr.bf16.mxu0 0
      %438 = vmatpush1.bf16.xpose.msra.mxu0 0
      %439 = vmatprep.subr.bf16.mxu0 0
      %440 = vmatpush1.bf16.xpose.msra.mxu0 0
      %441 = vmatprep.subr.bf16.mxu0 0
      %442 = vmatpush1.bf16.xpose.msra.mxu0 0
      %443 = vmatprep.subr.bf16.mxu0 0
      %444 = vmatpush1.bf16.xpose.msra.mxu0 0
      %445 = vmatprep.subr.bf16.mxu0 0
      %446 = vmatpush1.bf16.xpose.msra.mxu0 0
      %447 = vmatprep.mubr.bf16.mxu0 0
      %448 = vmatmul.mubr.bf16.gmra.mrb[0].mxu0 %v410
      %v449 = vpop.f32.mrb[0].mxu0
      %v450 = vadd.f32 0.0, %v449
      %v451 = vpop.f32.mrb[0].mxu0
      %v452 = vpop.f32.mrb[0].mxu0
      %v453 = vpop.f32.mrb[0].mxu0
      %454 = vdwg.mxu0
      %v456 = vsel %vm316, %v290, 0
      %v459 = vsel %vm316, %v302, 0
      %461 = vmatprep.subr.bf16.mxu0 0
      %462 = vmatpush1.bf16.xpose.msra.mxu0 %v459
      %463 = vmatprep.subr.bf16.mxu0 0
      %464 = vmatpush1.bf16.xpose.msra.mxu0 0
      %465 = vmatprep.subr.bf16.mxu0 0
      %466 = vmatpush1.bf16.xpose.msra.mxu0 0
      %467 = vmatprep.subr.bf16.mxu0 0
      %468 = vmatpush1.bf16.xpose.msra.mxu0 0
      %469 = vmatprep.subr.bf16.mxu0 0
      %470 = vmatpush1.bf16.xpose.msra.mxu0 0
      %471 = vmatprep.subr.bf16.mxu0 0
      %472 = vmatpush1.bf16.xpose.msra.mxu0 0
      %473 = vmatprep.subr.bf16.mxu0 0
      %474 = vmatpush1.bf16.xpose.msra.mxu0 0
      %475 = vmatprep.subr.bf16.mxu0 0
      %476 = vmatpush1.bf16.xpose.msra.mxu0 0
      %477 = vmatprep.subr.bf16.mxu0 0
      %478 = vmatpush1.bf16.xpose.msra.mxu0 0
      %479 = vmatprep.subr.bf16.mxu0 0
      %480 = vmatpush1.bf16.xpose.msra.mxu0 0
      %481 = vmatprep.subr.bf16.mxu0 0
      %482 = vmatpush1.bf16.xpose.msra.mxu0 0
      %483 = vmatprep.subr.bf16.mxu0 0
      %484 = vmatpush1.bf16.xpose.msra.mxu0 0
      %485 = vmatprep.subr.bf16.mxu0 0
      %486 = vmatpush1.bf16.xpose.msra.mxu0 0
      %487 = vmatprep.subr.bf16.mxu0 0
      %488 = vmatpush1.bf16.xpose.msra.mxu0 0
      %489 = vmatprep.subr.bf16.mxu0 0
      %490 = vmatpush1.bf16.xpose.msra.mxu0 0
      %491 = vmatprep.subr.bf16.mxu0 0
      %492 = vmatpush1.bf16.xpose.msra.mxu0 0
      %493 = vmatprep.mubr.bf16.mxu0 0
      %494 = vmatmul.mubr.bf16.gmra.mrb[0].mxu0 %v456
      %v495 = vpop.f32.mrb[0].mxu0
      %v496 = vadd.f32 0.0, %v495
      %v497 = vpop.f32.mrb[0].mxu0
      %v498 = vpop.f32.mrb[0].mxu0
      %v499 = vpop.f32.mrb[0].mxu0
      %500 = vdwg.mxu0
      %v501 = vmul.f32 %v358, 0.35355338
      %v502 = vmul.f32 %v404, 0.35355338
      %v503 = vmul.f32 %v450, 0.35355338
      %v504 = vmul.f32 %v496, 0.35355338
      %v505 = vadd.f32 %v501, %v315
      %v506 = vadd.f32 %v502, %v315
      %v507 = vadd.f32 %v503, %v315
      %v508 = vadd.f32 %v504, %v315
      %v509 = vsel %vm316, %v505, -inf
      %510 = vmax.xlane.f32.xlu0 %v509
      %v511 = vpop.xlane.xlu0 %510
      %v512 = vsel %vm316, %v506, -inf
      %513 = vmax.xlane.f32.xlu0 %v512
      %v514 = vpop.xlane.xlu0 %513
      %v515 = vsel %vm316, %v507, -inf
      %516 = vmax.xlane.f32.xlu0 %v515
      %v517 = vpop.xlane.xlu0 %516
      %v518 = vsel %vm316, %v508, -inf
      %519 = vmax.xlane.f32.xlu0 %v518
      %v520 = vpop.xlane.xlu0 %519
      %v521 = vsub.f32 %v505, %v511
      %v522 = vsub.f32 %v506, %v514
      %v523 = vsub.f32 %v507, %v517
      %v524 = vsub.f32 %v508, %v520
      %v525 = vmul.f32 %v521, 1.442695
      %v526 = vpow.pop %v525
      %v527 = vmul.f32 %v522, 1.442695
      %v528 = vpow.pop %v527
      %v529 = vmul.f32 %v523, 1.442695
      %v530 = vpow.pop %v529
      %v531 = vmul.f32 %v524, 1.442695
      %v532 = vpow.pop %v531
      %v533 = vsel %vm316, %v526, 0.0
      %534 = vadd.xlane.f32.xlu0 %v533
      %v535 = vpop.xlane.xlu0 %534
      %v536 = vsel %vm316, %v528, 0.0
      %537 = vadd.xlane.f32.xlu0 %v536
      %v538 = vpop.xlane.xlu0 %537
      %v539 = vsel %vm316, %v530, 0.0
      %540 = vadd.xlane.f32.xlu0 %v539
      %v541 = vpop.xlane.xlu0 %540
      %v542 = vsel %vm316, %v532, 0.0
      %543 = vadd.xlane.f32.xlu0 %v542
      %v544 = vpop.xlane.xlu0 %543
      %v545 = vpack.c.bf16 %v526, %v526
      %v546 = vpack.c.bf16 %v528, %v528
      %v547 = vpack.c.bf16 %v530, %v530
      %v548 = vpack.c.bf16 %v532, %v532
      %v550 = vsel %vm316, %v545, 0
      %vm552 = vcmask 1043456
      %v554 = vsel %vm552, %v305, 0
      %556 = vmatprep.subr.bf16.mxu0 0
      %557 = vmatpush1.bf16.msra.mxu0 %v554
      %558 = vmatprep.subr.bf16.mxu0 0
      %559 = vmatpush1.bf16.msra.mxu0 0
      %560 = vmatprep.subr.bf16.mxu0 0
      %561 = vmatpush1.bf16.msra.mxu0 0
      %562 = vmatprep.subr.bf16.mxu0 0
      %563 = vmatpush1.bf16.msra.mxu0 0
      %564 = vmatprep.subr.bf16.mxu0 0
      %565 = vmatpush1.bf16.msra.mxu0 0
      %566 = vmatprep.subr.bf16.mxu0 0
      %567 = vmatpush1.bf16.msra.mxu0 0
      %568 = vmatprep.subr.bf16.mxu0 0
      %569 = vmatpush1.bf16.msra.mxu0 0
      %570 = vmatprep.subr.bf16.mxu0 0
      %571 = vmatpush1.bf16.msra.mxu0 0
      %572 = vmatprep.subr.bf16.mxu0 0
      %573 = vmatpush1.bf16.msra.mxu0 0
      %574 = vmatprep.subr.bf16.mxu0 0
      %575 = vmatpush1.bf16.msra.mxu0 0
      %576 = vmatprep.subr.bf16.mxu0 0
      %577 = vmatpush1.bf16.msra.mxu0 0
      %578 = vmatprep.subr.bf16.mxu0 0
      %579 = vmatpush1.bf16.msra.mxu0 0
      %580 = vmatprep.subr.bf16.mxu0 0
      %581 = vmatpush1.bf16.msra.mxu0 0
      %582 = vmatprep.subr.bf16.mxu0 0
      %583 = vmatpush1.bf16.msra.mxu0 0
      %584 = vmatprep.subr.bf16.mxu0 0
      %585 = vmatpush1.bf16.msra.mxu0 0
      %586 = vmatprep.subr.bf16.mxu0 0
      %587 = vmatpush1.bf16.msra.mxu0 0
      %588 = vmatprep.mubr.bf16.mxu0 0
      %589 = vmatmul.mubr.bf16.gmra.mrb[0].mxu0 %v550
      %v590 = vpop.f32.mrb[0].mxu0
      %v591 = vadd.f32 0.0, %v590
      %v592 = vpop.f32.mrb[0].mxu0
      %v593 = vpop.f32.mrb[0].mxu0
      %v594 = vpop.f32.mrb[0].mxu0
      %595 = vdwg.mxu0
      %v597 = vsel %vm316, %v546, 0
      %v600 = vsel %vm552, %v308, 0
      %602 = vmatprep.subr.bf16.mxu0 0
      %603 = vmatpush1.bf16.msra.mxu0 %v600
      %604 = vmatprep.subr.bf16.mxu0 0
      %605 = vmatpush1.bf16.msra.mxu0 0
      %606 = vmatprep.subr.bf16.mxu0 0
      %607 = vmatpush1.bf16.msra.mxu0 0
      %608 = vmatprep.subr.bf16.mxu0 0
      %609 = vmatpush1.bf16.msra.mxu0 0
      %610 = vmatprep.subr.bf16.mxu0 0
      %611 = vmatpush1.bf16.msra.mxu0 0
      %612 = vmatprep.subr.bf16.mxu0 0
      %613 = vmatpush1.bf16.msra.mxu0 0
      %614 = vmatprep.subr.bf16.mxu0 0
      %615 = vmatpush1.bf16.msra.mxu0 0
      %616 = vmatprep.subr.bf16.mxu0 0
      %617 = vmatpush1.bf16.msra.mxu0 0
      %618 = vmatprep.subr.bf16.mxu0 0
      %619 = vmatpush1.bf16.msra.mxu0 0
      %620 = vmatprep.subr.bf16.mxu0 0
      %621 = vmatpush1.bf16.msra.mxu0 0
      %622 = vmatprep.subr.bf16.mxu0 0
      %623 = vmatpush1.bf16.msra.mxu0 0
      %624 = vmatprep.subr.bf16.mxu0 0
      %625 = vmatpush1.bf16.msra.mxu0 0
      %626 = vmatprep.subr.bf16.mxu0 0
      %627 = vmatpush1.bf16.msra.mxu0 0
      %628 = vmatprep.subr.bf16.mxu0 0
      %629 = vmatpush1.bf16.msra.mxu0 0
      %630 = vmatprep.subr.bf16.mxu0 0
      %631 = vmatpush1.bf16.msra.mxu0 0
      %632 = vmatprep.subr.bf16.mxu0 0
      %633 = vmatpush1.bf16.msra.mxu0 0
      %634 = vmatprep.mubr.bf16.mxu0 0
      %635 = vmatmul.mubr.bf16.gmra.mrb[0].mxu0 %v597
      %v636 = vpop.f32.mrb[0].mxu0
      %v637 = vadd.f32 0.0, %v636
      %v638 = vpop.f32.mrb[0].mxu0
      %v639 = vpop.f32.mrb[0].mxu0
      %v640 = vpop.f32.mrb[0].mxu0
      %641 = vdwg.mxu0
      %v643 = vsel %vm316, %v547, 0
      %v646 = vsel %vm552, %v311, 0
      %648 = vmatprep.subr.bf16.mxu0 0
      %649 = vmatpush1.bf16.msra.mxu0 %v646
      %650 = vmatprep.subr.bf16.mxu0 0
      %651 = vmatpush1.bf16.msra.mxu0 0
      %652 = vmatprep.subr.bf16.mxu0 0
      %653 = vmatpush1.bf16.msra.mxu0 0
      %654 = vmatprep.subr.bf16.mxu0 0
      %655 = vmatpush1.bf16.msra.mxu0 0
      %656 = vmatprep.subr.bf16.mxu0 0
      %657 = vmatpush1.bf16.msra.mxu0 0
      %658 = vmatprep.subr.bf16.mxu0 0
      %659 = vmatpush1.bf16.msra.mxu0 0
      %660 = vmatprep.subr.bf16.mxu0 0
      %661 = vmatpush1.bf16.msra.mxu0 0
      %662 = vmatprep.subr.bf16.mxu0 0
      %663 = vmatpush1.bf16.msra.mxu0 0
      %664 = vmatprep.subr.bf16.mxu0 0
      %665 = vmatpush1.bf16.msra.mxu0 0
      %666 = vmatprep.subr.bf16.mxu0 0
      %667 = vmatpush1.bf16.msra.mxu0 0
      %668 = vmatprep.subr.bf16.mxu0 0
      %669 = vmatpush1.bf16.msra.mxu0 0
      %670 = vmatprep.subr.bf16.mxu0 0
      %671 = vmatpush1.bf16.msra.mxu0 0
      %672 = vmatprep.subr.bf16.mxu0 0
      %673 = vmatpush1.bf16.msra.mxu0 0
      %674 = vmatprep.subr.bf16.mxu0 0
      %675 = vmatpush1.bf16.msra.mxu0 0
      %676 = vmatprep.subr.bf16.mxu0 0
      %677 = vmatpush1.bf16.msra.mxu0 0
      %678 = vmatprep.subr.bf16.mxu0 0
      %679 = vmatpush1.bf16.msra.mxu0 0
      %680 = vmatprep.mubr.bf16.mxu0 0
      %681 = vmatmul.mubr.bf16.gmra.mrb[0].mxu0 %v643
      %v682 = vpop.f32.mrb[0].mxu0
      %v683 = vadd.f32 0.0, %v682
      %v684 = vpop.f32.mrb[0].mxu0
      %v685 = vpop.f32.mrb[0].mxu0
      %v686 = vpop.f32.mrb[0].mxu0
      %687 = vdwg.mxu0
      %v689 = vsel %vm316, %v548, 0
      %v692 = vsel %vm552, %v314, 0
      %694 = vmatprep.subr.bf16.mxu0 0
      %695 = vmatpush1.bf16.msra.mxu0 %v692
      %696 = vmatprep.subr.bf16.mxu0 0
      %697 = vmatpush1.bf16.msra.mxu0 0
      %698 = vmatprep.subr.bf16.mxu0 0
      %699 = vmatpush1.bf16.msra.mxu0 0
      %700 = vmatprep.subr.bf16.mxu0 0
      %701 = vmatpush1.bf16.msra.mxu0 0
      %702 = vmatprep.subr.bf16.mxu0 0
      %703 = vmatpush1.bf16.msra.mxu0 0
      %704 = vmatprep.subr.bf16.mxu0 0
      %705 = vmatpush1.bf16.msra.mxu0 0
      %706 = vmatprep.subr.bf16.mxu0 0
      %707 = vmatpush1.bf16.msra.mxu0 0
      %708 = vmatprep.subr.bf16.mxu0 0
      %709 = vmatpush1.bf16.msra.mxu0 0
      %710 = vmatprep.subr.bf16.mxu0 0
      %711 = vmatpush1.bf16.msra.mxu0 0
      %712 = vmatprep.subr.bf16.mxu0 0
      %713 = vmatpush1.bf16.msra.mxu0 0
      %714 = vmatprep.subr.bf16.mxu0 0
      %715 = vmatpush1.bf16.msra.mxu0 0
      %716 = vmatprep.subr.bf16.mxu0 0
      %717 = vmatpush1.bf16.msra.mxu0 0
      %718 = vmatprep.subr.bf16.mxu0 0
      %719 = vmatpush1.bf16.msra.mxu0 0
      %720 = vmatprep.subr.bf16.mxu0 0
      %721 = vmatpush1.bf16.msra.mxu0 0
      %722 = vmatprep.subr.bf16.mxu0 0
      %723 = vmatpush1.bf16.msra.mxu0 0
      %724 = vmatprep.subr.bf16.mxu0 0
      %725 = vmatpush1.bf16.msra.mxu0 0
      %726 = vmatprep.mubr.bf16.mxu0 0
      %727 = vmatmul.mubr.bf16.gmra.mrb[0].mxu0 %v689
      %v728 = vpop.f32.mrb[0].mxu0
      %v729 = vadd.f32 0.0, %v728
      %v730 = vpop.f32.mrb[0].mxu0
      %v731 = vpop.f32.mrb[0].mxu0
      %v732 = vpop.f32.mrb[0].mxu0
      %733 = vdwg.mxu0
      %v734 = vrcp.pop %v535
      %v735 = vrcp.pop %v538
      %v736 = vrcp.pop %v541
      %v737 = vrcp.pop %v544
      %v738 = vmul.f32 %v591, %v734
      %v739 = vmul.f32 %v637, %v735
      %v740 = vmul.f32 %v683, %v736
      %v741 = vmul.f32 %v729, %v737
      %v742 = vcombine.low %v738, %v740
      %v743 = vcombine.high %v738, %v740
      %v745 = vunpack.c.l.s4 1983009808
      %v746 = vunpack.c.0.s8 %v745
      %v747 = vlaneseq
      %v748 = vshrl.u32 %v747, 7
      %v749 = vsub.s32 %v746, %v748
      %v750 = vrot.slane %v742, %v749
      %v752 = vunpack.c.l.s4 1983009808
      %v753 = vunpack.c.0.s8 %v752
      %v754 = vlaneseq
      %v755 = vshrl.u32 %v754, 7
      %v756 = vsub.s32 %v753, %v755
      %v757 = vrot.slane %v743, %v756
      %v758 = vcombine.low %v739, %v741
      %v759 = vcombine.high %v739, %v741
      %v761 = vunpack.c.l.s4 1983009808
      %v762 = vunpack.c.0.s8 %v761
      %v763 = vlaneseq
      %v764 = vshrl.u32 %v763, 7
      %v765 = vsub.s32 %v762, %v764
      %v766 = vrot.slane %v758, %v765
      %v768 = vunpack.c.l.s4 1983009808
      %v769 = vunpack.c.0.s8 %v768
      %v770 = vlaneseq
      %v771 = vshrl.u32 %v770, 7
      %v772 = vsub.s32 %v769, %v771
      %v773 = vrot.slane %v759, %v772
      %v774 = vcombine.low %v750, %v766
      %v775 = vcombine.high %v750, %v766
      %v777 = vunpack.c.l.s4 1934713408
      %v778 = vunpack.c.0.s8 %v777
      %v779 = vlaneseq
      %v780 = vshrl.u32 %v779, 7
      %v781 = vsub.s32 %v778, %v780
      %v782 = vrot.slane %v774, %v781
      %v784 = vunpack.c.l.s4 1934713408
      %v785 = vunpack.c.0.s8 %v784
      %v786 = vlaneseq
      %v787 = vshrl.u32 %v786, 7
      %v788 = vsub.s32 %v785, %v787
      %v789 = vrot.slane %v775, %v788
      %v790 = vcombine.low %v757, %v773
      %v791 = vcombine.high %v757, %v773
      %v793 = vunpack.c.l.s4 1934713408
      %v794 = vunpack.c.0.s8 %v793
      %v795 = vlaneseq
      %v796 = vshrl.u32 %v795, 7
      %v797 = vsub.s32 %v794, %v796
      %v798 = vrot.slane %v790, %v797
      %v800 = vunpack.c.l.s4 1934713408
      %v801 = vunpack.c.0.s8 %v800
      %v802 = vlaneseq
      %v803 = vshrl.u32 %v802, 7
      %v804 = vsub.s32 %v801, %v803
      %v805 = vrot.slane %v791, %v804
      %v806 = vcombine.high %v782, 0.0
      %v807 = vcombine.high %v789, 0.0
      %v808 = vcombine.high %v798, 0.0
      %v809 = vcombine.high %v805, 0.0
      %v810 = vpack.c.bf16 %v782, %v782
      %v811 = vpack.c.bf16 %v806, %v806
      %v812 = vpack.c.bf16 %v789, %v789
      %v813 = vpack.c.bf16 %v807, %v807
      %v814 = vpack.c.bf16 %v798, %v798
      %v815 = vpack.c.bf16 %v808, %v808
      %v816 = vpack.c.bf16 %v805, %v805
      %v817 = vpack.c.bf16 %v809, %v809
      %vm818 = vcmask 58368
      %819 = vst.msk [vmem:[%s143] sm:$0x3] %vm818, %v810
      %820 = vst.msk [vmem:[%s143 + $0x2] sm:$0x3] %vm818, %v811
      %821 = vst.msk [vmem:[%s143 + $0x4] sm:$0x3] %vm818, %v812
      %822 = vst.msk [vmem:[%s143 + $0x6] sm:$0x3] %vm818, %v813
      %823 = vst.msk [vmem:[%s143 + $0x8] sm:$0x3] %vm818, %v814
      %824 = vst.msk [vmem:[%s143 + $0xa] sm:$0x3] %vm818, %v815
      %825 = vst.msk [vmem:[%s143 + $0xc] sm:$0x3] %vm818, %v816
      %826 = vst.msk [vmem:[%s143 + $0xe] sm:$0x3] %vm818, %v817
      %p827 = scmp.lt.s32.totalorder %s13, 1
      %s828 = scalar_select %p827, %s13, 1
      %s829 = smul.addr %s828, 8
      %s830 = smul.addr %s829, 2
      %s831 = scalar_lea.vmem %s2, %s830
      // Predicated region
      $region29: #{transformer_forward.34} parent=27 // pred_check
        %p832 = pneg %p78
      $region30: #{transformer_forward.34} parent=27 // pred_check_branch
        %834 = sbr.rel (%p832) target = $region32
      $region31: #{transformer_forward.34} parent=27 // pred_region
        _
      $region32: #{transformer_forward.34} parent=27 // pred_fallthru
        _
    $region28: #{transformer_forward.34} parent=5 // pred_fallthru
      _
    %p835 = scmp.le.s32.totalorder 2, %s8
    // Predicated region
    $region33: #{transformer_forward.34} parent=5 // pred_check
      %p836 = pneg %p835
    $region34: #{transformer_forward.34} parent=5 // pred_check_branch
      %838 = sbr.rel (%p836) target = $region36
    $region35: #{transformer_forward.34} parent=5 // pred_region
      %s839 = ssub.s32 %s8, 2
      // Predicated region
      $region37: #{transformer_forward.34} parent=35 // pred_check
        %p840 = pneg %p84
      $region38: #{transformer_forward.34} parent=35 // pred_check_branch
        %842 = sbr.rel (%p840) target = $region40
      $region39: #{transformer_forward.34} parent=35 // pred_region
        %p843 = scmp.lt.s32.totalorder %s14, 1
        %s844 = scalar_select %p843, %s14, 1
        %s845 = smul.addr %s844, 8
        %s846 = smul.addr %s845, 2
        %s847 = scalar_lea.vmem %s2, %s846
      $region40: #{transformer_forward.34} parent=35 // pred_fallthru
        _
    $region36: #{transformer_forward.34} parent=5 // pred_fallthru
      _
  $region6: #{transformer_forward.34} parent=0 // loop_footer
    %s12 = sadd.s32 1, %s8
  $region7: #{transformer_forward.34} parent=0 // loop_footer_branch
    %7 = sbr.rel target = $region3
  $region8: #{transformer_forward.34} parent=0 // loop_exit
    _

// kernel: transformer_forward.47
$region0: #{transformer_forward.47}
  #allocation0 [shape = 'u32[]', space=smem, size = 0x4, offset = 0x4, fixed_abs, tag = 'smem constant byte address 0x4 - core index']
  #allocation1 [shape = 'u32[144,128]{1,0:T(1,128)}', space=vmem, size = 0x12000, scoped, tag = 'internal scratch']
  %s0 = inlined_call_operand.vmem [shape: bf16[16,32], index: 0, kind: input, shape index: {}]
  %s1 = inlined_call_operand.vmem [shape: bf16[32,128], index: 1, kind: input, shape index: {}]
  %s2 = inlined_call_operand.vmem [shape: f32[1,128], index: 2, kind: input, shape index: {}]
  %s3 = inlined_call_operand.vmem [shape: f32[16,128], index: 3, kind: output, shape index: {}]
  %s4 = sld [smem:[#allocation0]]
  $region22: #{transformer_forward.47} parent=0
    _
  %s6 = ssub.s32 1, %s4
  %s7 = scalar_select 0, %s6, %s4
  // Predicated region
  $region2: #{transformer_forward.47} parent=0 // pred_check
    _
  $region3: #{transformer_forward.47} parent=0 // pred_check_branch
    %9 = sbr.rel (0) target = $region5
  $region4: #{transformer_forward.47} parent=0 // pred_region
    _
  $region5: #{transformer_forward.47} parent=0 // pred_fallthru
    _
  // Predicated region
  $region6: #{transformer_forward.47} parent=0 // pred_check
    _
  $region7: #{transformer_forward.47} parent=0 // pred_check_branch
    %11 = sbr.rel (0) target = $region9
  $region8: #{transformer_forward.47} parent=0 // pred_region
    _
  $region9: #{transformer_forward.47} parent=0 // pred_fallthru
    _
  // Predicated region
  $region10: #{transformer_forward.47} parent=0 // pred_check
    _
  $region11: #{transformer_forward.47} parent=0 // pred_check_branch
    %13 = sbr.rel (0) target = $region13
  $region12: #{transformer_forward.47} parent=0 // pred_region
    _
  $region13: #{transformer_forward.47} parent=0 // pred_fallthru
    _
  %v15 = vld [vmem:[%s0] sm:$0xf]
  %v16 = vld [vmem:[%s0 + $0x4] sm:$0xf]
  %v17 = vld [vmem:[%s1] sm:$0xf]
  %v18 = vld [vmem:[%s1 + $0x4] sm:$0xf]
  %v19 = vld [vmem:[%s1 + $0x8] sm:$0xf]
  %v20 = vld [vmem:[%s1 + $0xc] sm:$0xf]
  %v21 = vld [vmem:[%s2] sm:$0x1]
  %v23 = vlaneseq
  %v24 = vshrl.u32 %v23, 7
  %v25 = vsub.s32 0, %v24
  %v26 = vrot.slane %v21, %v25
  %v30 = vunpack.c.l.b16 %v15
  %v31 = vunpack.c.l.b16 %v16
  %v32 = vpack.c.b16 %v31, %v30
  %v37 = vunpack.c.l.b16 %v17
  %v38 = vunpack.c.l.b16 %v18
  %v39 = vunpack.c.l.b16 %v19
  %v40 = vunpack.c.l.b16 %v20
  %v41 = vpack.c.b16 %v38, %v37
  %v42 = vpack.c.b16 %v40, %v39
  %vm45 = vcmask 261120
  %v47 = vsel %vm45, %v32, 0
  %49 = vmatprep.subr.bf16.mxu0 0
  %50 = vmatpush1.bf16.msra.mxu0 %v41
  %51 = vmatprep.subr.bf16.mxu0 0
  %52 = vmatpush1.bf16.msra.mxu0 %v42
  %53 = vmatprep.subr.bf16.mxu0 0
  %54 = vmatpush1.bf16.msra.mxu0 0
  %55 = vmatprep.subr.bf16.mxu0 0
  %56 = vmatpush1.bf16.msra.mxu0 0
  %57 = vmatprep.subr.bf16.mxu0 0
  %58 = vmatpush1.bf16.msra.mxu0 0
  %59 = vmatprep.subr.bf16.mxu0 0
  %60 = vmatpush1.bf16.msra.mxu0 0
  %61 = vmatprep.subr.bf16.mxu0 0
  %62 = vmatpush1.bf16.msra.mxu0 0
  %63 = vmatprep.subr.bf16.mxu0 0
  %64 = vmatpush1.bf16.msra.mxu0 0
  %65 = vmatprep.subr.bf16.mxu0 0
  %66 = vmatpush1.bf16.msra.mxu0 0
  %67 = vmatprep.subr.bf16.mxu0 0
  %68 = vmatpush1.bf16.msra.mxu0 0
  %69 = vmatprep.subr.bf16.mxu0 0
  %70 = vmatpush1.bf16.msra.mxu0 0
  %71 = vmatprep.subr.bf16.mxu0 0
  %72 = vmatpush1.bf16.msra.mxu0 0
  %73 = vmatprep.subr.bf16.mxu0 0
  %74 = vmatpush1.bf16.msra.mxu0 0
  %75 = vmatprep.subr.bf16.mxu0 0
  %76 = vmatpush1.bf16.msra.mxu0 0
  %77 = vmatprep.subr.bf16.mxu0 0
  %78 = vmatpush1.bf16.msra.mxu0 0
  %79 = vmatprep.subr.bf16.mxu0 0
  %80 = vmatpush1.bf16.msra.mxu0 0
  %81 = vmatprep.mubr.bf16.mxu0 0
  %82 = vmatmul.mubr.bf16.gmra.mrb[0].mxu0 %v47
  %v83 = vpop.f32.mrb[0].mxu0
  %v84 = vadd.f32 %v26, %v83
  %v85 = vpop.f32.mrb[0].mxu0
  %v86 = vpop.f32.mrb[0].mxu0
  %v87 = vadd.f32 %v26, %v86
  %v88 = vpop.f32.mrb[0].mxu0
  %89 = vdwg.mxu0
  %90 = vst [vmem:[%s3] sm:$0xff] %v84
  %91 = vst [vmem:[%s3 + $0x8] sm:$0xff] %v87
  // Predicated region
  $region14: #{transformer_forward.47} parent=0 // pred_check
    _
  $region15: #{transformer_forward.47} parent=0 // pred_check_branch
    %93 = sbr.rel (0) target = $region17
  $region16: #{transformer_forward.47} parent=0 // pred_region
    _
  $region17: #{transformer_forward.47} parent=0 // pred_fallthru
    _
  // Predicated region
  $region18: #{transformer_forward.47} parent=0 // pred_check
    _
  $region19: #{transformer_forward.47} parent=0 // pred_check_branch
    %95 = sbr.rel (0) target = $region21
  $region20: #{transformer_forward.47} parent=0 // pred_region
    _
  $region21: #{transformer_forward.47} parent=0 // pred_fallthru
    _

// kernel: transformer_forward.37
$region0: #{transformer_forward.37}
  #allocation0 [shape = 'u32[]', space=smem, size = 0x4, offset = 0x4, fixed_abs, tag = 'smem constant byte address 0x4 - core index']
  #allocation1 [shape = 'u32[144,128]{1,0:T(1,128)}', space=vmem, size = 0x12000, scoped, tag = 'internal scratch']
  %s0 = inlined_call_operand.vmem [shape: bf16[2,8,4,8], index: 0, kind: input, shape index: {}]
  %s1 = inlined_call_operand.vmem [shape: bf16[2,8,8,8], index: 1, kind: input, shape index: {}]
  %s2 = inlined_call_operand.vmem [shape: bf16[2,8,4,8], index: 2, kind: output, shape index: {}]
  %s3 = sld [smem:[#allocation0]]
  $region41: #{transformer_forward.37} parent=0
    _
  %s5 = ssub.s32 1, %s3
  %s6 = scalar_select 0, %s5, %s3
  loop: start=0, step=1, limit=4
  $region2: #{transformer_forward.37} parent=0 // loop_pre_header
    _
  $region3: #{transformer_forward.37} parent=0 // loop_header
    %s8 = sphi 0, %s12
    %p9 = scmp.ge.s32.totalorder %s8, 4
    %s18 = sphi 0, %s20
    %s21 = sphi 0, %s18
    %s22 = sphi 0, %s21
    %s38 = sphi 0, %s22
    %s44 = sphi 0, %s46
    %s47 = sphi 0, %s44
    %s48 = sphi 0, %s47
    %s64 = sphi 0, %s48
    %s70 = sphi 0, %s72
    %s73 = sphi 0, %s70
    %s74 = sphi 0, %s73
    %s90 = sphi 0, %s74
  $region4: #{transformer_forward.37} parent=0 // loop_header_branch
    %11 = sbr.rel (%p9) target = $region8
  $region5: #{transformer_forward.37} parent=0 // loop_body
    %s13 = ssub.s32 %s8, 1
    %s14 = ssub.s32 %s8, 2
    %s15 = sadd.s32 %s8, 1
    %s16 = ssub.s32 %s8, %s15
    %p17 = scmp.eq.s32.totalorder %s16, 0
    %s19 = sadd.s32 %s18, 1
    %s20 = scalar_select %p17, %s18, %s19
    %p23 = pneg %p17
    %p24 = scmp.eq.s32.totalorder %s8, 1
    %p25 = por %p23, %p24
    %p26 = scmp.ne.s32.totalorder %s18, %s21
    %p27 = scmp.eq.s32.totalorder %s8, 0
    %p28 = por %p26, %p27
    %p29 = scmp.ne.s32.totalorder %s18, %s21
    %p30 = scmp.eq.s32.totalorder %s13, 1
    %p31 = por %p29, %p30
    %p32 = scmp.ne.s32.totalorder %s21, %s22
    %p33 = scmp.eq.s32.totalorder %s13, 0
    %p34 = por %p32, %p33
    %p35 = scmp.ne.s32.totalorder %s21, %s22
    %p36 = scmp.eq.s32.totalorder %s14, 1
    %p37 = por %p35, %p36
    %p39 = scmp.ne.s32.totalorder %s22, %s38
    %p40 = scmp.eq.s32.totalorder %s14, 0
    %p41 = por %p39, %p40
    %s42 = ssub.s32 %s8, %s15
    %p43 = scmp.eq.s32.totalorder %s42, 0
    %s45 = sadd.s32 %s44, 1
    %s46 = scalar_select %p43, %s44, %s45
    %p49 = pneg %p43
    %p50 = scmp.eq.s32.totalorder %s8, 1
    %p51 = por %p49, %p50
    %p52 = scmp.ne.s32.totalorder %s44, %s47
    %p53 = scmp.eq.s32.totalorder %s8, 0
    %p54 = por %p52, %p53
    %p55 = scmp.ne.s32.totalorder %s44, %s47
    %p56 = scmp.eq.s32.totalorder %s13, 1
    %p57 = por %p55, %p56
    %p58 = scmp.ne.s32.totalorder %s47, %s48
    %p59 = scmp.eq.s32.totalorder %s13, 0
    %p60 = por %p58, %p59
    %p61 = scmp.ne.s32.totalorder %s47, %s48
    %p62 = scmp.eq.s32.totalorder %s14, 1
    %p63 = por %p61, %p62
    %p65 = scmp.ne.s32.totalorder %s48, %s64
    %p66 = scmp.eq.s32.totalorder %s14, 0
    %p67 = por %p65, %p66
    %s68 = ssub.s32 %s8, %s15
    %p69 = scmp.eq.s32.totalorder %s68, 0
    %s71 = sadd.s32 %s70, 1
    %s72 = scalar_select %p69, %s70, %s71
    %p75 = pneg %p69
    %p76 = scmp.eq.s32.totalorder %s8, 1
    %p77 = por %p75, %p76
    %p78 = scmp.ne.s32.totalorder %s70, %s73
    %p79 = scmp.eq.s32.totalorder %s8, 0
    %p80 = por %p78, %p79
    %p81 = scmp.ne.s32.totalorder %s70, %s73
    %p82 = scmp.eq.s32.totalorder %s13, 1
    %p83 = por %p81, %p82
    %p84 = scmp.ne.s32.totalorder %s73, %s74
    %p85 = scmp.eq.s32.totalorder %s13, 0
    %p86 = por %p84, %p85
    %p87 = scmp.ne.s32.totalorder %s73, %s74
    %p88 = scmp.eq.s32.totalorder %s14, 1
    %p89 = por %p87, %p88
    %p91 = scmp.ne.s32.totalorder %s74, %s90
    %p92 = scmp.eq.s32.totalorder %s14, 0
    %p93 = por %p91, %p92
    %p94 = scmp.le.s32.totalorder 1, %s8
    %p95 = scmp.lt.s32.totalorder %s8, 3
    %p96 = pnand %p94, %p95
    %p97 = pneg %p96
    // Predicated region
    $region9: #{transformer_forward.37} parent=5 // pred_check
      _
    $region10: #{transformer_forward.37} parent=5 // pred_check_branch
      %99 = sbr.rel (%p96) target = $region12
    $region11: #{transformer_forward.37} parent=5 // pred_region
      %s100 = ssub.s32 %s8, 1
    $region12: #{transformer_forward.37} parent=5 // pred_fallthru
      _
    %p101 = scmp.lt.s32.totalorder %s8, 2
    // Predicated region
    $region13: #{transformer_forward.37} parent=5 // pred_check
      %p102 = pneg %p101
    $region14: #{transformer_forward.37} parent=5 // pred_check_branch
      %104 = sbr.rel (%p102) target = $region16
    $region15: #{transformer_forward.37} parent=5 // pred_region
      // Predicated region
      $region17: #{transformer_forward.37} parent=15 // pred_check
        %p105 = pneg %p28
      $region18: #{transformer_forward.37} parent=15 // pred_check_branch
        %107 = sbr.rel (%p105) target = $region20
      $region19: #{transformer_forward.37} parent=15 // pred_region
        %p108 = scmp.lt.s32.totalorder %s8, 1
        %s109 = scalar_select %p108, %s8, 1
        %s110 = smul.addr %s109, 8
        %s111 = smul.addr %s110, 2
        %s112 = scalar_lea.vmem %s0, %s111
      $region20: #{transformer_forward.37} parent=15 // pred_fallthru
        _
      // Predicated region
      $region21: #{transformer_forward.37} parent=15 // pred_check
        %p113 = pneg %p54
      $region22: #{transformer_forward.37} parent=15 // pred_check_branch
        %115 = sbr.rel (%p113) target = $region24
      $region23: #{transformer_forward.37} parent=15 // pred_region
        %p116 = scmp.lt.s32.totalorder %s8, 1
        %s117 = scalar_select %p116, %s8, 1
        %s118 = smul.addr %s117, 8
        %s119 = smul.addr %s118, 4
        %s120 = scalar_lea.vmem %s1, %s119
      $region24: #{transformer_forward.37} parent=15 // pred_fallthru
        _
    $region16: #{transformer_forward.37} parent=5 // pred_fallthru
      _
    %p121 = scmp.le.s32.totalorder 1, %s8
    %p122 = scmp.lt.s32.totalorder %s8, 3
    %p123 = pnand %p121, %p122
    %p124 = pneg %p123
    // Predicated region
    $region25: #{transformer_forward.37} parent=5 // pred_check
      _
    $region26: #{transformer_forward.37} parent=5 // pred_check_branch
      %126 = sbr.rel (%p123) target = $region28
    $region27: #{transformer_forward.37} parent=5 // pred_region
      %s127 = ssub.s32 %s8, 1
      %p128 = scmp.lt.s32.totalorder %s13, 1
      %s129 = scalar_select %p128, %s13, 1
      %s130 = smul.addr %s129, 8
      %s131 = smul.addr %s130, 2
      %s132 = scalar_lea.vmem %s0, %s131
      %p133 = pneg %p34
      %p134 = pneg %p31
      %p135 = scmp.lt.s32.totalorder %s13, 1
      %s136 = scalar_select %p135, %s13, 1
      %s137 = smul.addr %s136, 8
      %s138 = smul.addr %s137, 4
      %s139 = scalar_lea.vmem %s1, %s138
      %p140 = pneg %p60
      %p141 = pneg %p57
      %p142 = pneg %p86
      %p143 = pneg %p83
      %p144 = scmp.lt.s32.totalorder %s13, 1
      %s145 = scalar_select %p144, %s13, 1
      %s146 = smul.addr %s145, 8
      %s147 = smul.addr %s146, 2
      %s148 = scalar_lea.vmem %s2, %s147
      %p149 = scmp.lt.s32.totalorder %s13, 1
      %s150 = scalar_select %p149, %s13, 1
      %s151 = smul.addr %s150, 8
      %s152 = smul.addr %s151, 2
      %s153 = scalar_lea.vmem %s0, %s152
      %p154 = scmp.lt.s32.totalorder %s13, 1
      %s155 = scalar_select %p154, %s13, 1
      %s156 = smul.addr %s155, 8
      %s157 = smul.addr %s156, 4
      %s158 = scalar_lea.vmem %s1, %s157
      %p159 = scmp.lt.s32.totalorder %s13, 1
      %s160 = scalar_select %p159, %s13, 1
      %s161 = smul.addr %s160, 8
      %s162 = smul.addr %s161, 2
      %s163 = scalar_lea.vmem %s2, %s162
      %v165 = vld [vmem:[%s153] sm:$0x3]
      %v166 = vld [vmem:[%s153 + $0x2] sm:$0x3]
      %v167 = vld [vmem:[%s153 + $0x4] sm:$0x3]
      %v168 = vld [vmem:[%s153 + $0x6] sm:$0x3]
      %v169 = vld [vmem:[%s153 + $0x8] sm:$0x3]
      %v170 = vld [vmem:[%s153 + $0xa] sm:$0x3]
      %v171 = vld [vmem:[%s153 + $0xc] sm:$0x3]
      %v172 = vld [vmem:[%s153 + $0xe] sm:$0x3]
      %v173 = vcombine.low %v165, %v167
      %v175 = vunpack.c.l.s4 1934713408
      %v176 = vunpack.c.0.s8 %v175
      %v177 = vlaneseq
      %v178 = vshrl.u32 %v177, 7
      %v179 = vsub.s32 %v176, %v178
      %v180 = vrot.slane %v173, %v179
      %v181 = vcombine.high %v180, 0
      %v182 = vcombine.low %v166, %v168
      %v184 = vunpack.c.l.s4 1934713408
      %v185 = vunpack.c.0.s8 %v184
      %v186 = vlaneseq
      %v187 = vshrl.u32 %v186, 7
      %v188 = vsub.s32 %v185, %v187
      %v189 = vrot.slane %v182, %v188
      %v190 = vcombine.high %v189, 0
      %v191 = vcombine.low %v169, %v171
      %v193 = vunpack.c.l.s4 1934713408
      %v194 = vunpack.c.0.s8 %v193
      %v195 = vlaneseq
      %v196 = vshrl.u32 %v195, 7
      %v197 = vsub.s32 %v194, %v196
      %v198 = vrot.slane %v191, %v197
      %v199 = vcombine.high %v198, 0
      %v200 = vcombine.low %v170, %v172
      %v202 = vunpack.c.l.s4 1934713408
      %v203 = vunpack.c.0.s8 %v202
      %v204 = vlaneseq
      %v205 = vshrl.u32 %v204, 7
      %v206 = vsub.s32 %v203, %v205
      %v207 = vrot.slane %v200, %v206
      %v208 = vcombine.high %v207, 0
      %v211 = vpack.i.b16 %v189, %v180
      %v212 = vshrl.u32 %v180, 16
      %v213 = vshrl.u32 %v189, 16
      %v214 = vpack.i.b16 %v213, %v212
      %v217 = vpack.i.b16 %v190, %v181
      %v218 = vshrl.u32 %v181, 16
      %v219 = vshrl.u32 %v190, 16
      %v220 = vpack.i.b16 %v219, %v218
      %v223 = vpack.i.b16 %v207, %v198
      %v224 = vshrl.u32 %v198, 16
      %v225 = vshrl.u32 %v207, 16
      %v226 = vpack.i.b16 %v225, %v224
      %v229 = vpack.i.b16 %v208, %v199
      %v230 = vshrl.u32 %v199, 16
      %v231 = vshrl.u32 %v208, 16
      %v232 = vpack.i.b16 %v231, %v230
      %v233 = vld [vmem:[%s158] sm:$0xf]
      %v234 = vld [vmem:[%s158 + $0x4] sm:$0xf]
      %v235 = vld [vmem:[%s158 + $0x8] sm:$0xf]
      %v236 = vld [vmem:[%s158 + $0xc] sm:$0xf]
      %v237 = vld [vmem:[%s158 + $0x10] sm:$0xf]
      %v238 = vld [vmem:[%s158 + $0x14] sm:$0xf]
      %v239 = vld [vmem:[%s158 + $0x18] sm:$0xf]
      %v240 = vld [vmem:[%s158 + $0x1c] sm:$0xf]
      %v241 = vcombine.low %v233, %v237
      %v243 = vunpack.c.l.s4 1983009808
      %v244 = vunpack.c.0.s8 %v243
      %v245 = vlaneseq
      %v246 = vshrl.u32 %v245, 7
      %v247 = vsub.s32 %v244, %v246
      %v248 = vrot.slane %v241, %v247
      %v249 = vcombine.low %v235, %v239
      %v251 = vunpack.c.l.s4 1983009808
      %v252 = vunpack.c.0.s8 %v251
      %v253 = vlaneseq
      %v254 = vshrl.u32 %v253, 7
      %v255 = vsub.s32 %v252, %v254
      %v256 = vrot.slane %v249, %v255
      %v257 = vcombine.low %v248, %v256
      %v258 = vcombine.high %v248, %v256
      %v260 = vunpack.c.l.s4 1934713408
      %v261 = vunpack.c.0.s8 %v260
      %v262 = vlaneseq
      %v263 = vshrl.u32 %v262, 7
      %v264 = vsub.s32 %v261, %v263
      %v265 = vrot.slane %v257, %v264
      %v267 = vunpack.c.l.s4 1934713408
      %v268 = vunpack.c.0.s8 %v267
      %v269 = vlaneseq
      %v270 = vshrl.u32 %v269, 7
      %v271 = vsub.s32 %v268, %v270
      %v272 = vrot.slane %v258, %v271
      %v273 = vcombine.high %v265, 0
      %v274 = vcombine.high %v272, 0
      %v275 = vcombine.low %v234, %v238
      %v277 = vunpack.c.l.s4 1983009808
      %v278 = vunpack.c.0.s8 %v277
      %v279 = vlaneseq
      %v280 = vshrl.u32 %v279, 7
      %v281 = vsub.s32 %v278, %v280
      %v282 = vrot.slane %v275, %v281
      %v283 = vcombine.low %v236, %v240
      %v285 = vunpack.c.l.s4 1983009808
      %v286 = vunpack.c.0.s8 %v285
      %v287 = vlaneseq
      %v288 = vshrl.u32 %v287, 7
      %v289 = vsub.s32 %v286, %v288
      %v290 = vrot.slane %v283, %v289
      %v291 = vcombine.low %v282, %v290
      %v292 = vcombine.high %v282, %v290
      %v294 = vunpack.c.l.s4 1934713408
      %v295 = vunpack.c.0.s8 %v294
      %v296 = vlaneseq
      %v297 = vshrl.u32 %v296, 7
      %v298 = vsub.s32 %v295, %v297
      %v299 = vrot.slane %v291, %v298
      %v301 = vunpack.c.l.s4 1934713408
      %v302 = vunpack.c.0.s8 %v301
      %v303 = vlaneseq
      %v304 = vshrl.u32 %v303, 7
      %v305 = vsub.s32 %v302, %v304
      %v306 = vrot.slane %v292, %v305
      %v307 = vcombine.high %v299, 0
      %v308 = vcombine.high %v306, 0
      %v311 = vpack.i.b16 %v299, %v265
      %v312 = vshrl.u32 %v265, 16
      %v313 = vshrl.u32 %v299, 16
      %v314 = vpack.i.b16 %v313, %v312
      %v317 = vpack.i.b16 %v307, %v273
      %v318 = vshrl.u32 %v273, 16
      %v319 = vshrl.u32 %v307, 16
      %v320 = vpack.i.b16 %v319, %v318
      %v323 = vpack.i.b16 %v306, %v272
      %v324 = vshrl.u32 %v272, 16
      %v325 = vshrl.u32 %v306, 16
      %v326 = vpack.i.b16 %v325, %v324
      %v329 = vpack.i.b16 %v308, %v274
      %v330 = vshrl.u32 %v274, 16
      %v331 = vshrl.u32 %v308, 16
      %v332 = vpack.i.b16 %v331, %v330
      %v333 = vcombine.low %v211, %v223
      %v335 = vunpack.c.l.s4 1983009808
      %v336 = vunpack.c.0.s8 %v335
      %v337 = vlaneseq
      %v338 = vshrl.u32 %v337, 7
      %v339 = vsub.s32 %v336, %v338
      %v340 = vrot.slane %v333, %v339
      %vm341 = vcmask 64512
      %v343 = vsel %vm341, %v340, 0
      %v346 = vsel %vm341, %v311, 0
      %348 = vmatprep.subr.bf16.mxu0 0
      %349 = vmatpush1.bf16.xpose.msra.mxu0 %v346
      %350 = vmatprep.subr.bf16.mxu0 0
      %351 = vmatpush1.bf16.xpose.msra.mxu0 0
      %352 = vmatprep.subr.bf16.mxu0 0
      %353 = vmatpush1.bf16.xpose.msra.mxu0 0
      %354 = vmatprep.subr.bf16.mxu0 0
      %355 = vmatpush1.bf16.xpose.msra.mxu0 0
      %356 = vmatprep.subr.bf16.mxu0 0
      %357 = vmatpush1.bf16.xpose.msra.mxu0 0
      %358 = vmatprep.subr.bf16.mxu0 0
      %359 = vmatpush1.bf16.xpose.msra.mxu0 0
      %360 = vmatprep.subr.bf16.mxu0 0
      %361 = vmatpush1.bf16.xpose.msra.mxu0 0
      %362 = vmatprep.subr.bf16.mxu0 0
      %363 = vmatpush1.bf16.xpose.msra.mxu0 0
      %364 = vmatprep.subr.bf16.mxu0 0
      %365 = vmatpush1.bf16.xpose.msra.mxu0 0
      %366 = vmatprep.subr.bf16.mxu0 0
      %367 = vmatpush1.bf16.xpose.msra.mxu0 0
      %368 = vmatprep.subr.bf16.mxu0 0
      %369 = vmatpush1.bf16.xpose.msra.mxu0 0
      %370 = vmatprep.subr.bf16.mxu0 0
      %371 = vmatpush1.bf16.xpose.msra.mxu0 0
      %372 = vmatprep.subr.bf16.mxu0 0
      %373 = vmatpush1.bf16.xpose.msra.mxu0 0
      %374 = vmatprep.subr.bf16.mxu0 0
      %375 = vmatpush1.bf16.xpose.msra.mxu0 0
      %376 = vmatprep.subr.bf16.mxu0 0
      %377 = vmatpush1.bf16.xpose.msra.mxu0 0
      %378 = vmatprep.subr.bf16.mxu0 0
      %379 = vmatpush1.bf16.xpose.msra.mxu0 0
      %380 = vmatprep.mubr.bf16.mxu0 0
      %381 = vmatmul.mubr.bf16.gmra.mrb[0].mxu0 %v343
      %v382 = vpop.f32.mrb[0].mxu0
      %v383 = vadd.f32 0.0, %v382
      %v384 = vpop.f32.mrb[0].mxu0
      %v385 = vpop.f32.mrb[0].mxu0
      %v386 = vpop.f32.mrb[0].mxu0
      %387 = vdwg.mxu0
      %v388 = vcombine.low %v214, %v226
      %v390 = vunpack.c.l.s4 1983009808
      %v391 = vunpack.c.0.s8 %v390
      %v392 = vlaneseq
      %v393 = vshrl.u32 %v392, 7
      %v394 = vsub.s32 %v391, %v393
      %v395 = vrot.slane %v388, %v394
      %v397 = vsel %vm341, %v395, 0
      %v400 = vsel %vm341, %v314, 0
      %402 = vmatprep.subr.bf16.mxu0 0
      %403 = vmatpush1.bf16.xpose.msra.mxu0 %v400
      %404 = vmatprep.subr.bf16.mxu0 0
      %405 = vmatpush1.bf16.xpose.msra.mxu0 0
      %406 = vmatprep.subr.bf16.mxu0 0
      %407 = vmatpush1.bf16.xpose.msra.mxu0 0
      %408 = vmatprep.subr.bf16.mxu0 0
      %409 = vmatpush1.bf16.xpose.msra.mxu0 0
      %410 = vmatprep.subr.bf16.mxu0 0
      %411 = vmatpush1.bf16.xpose.msra.mxu0 0
      %412 = vmatprep.subr.bf16.mxu0 0
      %413 = vmatpush1.bf16.xpose.msra.mxu0 0
      %414 = vmatprep.subr.bf16.mxu0 0
      %415 = vmatpush1.bf16.xpose.msra.mxu0 0
      %416 = vmatprep.subr.bf16.mxu0 0
      %417 = vmatpush1.bf16.xpose.msra.mxu0 0
      %418 = vmatprep.subr.bf16.mxu0 0
      %419 = vmatpush1.bf16.xpose.msra.mxu0 0
      %420 = vmatprep.subr.bf16.mxu0 0
      %421 = vmatpush1.bf16.xpose.msra.mxu0 0
      %422 = vmatprep.subr.bf16.mxu0 0
      %423 = vmatpush1.bf16.xpose.msra.mxu0 0
      %424 = vmatprep.subr.bf16.mxu0 0
      %425 = vmatpush1.bf16.xpose.msra.mxu0 0
      %426 = vmatprep.subr.bf16.mxu0 0
      %427 = vmatpush1.bf16.xpose.msra.mxu0 0
      %428 = vmatprep.subr.bf16.mxu0 0
      %429 = vmatpush1.bf16.xpose.msra.mxu0 0
      %430 = vmatprep.subr.bf16.mxu0 0
      %431 = vmatpush1.bf16.xpose.msra.mxu0 0
      %432 = vmatprep.subr.bf16.mxu0 0
      %433 = vmatpush1.bf16.xpose.msra.mxu0 0
      %434 = vmatprep.mubr.bf16.mxu0 0
      %435 = vmatmul.mubr.bf16.gmra.mrb[0].mxu0 %v397
      %v436 = vpop.f32.mrb[0].mxu0
      %v437 = vadd.f32 0.0, %v436
      %v438 = vpop.f32.mrb[0].mxu0
      %v439 = vpop.f32.mrb[0].mxu0
      %v440 = vpop.f32.mrb[0].mxu0
      %441 = vdwg.mxu0
      %v442 = vcombine.low %v217, %v229
      %v444 = vunpack.c.l.s4 1983009808
      %v445 = vunpack.c.0.s8 %v444
      %v446 = vlaneseq
      %v447 = vshrl.u32 %v446, 7
      %v448 = vsub.s32 %v445, %v447
      %v449 = vrot.slane %v442, %v448
      %v451 = vsel %vm341, %v449, 0
      %v454 = vsel %vm341, %v317, 0
      %456 = vmatprep.subr.bf16.mxu0 0
      %457 = vmatpush1.bf16.xpose.msra.mxu0 %v454
      %458 = vmatprep.subr.bf16.mxu0 0
      %459 = vmatpush1.bf16.xpose.msra.mxu0 0
      %460 = vmatprep.subr.bf16.mxu0 0
      %461 = vmatpush1.bf16.xpose.msra.mxu0 0
      %462 = vmatprep.subr.bf16.mxu0 0
      %463 = vmatpush1.bf16.xpose.msra.mxu0 0
      %464 = vmatprep.subr.bf16.mxu0 0
      %465 = vmatpush1.bf16.xpose.msra.mxu0 0
      %466 = vmatprep.subr.bf16.mxu0 0
      %467 = vmatpush1.bf16.xpose.msra.mxu0 0
      %468 = vmatprep.subr.bf16.mxu0 0
      %469 = vmatpush1.bf16.xpose.msra.mxu0 0
      %470 = vmatprep.subr.bf16.mxu0 0
      %471 = vmatpush1.bf16.xpose.msra.mxu0 0
      %472 = vmatprep.subr.bf16.mxu0 0
      %473 = vmatpush1.bf16.xpose.msra.mxu0 0
      %474 = vmatprep.subr.bf16.mxu0 0
      %475 = vmatpush1.bf16.xpose.msra.mxu0 0
      %476 = vmatprep.subr.bf16.mxu0 0
      %477 = vmatpush1.bf16.xpose.msra.mxu0 0
      %478 = vmatprep.subr.bf16.mxu0 0
      %479 = vmatpush1.bf16.xpose.msra.mxu0 0
      %480 = vmatprep.subr.bf16.mxu0 0
      %481 = vmatpush1.bf16.xpose.msra.mxu0 0
      %482 = vmatprep.subr.bf16.mxu0 0
      %483 = vmatpush1.bf16.xpose.msra.mxu0 0
      %484 = vmatprep.subr.bf16.mxu0 0
      %485 = vmatpush1.bf16.xpose.msra.mxu0 0
      %486 = vmatprep.subr.bf16.mxu0 0
      %487 = vmatpush1.bf16.xpose.msra.mxu0 0
      %488 = vmatprep.mubr.bf16.mxu0 0
      %489 = vmatmul.mubr.bf16.gmra.mrb[0].mxu0 %v451
      %v490 = vpop.f32.mrb[0].mxu0
      %v491 = vadd.f32 0.0, %v490
      %v492 = vpop.f32.mrb[0].mxu0
      %v493 = vpop.f32.mrb[0].mxu0
      %v494 = vpop.f32.mrb[0].mxu0
      %495 = vdwg.mxu0
      %v496 = vcombine.low %v220, %v232
      %v498 = vunpack.c.l.s4 1983009808
      %v499 = vunpack.c.0.s8 %v498
      %v500 = vlaneseq
      %v501 = vshrl.u32 %v500, 7
      %v502 = vsub.s32 %v499, %v501
      %v503 = vrot.slane %v496, %v502
      %v505 = vsel %vm341, %v503, 0
      %v508 = vsel %vm341, %v320, 0
      %510 = vmatprep.subr.bf16.mxu0 0
      %511 = vmatpush1.bf16.xpose.msra.mxu0 %v508
      %512 = vmatprep.subr.bf16.mxu0 0
      %513 = vmatpush1.bf16.xpose.msra.mxu0 0
      %514 = vmatprep.subr.bf16.mxu0 0
      %515 = vmatpush1.bf16.xpose.msra.mxu0 0
      %516 = vmatprep.subr.bf16.mxu0 0
      %517 = vmatpush1.bf16.xpose.msra.mxu0 0
      %518 = vmatprep.subr.bf16.mxu0 0
      %519 = vmatpush1.bf16.xpose.msra.mxu0 0
      %520 = vmatprep.subr.bf16.mxu0 0
      %521 = vmatpush1.bf16.xpose.msra.mxu0 0
      %522 = vmatprep.subr.bf16.mxu0 0
      %523 = vmatpush1.bf16.xpose.msra.mxu0 0
      %524 = vmatprep.subr.bf16.mxu0 0
      %525 = vmatpush1.bf16.xpose.msra.mxu0 0
      %526 = vmatprep.subr.bf16.mxu0 0
      %527 = vmatpush1.bf16.xpose.msra.mxu0 0
      %528 = vmatprep.subr.bf16.mxu0 0
      %529 = vmatpush1.bf16.xpose.msra.mxu0 0
      %530 = vmatprep.subr.bf16.mxu0 0
      %531 = vmatpush1.bf16.xpose.msra.mxu0 0
      %532 = vmatprep.subr.bf16.mxu0 0
      %533 = vmatpush1.bf16.xpose.msra.mxu0 0
      %534 = vmatprep.subr.bf16.mxu0 0
      %535 = vmatpush1.bf16.xpose.msra.mxu0 0
      %536 = vmatprep.subr.bf16.mxu0 0
      %537 = vmatpush1.bf16.xpose.msra.mxu0 0
      %538 = vmatprep.subr.bf16.mxu0 0
      %539 = vmatpush1.bf16.xpose.msra.mxu0 0
      %540 = vmatprep.subr.bf16.mxu0 0
      %541 = vmatpush1.bf16.xpose.msra.mxu0 0
      %542 = vmatprep.mubr.bf16.mxu0 0
      %543 = vmatmul.mubr.bf16.gmra.mrb[0].mxu0 %v505
      %v544 = vpop.f32.mrb[0].mxu0
      %v545 = vadd.f32 0.0, %v544
      %v546 = vpop.f32.mrb[0].mxu0
      %v547 = vpop.f32.mrb[0].mxu0
      %v548 = vpop.f32.mrb[0].mxu0
      %549 = vdwg.mxu0
      %v550 = vmul.f32 %v383, 0.35355338
      %v551 = vmul.f32 %v437, 0.35355338
      %v552 = vmul.f32 %v491, 0.35355338
      %v553 = vmul.f32 %v545, 0.35355338
      %v554 = vsel %vm341, %v550, -inf
      %555 = vmax.xlane.f32.xlu0 %v554
      %v556 = vpop.xlane.xlu0 %555
      %v557 = vsel %vm341, %v551, -inf
      %558 = vmax.xlane.f32.xlu0 %v557
      %v559 = vpop.xlane.xlu0 %558
      %v560 = vsel %vm341, %v552, -inf
      %561 = vmax.xlane.f32.xlu0 %v560
      %v562 = vpop.xlane.xlu0 %561
      %v563 = vsel %vm341, %v553, -inf
      %564 = vmax.xlane.f32.xlu0 %v563
      %v565 = vpop.xlane.xlu0 %564
      %v566 = vsub.f32 %v550, %v556
      %v567 = vsub.f32 %v551, %v559
      %v568 = vsub.f32 %v552, %v562
      %v569 = vsub.f32 %v553, %v565
      %v570 = vmul.f32 %v566, 1.442695
      %v571 = vpow.pop %v570
      %v572 = vmul.f32 %v567, 1.442695
      %v573 = vpow.pop %v572
      %v574 = vmul.f32 %v568, 1.442695
      %v575 = vpow.pop %v574
      %v576 = vmul.f32 %v569, 1.442695
      %v577 = vpow.pop %v576
      %v578 = vsel %vm341, %v571, 0.0
      %579 = vadd.xlane.f32.xlu0 %v578
      %v580 = vpop.xlane.xlu0 %579
      %v581 = vsel %vm341, %v573, 0.0
      %582 = vadd.xlane.f32.xlu0 %v581
      %v583 = vpop.xlane.xlu0 %582
      %v584 = vsel %vm341, %v575, 0.0
      %585 = vadd.xlane.f32.xlu0 %v584
      %v586 = vpop.xlane.xlu0 %585
      %v587 = vsel %vm341, %v577, 0.0
      %588 = vadd.xlane.f32.xlu0 %v587
      %v589 = vpop.xlane.xlu0 %588
      %v590 = vpack.c.bf16 %v571, %v571
      %v591 = vpack.c.bf16 %v573, %v573
      %v592 = vpack.c.bf16 %v575, %v575
      %v593 = vpack.c.bf16 %v577, %v577
      %v595 = vsel %vm341, %v590, 0
      %vm597 = vcmask 1043456
      %v599 = vsel %vm597, %v323, 0
      %601 = vmatprep.subr.bf16.mxu0 0
      %602 = vmatpush1.bf16.msra.mxu0 %v599
      %603 = vmatprep.subr.bf16.mxu0 0
      %604 = vmatpush1.bf16.msra.mxu0 0
      %605 = vmatprep.subr.bf16.mxu0 0
      %606 = vmatpush1.bf16.msra.mxu0 0
      %607 = vmatprep.subr.bf16.mxu0 0
      %608 = vmatpush1.bf16.msra.mxu0 0
      %609 = vmatprep.subr.bf16.mxu0 0
      %610 = vmatpush1.bf16.msra.mxu0 0
      %611 = vmatprep.subr.bf16.mxu0 0
      %612 = vmatpush1.bf16.msra.mxu0 0
      %613 = vmatprep.subr.bf16.mxu0 0
      %614 = vmatpush1.bf16.msra.mxu0 0
      %615 = vmatprep.subr.bf16.mxu0 0
      %616 = vmatpush1.bf16.msra.mxu0 0
      %617 = vmatprep.subr.bf16.mxu0 0
      %618 = vmatpush1.bf16.msra.mxu0 0
      %619 = vmatprep.subr.bf16.mxu0 0
      %620 = vmatpush1.bf16.msra.mxu0 0
      %621 = vmatprep.subr.bf16.mxu0 0
      %622 = vmatpush1.bf16.msra.mxu0 0
      %623 = vmatprep.subr.bf16.mxu0 0
      %624 = vmatpush1.bf16.msra.mxu0 0
      %625 = vmatprep.subr.bf16.mxu0 0
      %626 = vmatpush1.bf16.msra.mxu0 0
      %627 = vmatprep.subr.bf16.mxu0 0
      %628 = vmatpush1.bf16.msra.mxu0 0
      %629 = vmatprep.subr.bf16.mxu0 0
      %630 = vmatpush1.bf16.msra.mxu0 0
      %631 = vmatprep.subr.bf16.mxu0 0
      %632 = vmatpush1.bf16.msra.mxu0 0
      %633 = vmatprep.mubr.bf16.mxu0 0
      %634 = vmatmul.mubr.bf16.gmra.mrb[0].mxu0 %v595
      %v635 = vpop.f32.mrb[0].mxu0
      %v636 = vadd.f32 0.0, %v635
      %v637 = vpop.f32.mrb[0].mxu0
      %v638 = vpop.f32.mrb[0].mxu0
      %v639 = vpop.f32.mrb[0].mxu0
      %640 = vdwg.mxu0
      %v642 = vsel %vm341, %v591, 0
      %v645 = vsel %vm597, %v326, 0
      %647 = vmatprep.subr.bf16.mxu0 0
      %648 = vmatpush1.bf16.msra.mxu0 %v645
      %649 = vmatprep.subr.bf16.mxu0 0
      %650 = vmatpush1.bf16.msra.mxu0 0
      %651 = vmatprep.subr.bf16.mxu0 0
      %652 = vmatpush1.bf16.msra.mxu0 0
      %653 = vmatprep.subr.bf16.mxu0 0
      %654 = vmatpush1.bf16.msra.mxu0 0
      %655 = vmatprep.subr.bf16.mxu0 0
      %656 = vmatpush1.bf16.msra.mxu0 0
      %657 = vmatprep.subr.bf16.mxu0 0
      %658 = vmatpush1.bf16.msra.mxu0 0
      %659 = vmatprep.subr.bf16.mxu0 0
      %660 = vmatpush1.bf16.msra.mxu0 0
      %661 = vmatprep.subr.bf16.mxu0 0
      %662 = vmatpush1.bf16.msra.mxu0 0
      %663 = vmatprep.subr.bf16.mxu0 0
      %664 = vmatpush1.bf16.msra.mxu0 0
      %665 = vmatprep.subr.bf16.mxu0 0
      %666 = vmatpush1.bf16.msra.mxu0 0
      %667 = vmatprep.subr.bf16.mxu0 0
      %668 = vmatpush1.bf16.msra.mxu0 0
      %669 = vmatprep.subr.bf16.mxu0 0
      %670 = vmatpush1.bf16.msra.mxu0 0
      %671 = vmatprep.subr.bf16.mxu0 0
      %672 = vmatpush1.bf16.msra.mxu0 0
      %673 = vmatprep.subr.bf16.mxu0 0
      %674 = vmatpush1.bf16.msra.mxu0 0
      %675 = vmatprep.subr.bf16.mxu0 0
      %676 = vmatpush1.bf16.msra.mxu0 0
      %677 = vmatprep.subr.bf16.mxu0 0
      %678 = vmatpush1.bf16.msra.mxu0 0
      %679 = vmatprep.mubr.bf16.mxu0 0
      %680 = vmatmul.mubr.bf16.gmra.mrb[0].mxu0 %v642
      %v681 = vpop.f32.mrb[0].mxu0
      %v682 = vadd.f32 0.0, %v681
      %v683 = vpop.f32.mrb[0].mxu0
      %v684 = vpop.f32.mrb[0].mxu0
      %v685 = vpop.f32.mrb[0].mxu0
      %686 = vdwg.mxu0
      %v688 = vsel %vm341, %v592, 0
      %v691 = vsel %vm597, %v329, 0
      %693 = vmatprep.subr.bf16.mxu0 0
      %694 = vmatpush1.bf16.msra.mxu0 %v691
      %695 = vmatprep.subr.bf16.mxu0 0
      %696 = vmatpush1.bf16.msra.mxu0 0
      %697 = vmatprep.subr.bf16.mxu0 0
      %698 = vmatpush1.bf16.msra.mxu0 0
      %699 = vmatprep.subr.bf16.mxu0 0
      %700 = vmatpush1.bf16.msra.mxu0 0
      %701 = vmatprep.subr.bf16.mxu0 0
      %702 = vmatpush1.bf16.msra.mxu0 0
      %703 = vmatprep.subr.bf16.mxu0 0
      %704 = vmatpush1.bf16.msra.mxu0 0
      %705 = vmatprep.subr.bf16.mxu0 0
      %706 = vmatpush1.bf16.msra.mxu0 0
      %707 = vmatprep.subr.bf16.mxu0 0
      %708 = vmatpush1.bf16.msra.mxu0 0
      %709 = vmatprep.subr.bf16.mxu0 0
      %710 = vmatpush1.bf16.msra.mxu0 0
      %711 = vmatprep.subr.bf16.mxu0 0
      %712 = vmatpush1.bf16.msra.mxu0 0
      %713 = vmatprep.subr.bf16.mxu0 0
      %714 = vmatpush1.bf16.msra.mxu0 0
      %715 = vmatprep.subr.bf16.mxu0 0
      %716 = vmatpush1.bf16.msra.mxu0 0
      %717 = vmatprep.subr.bf16.mxu0 0
      %718 = vmatpush1.bf16.msra.mxu0 0
      %719 = vmatprep.subr.bf16.mxu0 0
      %720 = vmatpush1.bf16.msra.mxu0 0
      %721 = vmatprep.subr.bf16.mxu0 0
      %722 = vmatpush1.bf16.msra.mxu0 0
      %723 = vmatprep.subr.bf16.mxu0 0
      %724 = vmatpush1.bf16.msra.mxu0 0
      %725 = vmatprep.mubr.bf16.mxu0 0
      %726 = vmatmul.mubr.bf16.gmra.mrb[0].mxu0 %v688
      %v727 = vpop.f32.mrb[0].mxu0
      %v728 = vadd.f32 0.0, %v727
      %v729 = vpop.f32.mrb[0].mxu0
      %v730 = vpop.f32.mrb[0].mxu0
      %v731 = vpop.f32.mrb[0].mxu0
      %732 = vdwg.mxu0
      %v734 = vsel %vm341, %v593, 0
      %v737 = vsel %vm597, %v332, 0
      %739 = vmatprep.subr.bf16.mxu0 0
      %740 = vmatpush1.bf16.msra.mxu0 %v737
      %741 = vmatprep.subr.bf16.mxu0 0
      %742 = vmatpush1.bf16.msra.mxu0 0
      %743 = vmatprep.subr.bf16.mxu0 0
      %744 = vmatpush1.bf16.msra.mxu0 0
      %745 = vmatprep.subr.bf16.mxu0 0
      %746 = vmatpush1.bf16.msra.mxu0 0
      %747 = vmatprep.subr.bf16.mxu0 0
      %748 = vmatpush1.bf16.msra.mxu0 0
      %749 = vmatprep.subr.bf16.mxu0 0
      %750 = vmatpush1.bf16.msra.mxu0 0
      %751 = vmatprep.subr.bf16.mxu0 0
      %752 = vmatpush1.bf16.msra.mxu0 0
      %753 = vmatprep.subr.bf16.mxu0 0
      %754 = vmatpush1.bf16.msra.mxu0 0
      %755 = vmatprep.subr.bf16.mxu0 0
      %756 = vmatpush1.bf16.msra.mxu0 0
      %757 = vmatprep.subr.bf16.mxu0 0
      %758 = vmatpush1.bf16.msra.mxu0 0
      %759 = vmatprep.subr.bf16.mxu0 0
      %760 = vmatpush1.bf16.msra.mxu0 0
      %761 = vmatprep.subr.bf16.mxu0 0
      %762 = vmatpush1.bf16.msra.mxu0 0
      %763 = vmatprep.subr.bf16.mxu0 0
      %764 = vmatpush1.bf16.msra.mxu0 0
      %765 = vmatprep.subr.bf16.mxu0 0
      %766 = vmatpush1.bf16.msra.mxu0 0
      %767 = vmatprep.subr.bf16.mxu0 0
      %768 = vmatpush1.bf16.msra.mxu0 0
      %769 = vmatprep.subr.bf16.mxu0 0
      %770 = vmatpush1.bf16.msra.mxu0 0
      %771 = vmatprep.mubr.bf16.mxu0 0
      %772 = vmatmul.mubr.bf16.gmra.mrb[0].mxu0 %v734
      %v773 = vpop.f32.mrb[0].mxu0
      %v774 = vadd.f32 0.0, %v773
      %v775 = vpop.f32.mrb[0].mxu0
      %v776 = vpop.f32.mrb[0].mxu0
      %v777 = vpop.f32.mrb[0].mxu0
      %778 = vdwg.mxu0
      %v779 = vrcp.pop %v580
      %v780 = vrcp.pop %v583
      %v781 = vrcp.pop %v586
      %v782 = vrcp.pop %v589
      %v783 = vmul.f32 %v636, %v779
      %v784 = vmul.f32 %v682, %v780
      %v785 = vmul.f32 %v728, %v781
      %v786 = vmul.f32 %v774, %v782
      %v787 = vcombine.low %v783, %v785
      %v788 = vcombine.high %v783, %v785
      %v790 = vunpack.c.l.s4 1983009808
      %v791 = vunpack.c.0.s8 %v790
      %v792 = vlaneseq
      %v793 = vshrl.u32 %v792, 7
      %v794 = vsub.s32 %v791, %v793
      %v795 = vrot.slane %v787, %v794
      %v797 = vunpack.c.l.s4 1983009808
      %v798 = vunpack.c.0.s8 %v797
      %v799 = vlaneseq
      %v800 = vshrl.u32 %v799, 7
      %v801 = vsub.s32 %v798, %v800
      %v802 = vrot.slane %v788, %v801
      %v803 = vcombine.low %v784, %v786
      %v804 = vcombine.high %v784, %v786
      %v806 = vunpack.c.l.s4 1983009808
      %v807 = vunpack.c.0.s8 %v806
      %v808 = vlaneseq
      %v809 = vshrl.u32 %v808, 7
      %v810 = vsub.s32 %v807, %v809
      %v811 = vrot.slane %v803, %v810
      %v813 = vunpack.c.l.s4 1983009808
      %v814 = vunpack.c.0.s8 %v813
      %v815 = vlaneseq
      %v816 = vshrl.u32 %v815, 7
      %v817 = vsub.s32 %v814, %v816
      %v818 = vrot.slane %v804, %v817
      %v819 = vcombine.low %v795, %v811
      %v820 = vcombine.high %v795, %v811
      %v822 = vunpack.c.l.s4 1934713408
      %v823 = vunpack.c.0.s8 %v822
      %v824 = vlaneseq
      %v825 = vshrl.u32 %v824, 7
      %v826 = vsub.s32 %v823, %v825
      %v827 = vrot.slane %v819, %v826
      %v829 = vunpack.c.l.s4 1934713408
      %v830 = vunpack.c.0.s8 %v829
      %v831 = vlaneseq
      %v832 = vshrl.u32 %v831, 7
      %v833 = vsub.s32 %v830, %v832
      %v834 = vrot.slane %v820, %v833
      %v835 = vcombine.low %v802, %v818
      %v836 = vcombine.high %v802, %v818
      %v838 = vunpack.c.l.s4 1934713408
      %v839 = vunpack.c.0.s8 %v838
      %v840 = vlaneseq
      %v841 = vshrl.u32 %v840, 7
      %v842 = vsub.s32 %v839, %v841
      %v843 = vrot.slane %v835, %v842
      %v845 = vunpack.c.l.s4 1934713408
      %v846 = vunpack.c.0.s8 %v845
      %v847 = vlaneseq
      %v848 = vshrl.u32 %v847, 7
      %v849 = vsub.s32 %v846, %v848
      %v850 = vrot.slane %v836, %v849
      %v851 = vcombine.high %v827, 0.0
      %v852 = vcombine.high %v834, 0.0
      %v853 = vcombine.high %v843, 0.0
      %v854 = vcombine.high %v850, 0.0
      %v855 = vpack.c.bf16 %v827, %v827
      %v856 = vpack.c.bf16 %v851, %v851
      %v857 = vpack.c.bf16 %v834, %v834
      %v858 = vpack.c.bf16 %v852, %v852
      %v859 = vpack.c.bf16 %v843, %v843
      %v860 = vpack.c.bf16 %v853, %v853
      %v861 = vpack.c.bf16 %v850, %v850
      %v862 = vpack.c.bf16 %v854, %v854
      %vm863 = vcmask 58368
      %864 = vst.msk [vmem:[%s163] sm:$0x3] %vm863, %v855
      %865 = vst.msk [vmem:[%s163 + $0x2] sm:$0x3] %vm863, %v856
      %866 = vst.msk [vmem:[%s163 + $0x4] sm:$0x3] %vm863, %v857
      %867 = vst.msk [vmem:[%s163 + $0x6] sm:$0x3] %vm863, %v858
      %868 = vst.msk [vmem:[%s163 + $0x8] sm:$0x3] %vm863, %v859
      %869 = vst.msk [vmem:[%s163 + $0xa] sm:$0x3] %vm863, %v860
      %870 = vst.msk [vmem:[%s163 + $0xc] sm:$0x3] %vm863, %v861
      %871 = vst.msk [vmem:[%s163 + $0xe] sm:$0x3] %vm863, %v862
      %p872 = scmp.lt.s32.totalorder %s13, 1
      %s873 = scalar_select %p872, %s13, 1
      %s874 = smul.addr %s873, 8
      %s875 = smul.addr %s874, 2
      %s876 = scalar_lea.vmem %s2, %s875
      // Predicated region
      $region29: #{transformer_forward.37} parent=27 // pred_check
        %p877 = pneg %p83
      $region30: #{transformer_forward.37} parent=27 // pred_check_branch
        %879 = sbr.rel (%p877) target = $region32
      $region31: #{transformer_forward.37} parent=27 // pred_region
        _
      $region32: #{transformer_forward.37} parent=27 // pred_fallthru
        _
    $region28: #{transformer_forward.37} parent=5 // pred_fallthru
      _
    %p880 = scmp.le.s32.totalorder 2, %s8
    // Predicated region
    $region33: #{transformer_forward.37} parent=5 // pred_check
      %p881 = pneg %p880
    $region34: #{transformer_forward.37} parent=5 // pred_check_branch
      %883 = sbr.rel (%p881) target = $region36
    $region35: #{transformer_forward.37} parent=5 // pred_region
      %s884 = ssub.s32 %s8, 2
      // Predicated region
      $region37: #{transformer_forward.37} parent=35 // pred_check
        %p885 = pneg %p89
      $region38: #{transformer_forward.37} parent=35 // pred_check_branch
        %887 = sbr.rel (%p885) target = $region40
      $region39: #{transformer_forward.37} parent=35 // pred_region
        %p888 = scmp.lt.s32.totalorder %s14, 1
        %s889 = scalar_select %p888, %s14, 1
        %s890 = smul.addr %s889, 8
        %s891 = smul.addr %s890, 2
        %s892 = scalar_lea.vmem %s2, %s891
      $region40: #{transformer_forward.37} parent=35 // pred_fallthru
        _
    $region36: #{transformer_forward.37} parent=5 // pred_fallthru
      _
  $region6: #{transformer_forward.37} parent=0 // loop_footer
    %s12 = sadd.s32 1, %s8
  $region7: #{transformer_forward.37} parent=0 // loop_footer_branch
    %7 = sbr.rel target = $region3
  $region8: #{transformer_forward.37} parent=0 // loop_exit
    _

</llo_original>
